<compile_context>
chip_gen: v7x
topology: tpu7x:2x2x1
jax: 0.10.0
libtpu: 0.0.40
codegen_flags: <defaults>
</compile_context>

<pallas_src>
import functools

import jax
import jax.numpy as jnp
import numpy as np
from jax.experimental import pallas as pl
from jax.experimental.pallas import tpu as pltpu


# ------------------------------ fused kernel ------------------------------

def _wc_attention_kernel(x_ref, mnl_ref, mnr_ref,
                         m1_ref, b1_ref, m2_ref, b2_ref,
                         wc1_ref, eb1_ref, wc2_ref, eb2_ref,
                         wout_ref, bout_ref,
                         out_ref, *, C, Cr, Co, H, W, lpad):
    hw = H * W
    f32 = jnp.float32

    x = x_ref[...]                        # (C, hw)   channels on sublanes
    mnl = mnl_ref[...]                    # (1, hw)   0 where col == 0
    mnr = mnr_ref[...]                    # (1, hw)   0 where col == W-1

    def mix(w, slab, bias):
        # out[o, p] = bias[o] + sum_c w[o, c] * slab[c, p]
        # (Cout,1) x (1,hw) broadcasted FMAs -> full-slab VPU work.
        cout = w.shape[0]
        acc = jnp.broadcast_to(bias, (cout, hw))
        for c in range(slab.shape[0]):
            acc = acc + w[:, c:c + 1] * slab[c:c + 1, :]
        return acc

    # ---- channel attention: x * sigmoid(Linear(ReLU(Linear(x)))) ----
    h = jnp.maximum(mix(m1_ref[...], x, b1_ref[...]), 0.0)        # (Cr, hw)
    att = mix(m2_ref[...], h, b2_ref[...])                        # (C, hw)
    y = x * jax.nn.sigmoid(att)                                   # (C, hw)

    def conv3x3(inp, w9, bias):
        # 3x3 'same' conv on the flattened spatial axis.
        # inp: (cin, hw); w9: (9, cout, cin); zero halo handles vertical
        # out-of-range taps, left/right lane masks kill row-crossing taps.
        cin = inp.shape[0]
        cout = w9.shape[1]
        halo = jnp.zeros((cin, lpad), f32)
        padded = jnp.concatenate([halo, inp, halo], axis=1)       # lane-aligned concat
        acc = jnp.broadcast_to(bias, (cout, hw))
        for dy in range(3):
            for dx in range(3):
                off = lpad + (dy - 1) * W + (dx - 1)
                slab = padded[:, off:off + hw]                    # (cin, hw)
                if dx == 0:
                    slab = slab * mnl
                elif dx == 2:
                    slab = slab * mnr
                wk = w9[dy * 3 + dx]                              # (cout, cin)
                for c in range(cin):
                    acc = acc + wk[:, c:c + 1] * slab[c:c + 1, :]
        return acc

    # ---- spatial attention: conv3x3+BN+ReLU -> conv3x3+BN -> sigmoid ----
    z = jnp.maximum(conv3x3(y, wc1_ref[...], eb1_ref[...]), 0.0)  # (Cr, hw)
    s = conv3x3(z, wc2_ref[...], eb2_ref[...])                    # (C, hw), pre-sigmoid

    # ---- spatial gate + final 1x1 conv to Co channels ----
    g = y * jax.nn.sigmoid(s)                                     # (C, hw)
    out_ref[...] = mix(wout_ref[...], g, bout_ref[...])           # (Co, hw), lane-dense


# ------------------------------ wrapper ------------------------------

def wc_attention_forward(x_nchw, kp):
    B, C, H, W = x_nchw.shape
    Cr = kp["b1"].shape[0]
    Co = kp["bout"].shape[0]
    hw = H * W
    lpad = 128 * pl.cdiv(W + 1, 128)          # lane-aligned halo (>= W+1)

    x2 = x_nchw.reshape(B, C, hw).astype(jnp.float32)   # NCHW flatten: free

    col = jnp.arange(hw, dtype=jnp.int32) % W
    mask_nl = (col != 0).astype(jnp.float32).reshape(1, hw)
    mask_nr = (col != (W - 1)).astype(jnp.float32).reshape(1, hw)

    kernel = functools.partial(_wc_attention_kernel,
                               C=C, Cr=Cr, Co=Co, H=H, W=W, lpad=lpad)

    def const_spec(a):
        nd = a.ndim
        return pl.BlockSpec(a.shape, lambda b, _nd=nd: (0,) * _nd)

    weights = [kp["m1"], kp["b1"], kp["m2"], kp["b2"],
               kp["wc1"], kp["eb1"], kp["wc2"], kp["eb2"],
               kp["wout"], kp["bout"]]

    out2 = pl.pallas_call(
        kernel,
        out_shape=jax.ShapeDtypeStruct((B, Co, hw), jnp.float32),
        grid=(B,),
        in_specs=[pl.BlockSpec((None, C, hw), lambda b: (b, 0, 0)),
                  const_spec(mask_nl), const_spec(mask_nr)]
                 + [const_spec(w) for w in weights],
        out_specs=pl.BlockSpec((None, Co, hw), lambda b: (b, 0, 0)),
        compiler_params=pltpu.CompilerParams(dimension_semantics=("parallel",)),
    )(x2, mask_nl, mask_nr, *weights)
    return out2.reshape(B, Co, H, W)


def prepare_kernel_params(P, eps=1e-5):
    """Fold BN (eval mode) into the conv weights/bias and lay weights out for the kernel."""
    sc1 = P["g1"] / jnp.sqrt(P["rv1"] + eps)
    sh1 = P["be1"] - P["rm1"] * sc1
    sc2 = P["g2"] / jnp.sqrt(P["rv2"] + eps)
    sh2 = P["be2"] - P["rm2"] * sc2
    wc1 = P["wc1"] * sc1[:, None, None, None]     # (Cr, C, 3, 3)
    wc2 = P["wc2"] * sc2[:, None, None, None]     # (C, Cr, 3, 3)
    Cr = P["b1"].shape[0]
    C = P["b2"].shape[0]
    Co = P["b1x1"].shape[0]
    return dict(
        m1=P["w1"].T,                                       # (Cr, C)
        b1=P["b1"].reshape(Cr, 1),
        m2=P["w2"].T,                                       # (C, Cr)
        b2=P["b2"].reshape(C, 1),
        wc1=jnp.transpose(wc1, (2, 3, 0, 1)).reshape(9, Cr, C),   # [dy*3+dx, o, c]
        eb1=(P["bc1"] * sc1 + sh1).reshape(Cr, 1),
        wc2=jnp.transpose(wc2, (2, 3, 0, 1)).reshape(9, C, Cr),
        eb2=(P["bc2"] * sc2 + sh2).reshape(C, 1),
        wout=P["w1x1"][:, :, 0, 0],                         # (Co, C)
        bout=P["b1x1"].reshape(Co, 1),
    )


# ------------------------------ pure-jnp reference ------------------------------

def wc_attention_reference(x, P, eps=1e-5):
    B, C, H, W = x.shape
    hp = jax.lax.Precision.HIGHEST
    xp = jnp.transpose(x, (0, 2, 3, 1))
    h = jnp.maximum(jnp.einsum("bhwc,cr->bhwr", xp, P["w1"], precision=hp) + P["b1"], 0.0)
    att = jnp.einsum("bhwr,rc->bhwc", h, P["w2"], precision=hp) + P["b2"]
    y = x * jnp.transpose(jax.nn.sigmoid(att), (0, 3, 1, 2))

    def conv3x3(inp, w, b):
        Hc, Wc = inp.shape[2], inp.shape[3]
        padded = jnp.pad(inp, ((0, 0), (0, 0), (1, 1), (1, 1)))
        out = b[None, :, None, None]
        for dy in range(3):
            for dx in range(3):
                out = out + jnp.einsum("bchw,oc->bohw",
                                       padded[:, :, dy:dy + Hc, dx:dx + Wc],
                                       w[:, :, dy, dx], precision=hp)
        return out

    def bn(v, g, be, rm, rv):
        sc = g / jnp.sqrt(rv + eps)
        return v * sc[None, :, None, None] + (be - rm * sc)[None, :, None, None]

    z = jnp.maximum(bn(conv3x3(y, P["wc1"], P["bc1"]),
                       P["g1"], P["be1"], P["rm1"], P["rv1"]), 0.0)
    s = jax.nn.sigmoid(bn(conv3x3(z, P["wc2"], P["bc2"]),
                          P["g2"], P["be2"], P["rm2"], P["rv2"]))
    out = jnp.einsum("bchw,oc->bohw", y * s, P["w1x1"][:, :, 0, 0], precision=hp)
    return out + P["b1x1"][None, :, None, None]


# ------------------------------ main ------------------------------

if __name__ == "__main__":
    B, C_in, C_out, H, W, rate = 2, 8, 16, 16, 16, 4
    Cr = C_in // rate
    f32 = jnp.float32
    ks = jax.random.split(jax.random.PRNGKey(0), 20)

    P = dict(
        # channel attention MLP: Linear(C, C/r) -> ReLU -> Linear(C/r, C)
        w1=0.3 * jax.random.normal(ks[0], (C_in, Cr), f32),
        b1=0.1 * jax.random.normal(ks[1], (Cr,), f32),
        w2=0.3 * jax.random.normal(ks[2], (Cr, C_in), f32),
        b2=0.1 * jax.random.normal(ks[3], (C_in,), f32),
        # spatial attention convs (WTConv2d_tf approximated as 3x3 conv) + BN (eval)
        wc1=0.2 * jax.random.normal(ks[4], (Cr, C_in, 3, 3), f32),
        bc1=0.1 * jax.random.normal(ks[5], (Cr,), f32),
        wc2=0.2 * jax.random.normal(ks[6], (C_in, Cr, 3, 3), f32),
        bc2=0.1 * jax.random.normal(ks[7], (C_in,), f32),
        g1=1.0 + 0.1 * jax.random.normal(ks[8], (Cr,), f32),
        be1=0.1 * jax.random.normal(ks[9], (Cr,), f32),
        rm1=0.1 * jax.random.normal(ks[10], (Cr,), f32),
        rv1=1.0 + 0.1 * jnp.abs(jax.random.normal(ks[11], (Cr,), f32)),
        g2=1.0 + 0.1 * jax.random.normal(ks[12], (C_in,), f32),
        be2=0.1 * jax.random.normal(ks[13], (C_in,), f32),
        rm2=0.1 * jax.random.normal(ks[14], (C_in,), f32),
        rv2=1.0 + 0.1 * jnp.abs(jax.random.normal(ks[15], (C_in,), f32)),
        # final 1x1 conv: Conv2d(C_in, C_out, 1)
        w1x1=0.3 * jax.random.normal(ks[16], (C_out, C_in, 1, 1), f32),
        b1x1=0.1 * jax.random.normal(ks[17], (C_out,), f32),
    )

    kp = prepare_kernel_params(P)
    x = jax.random.normal(ks[18], (B, C_in, H, W), f32)   # NCHW, like PyTorch

    fwd = jax.jit(wc_attention_forward)
    out = jax.block_until_ready(fwd(x, kp))
    ref = jax.block_until_ready(wc_attention_reference(x, P))

    assert out.shape == (B, C_out, H, W), out.shape
    np.testing.assert_allclose(np.asarray(out), np.asarray(ref), rtol=2e-4, atol=2e-4)
    print("KERNEL_OK")
</pallas_src>

<mosaic_0001>
module attributes {stable_mosaic.version = 11 : i64} {
  func.func @_wc_attention_kernel(%arg0: i32, %arg1: memref<1x8x256xf32, #tpu.memory_space<vmem>>, %arg2: memref<1x256xf32, #tpu.memory_space<vmem>>, %arg3: memref<1x256xf32, #tpu.memory_space<vmem>>, %arg4: memref<2x8xf32, #tpu.memory_space<vmem>>, %arg5: memref<2x1xf32, #tpu.memory_space<vmem>>, %arg6: memref<8x2xf32, #tpu.memory_space<vmem>>, %arg7: memref<8x1xf32, #tpu.memory_space<vmem>>, %arg8: memref<9x2x8xf32, #tpu.memory_space<vmem>>, %arg9: memref<2x1xf32, #tpu.memory_space<vmem>>, %arg10: memref<9x8x2xf32, #tpu.memory_space<vmem>>, %arg11: memref<8x1xf32, #tpu.memory_space<vmem>>, %arg12: memref<16x8xf32, #tpu.memory_space<vmem>>, %arg13: memref<16x1xf32, #tpu.memory_space<vmem>>, %arg14: memref<1x16x256xf32, #tpu.memory_space<vmem>>) attributes {dimension_semantics = [#tpu.dimension_semantics<parallel>], iteration_bounds = array<i64: 2>, scalar_prefetch = 0 : i64, scratch_operands = 0 : i64, tpu.core_type = #tpu.core_type<tc>, window_params = [{transform_indices = @transform_0, window_bounds = array<i64: 1, 8, 256>}, {pipeline_mode = #tpu.pipeline_mode<synchronous>, transform_indices = @transform_1, window_bounds = array<i64: 1, 256>}, {pipeline_mode = #tpu.pipeline_mode<synchronous>, transform_indices = @transform_2, window_bounds = array<i64: 1, 256>}, {pipeline_mode = #tpu.pipeline_mode<synchronous>, transform_indices = @transform_3, window_bounds = array<i64: 2, 8>}, {pipeline_mode = #tpu.pipeline_mode<synchronous>, transform_indices = @transform_4, window_bounds = array<i64: 2, 1>}, {pipeline_mode = #tpu.pipeline_mode<synchronous>, transform_indices = @transform_5, window_bounds = array<i64: 8, 2>}, {pipeline_mode = #tpu.pipeline_mode<synchronous>, transform_indices = @transform_6, window_bounds = array<i64: 8, 1>}, {pipeline_mode = #tpu.pipeline_mode<synchronous>, transform_indices = @transform_7, window_bounds = array<i64: 9, 2, 8>}, {pipeline_mode = #tpu.pipeline_mode<synchronous>, transform_indices = @transform_8, window_bounds = array<i64: 2, 1>}, {pipeline_mode = #tpu.pipeline_mode<synchronous>, transform_indices = @transform_9, window_bounds = array<i64: 9, 8, 2>}, {pipeline_mode = #tpu.pipeline_mode<synchronous>, transform_indices = @transform_10, window_bounds = array<i64: 8, 1>}, {pipeline_mode = #tpu.pipeline_mode<synchronous>, transform_indices = @transform_11, window_bounds = array<i64: 16, 8>}, {pipeline_mode = #tpu.pipeline_mode<synchronous>, transform_indices = @transform_12, window_bounds = array<i64: 16, 1>}, {transform_indices = @transform_13, window_bounds = array<i64: 1, 16, 256>}]} {
    %c0 = arith.constant 0 : index
    %c0_0 = arith.constant 0 : index
    %c0_1 = arith.constant 0 : index
    %0 = vector.load %arg1[%c0, %c0_0, %c0_1] : memref<1x8x256xf32, #tpu.memory_space<vmem>>, vector<1x8x256xf32>
    %1 = vector.shape_cast %0 : vector<1x8x256xf32> to vector<8x256xf32>
    %c0_2 = arith.constant 0 : index
    %c0_3 = arith.constant 0 : index
    %2 = vector.load %arg2[%c0_2, %c0_3] : memref<1x256xf32, #tpu.memory_space<vmem>>, vector<1x256xf32>
    %c0_4 = arith.constant 0 : index
    %c0_5 = arith.constant 0 : index
    %3 = vector.load %arg3[%c0_4, %c0_5] : memref<1x256xf32, #tpu.memory_space<vmem>>, vector<1x256xf32>
    %c0_6 = arith.constant 0 : index
    %c0_7 = arith.constant 0 : index
    %4 = vector.load %arg4[%c0_6, %c0_7] : memref<2x8xf32, #tpu.memory_space<vmem>>, vector<2x8xf32>
    %c0_8 = arith.constant 0 : index
    %c0_9 = arith.constant 0 : index
    %5 = vector.load %arg5[%c0_8, %c0_9] : memref<2x1xf32, #tpu.memory_space<vmem>>, vector<2x1xf32>
    %6 = vector.shape_cast %5 : vector<2x1xf32> to vector<2x1xf32>
    %7 = vector.broadcast %6 : vector<2x1xf32> to vector<2x256xf32>
    %8 = vector.extract_strided_slice %4 {offsets = [0, 0], sizes = [2, 1], strides = [1, 1]} : vector<2x8xf32> to vector<2x1xf32>
    %9 = vector.extract_strided_slice %1 {offsets = [0, 0], sizes = [1, 256], strides = [1, 1]} : vector<8x256xf32> to vector<1x256xf32>
    %10 = vector.broadcast %8 : vector<2x1xf32> to vector<2x256xf32>
    %11 = vector.broadcast %9 : vector<1x256xf32> to vector<2x256xf32>
    %12 = arith.mulf %10, %11 : vector<2x256xf32>
    %13 = arith.addf %7, %12 : vector<2x256xf32>
    %14 = vector.extract_strided_slice %4 {offsets = [0, 1], sizes = [2, 1], strides = [1, 1]} : vector<2x8xf32> to vector<2x1xf32>
    %15 = vector.extract_strided_slice %1 {offsets = [1, 0], sizes = [1, 256], strides = [1, 1]} : vector<8x256xf32> to vector<1x256xf32>
    %16 = vector.broadcast %14 : vector<2x1xf32> to vector<2x256xf32>
    %17 = vector.broadcast %15 : vector<1x256xf32> to vector<2x256xf32>
    %18 = arith.mulf %16, %17 : vector<2x256xf32>
    %19 = arith.addf %13, %18 : vector<2x256xf32>
    %20 = vector.extract_strided_slice %4 {offsets = [0, 2], sizes = [2, 1], strides = [1, 1]} : vector<2x8xf32> to vector<2x1xf32>
    %21 = vector.extract_strided_slice %1 {offsets = [2, 0], sizes = [1, 256], strides = [1, 1]} : vector<8x256xf32> to vector<1x256xf32>
    %22 = vector.broadcast %20 : vector<2x1xf32> to vector<2x256xf32>
    %23 = vector.broadcast %21 : vector<1x256xf32> to vector<2x256xf32>
    %24 = arith.mulf %22, %23 : vector<2x256xf32>
    %25 = arith.addf %19, %24 : vector<2x256xf32>
    %26 = vector.extract_strided_slice %4 {offsets = [0, 3], sizes = [2, 1], strides = [1, 1]} : vector<2x8xf32> to vector<2x1xf32>
    %27 = vector.extract_strided_slice %1 {offsets = [3, 0], sizes = [1, 256], strides = [1, 1]} : vector<8x256xf32> to vector<1x256xf32>
    %28 = vector.broadcast %26 : vector<2x1xf32> to vector<2x256xf32>
    %29 = vector.broadcast %27 : vector<1x256xf32> to vector<2x256xf32>
    %30 = arith.mulf %28, %29 : vector<2x256xf32>
    %31 = arith.addf %25, %30 : vector<2x256xf32>
    %32 = vector.extract_strided_slice %4 {offsets = [0, 4], sizes = [2, 1], strides = [1, 1]} : vector<2x8xf32> to vector<2x1xf32>
    %33 = vector.extract_strided_slice %1 {offsets = [4, 0], sizes = [1, 256], strides = [1, 1]} : vector<8x256xf32> to vector<1x256xf32>
    %34 = vector.broadcast %32 : vector<2x1xf32> to vector<2x256xf32>
    %35 = vector.broadcast %33 : vector<1x256xf32> to vector<2x256xf32>
    %36 = arith.mulf %34, %35 : vector<2x256xf32>
    %37 = arith.addf %31, %36 : vector<2x256xf32>
    %38 = vector.extract_strided_slice %4 {offsets = [0, 5], sizes = [2, 1], strides = [1, 1]} : vector<2x8xf32> to vector<2x1xf32>
    %39 = vector.extract_strided_slice %1 {offsets = [5, 0], sizes = [1, 256], strides = [1, 1]} : vector<8x256xf32> to vector<1x256xf32>
    %40 = vector.broadcast %38 : vector<2x1xf32> to vector<2x256xf32>
    %41 = vector.broadcast %39 : vector<1x256xf32> to vector<2x256xf32>
    %42 = arith.mulf %40, %41 : vector<2x256xf32>
    %43 = arith.addf %37, %42 : vector<2x256xf32>
    %44 = vector.extract_strided_slice %4 {offsets = [0, 6], sizes = [2, 1], strides = [1, 1]} : vector<2x8xf32> to vector<2x1xf32>
    %45 = vector.extract_strided_slice %1 {offsets = [6, 0], sizes = [1, 256], strides = [1, 1]} : vector<8x256xf32> to vector<1x256xf32>
    %46 = vector.broadcast %44 : vector<2x1xf32> to vector<2x256xf32>
    %47 = vector.broadcast %45 : vector<1x256xf32> to vector<2x256xf32>
    %48 = arith.mulf %46, %47 : vector<2x256xf32>
    %49 = arith.addf %43, %48 : vector<2x256xf32>
    %50 = vector.extract_strided_slice %4 {offsets = [0, 7], sizes = [2, 1], strides = [1, 1]} : vector<2x8xf32> to vector<2x1xf32>
    %51 = vector.extract_strided_slice %1 {offsets = [7, 0], sizes = [1, 256], strides = [1, 1]} : vector<8x256xf32> to vector<1x256xf32>
    %52 = vector.broadcast %50 : vector<2x1xf32> to vector<2x256xf32>
    %53 = vector.broadcast %51 : vector<1x256xf32> to vector<2x256xf32>
    %54 = arith.mulf %52, %53 : vector<2x256xf32>
    %55 = arith.addf %49, %54 : vector<2x256xf32>
    %cst = arith.constant 0.000000e+00 : f32
    %56 = vector.broadcast %cst : f32 to vector<2x256xf32>
    %57 = arith.maximumf %55, %56 : vector<2x256xf32>
    %c0_10 = arith.constant 0 : index
    %c0_11 = arith.constant 0 : index
    %58 = vector.load %arg6[%c0_10, %c0_11] : memref<8x2xf32, #tpu.memory_space<vmem>>, vector<8x2xf32>
    %c0_12 = arith.constant 0 : index
    %c0_13 = arith.constant 0 : index
    %59 = vector.load %arg7[%c0_12, %c0_13] : memref<8x1xf32, #tpu.memory_space<vmem>>, vector<8x1xf32>
    %60 = vector.shape_cast %59 : vector<8x1xf32> to vector<8x1xf32>
    %61 = vector.broadcast %60 : vector<8x1xf32> to vector<8x256xf32>
    %62 = vector.extract_strided_slice %58 {offsets = [0, 0], sizes = [8, 1], strides = [1, 1]} : vector<8x2xf32> to vector<8x1xf32>
    %63 = vector.extract_strided_slice %57 {offsets = [0, 0], sizes = [1, 256], strides = [1, 1]} : vector<2x256xf32> to vector<1x256xf32>
    %64 = vector.broadcast %62 : vector<8x1xf32> to vector<8x256xf32>
    %65 = vector.broadcast %63 : vector<1x256xf32> to vector<8x256xf32>
    %66 = arith.mulf %64, %65 : vector<8x256xf32>
    %67 = arith.addf %61, %66 : vector<8x256xf32>
    %68 = vector.extract_strided_slice %58 {offsets = [0, 1], sizes = [8, 1], strides = [1, 1]} : vector<8x2xf32> to vector<8x1xf32>
    %69 = vector.extract_strided_slice %57 {offsets = [1, 0], sizes = [1, 256], strides = [1, 1]} : vector<2x256xf32> to vector<1x256xf32>
    %70 = vector.broadcast %68 : vector<8x1xf32> to vector<8x256xf32>
    %71 = vector.broadcast %69 : vector<1x256xf32> to vector<8x256xf32>
    %72 = arith.mulf %70, %71 : vector<8x256xf32>
    %73 = arith.addf %67, %72 : vector<8x256xf32>
    %74 = arith.negf %73 : vector<8x256xf32>
    %75 = math.exp %74 : vector<8x256xf32>
    %cst_14 = arith.constant 1.000000e+00 : f32
    %76 = vector.broadcast %cst_14 : f32 to vector<8x256xf32>
    %77 = arith.addf %76, %75 : vector<8x256xf32>
    %78 = arith.divf %76, %77 : vector<8x256xf32>
    %79 = arith.mulf %1, %78 : vector<8x256xf32>
    %c0_15 = arith.constant 0 : index
    %c0_16 = arith.constant 0 : index
    %c0_17 = arith.constant 0 : index
    %80 = vector.load %arg8[%c0_15, %c0_16, %c0_17] : memref<9x2x8xf32, #tpu.memory_space<vmem>>, vector<9x2x8xf32>
    %c0_18 = arith.constant 0 : index
    %c0_19 = arith.constant 0 : index
    %81 = vector.load %arg9[%c0_18, %c0_19] : memref<2x1xf32, #tpu.memory_space<vmem>>, vector<2x1xf32>
    %cst_20 = arith.constant 0.000000e+00 : f32
    %82 = vector.broadcast %cst_20 : f32 to vector<8x128xf32>
    %83 = tpu.concatenate %82, %79, %82 in 1 : vector<8x128xf32>, vector<8x256xf32>, vector<8x128xf32> -> vector<8x512xf32>
    %84 = vector.shape_cast %81 : vector<2x1xf32> to vector<2x1xf32>
    %85 = vector.broadcast %84 : vector<2x1xf32> to vector<2x256xf32>
    %86 = vector.extract_strided_slice %83 {offsets = [0, 111], sizes = [8, 256], strides = [1, 1]} : vector<8x512xf32> to vector<8x256xf32>
    %87 = vector.broadcast %2 : vector<1x256xf32> to vector<8x256xf32>
    %88 = arith.mulf %86, %87 : vector<8x256xf32>
    %89 = vector.extract_strided_slice %80 {offsets = [0, 0, 0], sizes = [1, 2, 8], strides = [1, 1, 1]} : vector<9x2x8xf32> to vector<1x2x8xf32>
    %90 = vector.shape_cast %89 : vector<1x2x8xf32> to vector<2x8xf32>
    %91 = vector.extract_strided_slice %90 {offsets = [0, 0], sizes = [2, 1], strides = [1, 1]} : vector<2x8xf32> to vector<2x1xf32>
    %92 = vector.extract_strided_slice %88 {offsets = [0, 0], sizes = [1, 256], strides = [1, 1]} : vector<8x256xf32> to vector<1x256xf32>
    %93 = vector.broadcast %91 : vector<2x1xf32> to vector<2x256xf32>
    %94 = vector.broadcast %92 : vector<1x256xf32> to vector<2x256xf32>
    %95 = arith.mulf %93, %94 : vector<2x256xf32>
    %96 = arith.addf %85, %95 : vector<2x256xf32>
    %97 = vector.extract_strided_slice %90 {offsets = [0, 1], sizes = [2, 1], strides = [1, 1]} : vector<2x8xf32> to vector<2x1xf32>
    %98 = vector.extract_strided_slice %88 {offsets = [1, 0], sizes = [1, 256], strides = [1, 1]} : vector<8x256xf32> to vector<1x256xf32>
    %99 = vector.broadcast %97 : vector<2x1xf32> to vector<2x256xf32>
    %100 = vector.broadcast %98 : vector<1x256xf32> to vector<2x256xf32>
    %101 = arith.mulf %99, %100 : vector<2x256xf32>
    %102 = arith.addf %96, %101 : vector<2x256xf32>
    %103 = vector.extract_strided_slice %90 {offsets = [0, 2], sizes = [2, 1], strides = [1, 1]} : vector<2x8xf32> to vector<2x1xf32>
    %104 = vector.extract_strided_slice %88 {offsets = [2, 0], sizes = [1, 256], strides = [1, 1]} : vector<8x256xf32> to vector<1x256xf32>
    %105 = vector.broadcast %103 : vector<2x1xf32> to vector<2x256xf32>
    %106 = vector.broadcast %104 : vector<1x256xf32> to vector<2x256xf32>
    %107 = arith.mulf %105, %106 : vector<2x256xf32>
    %108 = arith.addf %102, %107 : vector<2x256xf32>
    %109 = vector.extract_strided_slice %90 {offsets = [0, 3], sizes = [2, 1], strides = [1, 1]} : vector<2x8xf32> to vector<2x1xf32>
    %110 = vector.extract_strided_slice %88 {offsets = [3, 0], sizes = [1, 256], strides = [1, 1]} : vector<8x256xf32> to vector<1x256xf32>
    %111 = vector.broadcast %109 : vector<2x1xf32> to vector<2x256xf32>
    %112 = vector.broadcast %110 : vector<1x256xf32> to vector<2x256xf32>
    %113 = arith.mulf %111, %112 : vector<2x256xf32>
    %114 = arith.addf %108, %113 : vector<2x256xf32>
    %115 = vector.extract_strided_slice %90 {offsets = [0, 4], sizes = [2, 1], strides = [1, 1]} : vector<2x8xf32> to vector<2x1xf32>
    %116 = vector.extract_strided_slice %88 {offsets = [4, 0], sizes = [1, 256], strides = [1, 1]} : vector<8x256xf32> to vector<1x256xf32>
    %117 = vector.broadcast %115 : vector<2x1xf32> to vector<2x256xf32>
    %118 = vector.broadcast %116 : vector<1x256xf32> to vector<2x256xf32>
    %119 = arith.mulf %117, %118 : vector<2x256xf32>
    %120 = arith.addf %114, %119 : vector<2x256xf32>
    %121 = vector.extract_strided_slice %90 {offsets = [0, 5], sizes = [2, 1], strides = [1, 1]} : vector<2x8xf32> to vector<2x1xf32>
    %122 = vector.extract_strided_slice %88 {offsets = [5, 0], sizes = [1, 256], strides = [1, 1]} : vector<8x256xf32> to vector<1x256xf32>
    %123 = vector.broadcast %121 : vector<2x1xf32> to vector<2x256xf32>
    %124 = vector.broadcast %122 : vector<1x256xf32> to vector<2x256xf32>
    %125 = arith.mulf %123, %124 : vector<2x256xf32>
    %126 = arith.addf %120, %125 : vector<2x256xf32>
    %127 = vector.extract_strided_slice %90 {offsets = [0, 6], sizes = [2, 1], strides = [1, 1]} : vector<2x8xf32> to vector<2x1xf32>
    %128 = vector.extract_strided_slice %88 {offsets = [6, 0], sizes = [1, 256], strides = [1, 1]} : vector<8x256xf32> to vector<1x256xf32>
    %129 = vector.broadcast %127 : vector<2x1xf32> to vector<2x256xf32>
    %130 = vector.broadcast %128 : vector<1x256xf32> to vector<2x256xf32>
    %131 = arith.mulf %129, %130 : vector<2x256xf32>
    %132 = arith.addf %126, %131 : vector<2x256xf32>
    %133 = vector.extract_strided_slice %90 {offsets = [0, 7], sizes = [2, 1], strides = [1, 1]} : vector<2x8xf32> to vector<2x1xf32>
    %134 = vector.extract_strided_slice %88 {offsets = [7, 0], sizes = [1, 256], strides = [1, 1]} : vector<8x256xf32> to vector<1x256xf32>
    %135 = vector.broadcast %133 : vector<2x1xf32> to vector<2x256xf32>
    %136 = vector.broadcast %134 : vector<1x256xf32> to vector<2x256xf32>
    %137 = arith.mulf %135, %136 : vector<2x256xf32>
    %138 = arith.addf %132, %137 : vector<2x256xf32>
    %139 = vector.extract_strided_slice %83 {offsets = [0, 112], sizes = [8, 256], strides = [1, 1]} : vector<8x512xf32> to vector<8x256xf32>
    %140 = vector.extract_strided_slice %80 {offsets = [1, 0, 0], sizes = [1, 2, 8], strides = [1, 1, 1]} : vector<9x2x8xf32> to vector<1x2x8xf32>
    %141 = vector.shape_cast %140 : vector<1x2x8xf32> to vector<2x8xf32>
    %142 = vector.extract_strided_slice %141 {offsets = [0, 0], sizes = [2, 1], strides = [1, 1]} : vector<2x8xf32> to vector<2x1xf32>
    %143 = vector.extract_strided_slice %139 {offsets = [0, 0], sizes = [1, 256], strides = [1, 1]} : vector<8x256xf32> to vector<1x256xf32>
    %144 = vector.broadcast %142 : vector<2x1xf32> to vector<2x256xf32>
    %145 = vector.broadcast %143 : vector<1x256xf32> to vector<2x256xf32>
    %146 = arith.mulf %144, %145 : vector<2x256xf32>
    %147 = arith.addf %138, %146 : vector<2x256xf32>
    %148 = vector.extract_strided_slice %141 {offsets = [0, 1], sizes = [2, 1], strides = [1, 1]} : vector<2x8xf32> to vector<2x1xf32>
    %149 = vector.extract_strided_slice %139 {offsets = [1, 0], sizes = [1, 256], strides = [1, 1]} : vector<8x256xf32> to vector<1x256xf32>
    %150 = vector.broadcast %148 : vector<2x1xf32> to vector<2x256xf32>
    %151 = vector.broadcast %149 : vector<1x256xf32> to vector<2x256xf32>
    %152 = arith.mulf %150, %151 : vector<2x256xf32>
    %153 = arith.addf %147, %152 : vector<2x256xf32>
    %154 = vector.extract_strided_slice %141 {offsets = [0, 2], sizes = [2, 1], strides = [1, 1]} : vector<2x8xf32> to vector<2x1xf32>
    %155 = vector.extract_strided_slice %139 {offsets = [2, 0], sizes = [1, 256], strides = [1, 1]} : vector<8x256xf32> to vector<1x256xf32>
    %156 = vector.broadcast %154 : vector<2x1xf32> to vector<2x256xf32>
    %157 = vector.broadcast %155 : vector<1x256xf32> to vector<2x256xf32>
    %158 = arith.mulf %156, %157 : vector<2x256xf32>
    %159 = arith.addf %153, %158 : vector<2x256xf32>
    %160 = vector.extract_strided_slice %141 {offsets = [0, 3], sizes = [2, 1], strides = [1, 1]} : vector<2x8xf32> to vector<2x1xf32>
    %161 = vector.extract_strided_slice %139 {offsets = [3, 0], sizes = [1, 256], strides = [1, 1]} : vector<8x256xf32> to vector<1x256xf32>
    %162 = vector.broadcast %160 : vector<2x1xf32> to vector<2x256xf32>
    %163 = vector.broadcast %161 : vector<1x256xf32> to vector<2x256xf32>
    %164 = arith.mulf %162, %163 : vector<2x256xf32>
    %165 = arith.addf %159, %164 : vector<2x256xf32>
    %166 = vector.extract_strided_slice %141 {offsets = [0, 4], sizes = [2, 1], strides = [1, 1]} : vector<2x8xf32> to vector<2x1xf32>
    %167 = vector.extract_strided_slice %139 {offsets = [4, 0], sizes = [1, 256], strides = [1, 1]} : vector<8x256xf32> to vector<1x256xf32>
    %168 = vector.broadcast %166 : vector<2x1xf32> to vector<2x256xf32>
    %169 = vector.broadcast %167 : vector<1x256xf32> to vector<2x256xf32>
    %170 = arith.mulf %168, %169 : vector<2x256xf32>
    %171 = arith.addf %165, %170 : vector<2x256xf32>
    %172 = vector.extract_strided_slice %141 {offsets = [0, 5], sizes = [2, 1], strides = [1, 1]} : vector<2x8xf32> to vector<2x1xf32>
    %173 = vector.extract_strided_slice %139 {offsets = [5, 0], sizes = [1, 256], strides = [1, 1]} : vector<8x256xf32> to vector<1x256xf32>
    %174 = vector.broadcast %172 : vector<2x1xf32> to vector<2x256xf32>
    %175 = vector.broadcast %173 : vector<1x256xf32> to vector<2x256xf32>
    %176 = arith.mulf %174, %175 : vector<2x256xf32>
    %177 = arith.addf %171, %176 : vector<2x256xf32>
    %178 = vector.extract_strided_slice %141 {offsets = [0, 6], sizes = [2, 1], strides = [1, 1]} : vector<2x8xf32> to vector<2x1xf32>
    %179 = vector.extract_strided_slice %139 {offsets = [6, 0], sizes = [1, 256], strides = [1, 1]} : vector<8x256xf32> to vector<1x256xf32>
    %180 = vector.broadcast %178 : vector<2x1xf32> to vector<2x256xf32>
    %181 = vector.broadcast %179 : vector<1x256xf32> to vector<2x256xf32>
    %182 = arith.mulf %180, %181 : vector<2x256xf32>
    %183 = arith.addf %177, %182 : vector<2x256xf32>
    %184 = vector.extract_strided_slice %141 {offsets = [0, 7], sizes = [2, 1], strides = [1, 1]} : vector<2x8xf32> to vector<2x1xf32>
    %185 = vector.extract_strided_slice %139 {offsets = [7, 0], sizes = [1, 256], strides = [1, 1]} : vector<8x256xf32> to vector<1x256xf32>
    %186 = vector.broadcast %184 : vector<2x1xf32> to vector<2x256xf32>
    %187 = vector.broadcast %185 : vector<1x256xf32> to vector<2x256xf32>
    %188 = arith.mulf %186, %187 : vector<2x256xf32>
    %189 = arith.addf %183, %188 : vector<2x256xf32>
    %190 = vector.extract_strided_slice %83 {offsets = [0, 113], sizes = [8, 256], strides = [1, 1]} : vector<8x512xf32> to vector<8x256xf32>
    %191 = vector.broadcast %3 : vector<1x256xf32> to vector<8x256xf32>
    %192 = arith.mulf %190, %191 : vector<8x256xf32>
    %193 = vector.extract_strided_slice %80 {offsets = [2, 0, 0], sizes = [1, 2, 8], strides = [1, 1, 1]} : vector<9x2x8xf32> to vector<1x2x8xf32>
    %194 = vector.shape_cast %193 : vector<1x2x8xf32> to vector<2x8xf32>
    %195 = vector.extract_strided_slice %194 {offsets = [0, 0], sizes = [2, 1], strides = [1, 1]} : vector<2x8xf32> to vector<2x1xf32>
    %196 = vector.extract_strided_slice %192 {offsets = [0, 0], sizes = [1, 256], strides = [1, 1]} : vector<8x256xf32> to vector<1x256xf32>
    %197 = vector.broadcast %195 : vector<2x1xf32> to vector<2x256xf32>
    %198 = vector.broadcast %196 : vector<1x256xf32> to vector<2x256xf32>
    %199 = arith.mulf %197, %198 : vector<2x256xf32>
    %200 = arith.addf %189, %199 : vector<2x256xf32>
    %201 = vector.extract_strided_slice %194 {offsets = [0, 1], sizes = [2, 1], strides = [1, 1]} : vector<2x8xf32> to vector<2x1xf32>
    %202 = vector.extract_strided_slice %192 {offsets = [1, 0], sizes = [1, 256], strides = [1, 1]} : vector<8x256xf32> to vector<1x256xf32>
    %203 = vector.broadcast %201 : vector<2x1xf32> to vector<2x256xf32>
    %204 = vector.broadcast %202 : vector<1x256xf32> to vector<2x256xf32>
    %205 = arith.mulf %203, %204 : vector<2x256xf32>
    %206 = arith.addf %200, %205 : vector<2x256xf32>
    %207 = vector.extract_strided_slice %194 {offsets = [0, 2], sizes = [2, 1], strides = [1, 1]} : vector<2x8xf32> to vector<2x1xf32>
    %208 = vector.extract_strided_slice %192 {offsets = [2, 0], sizes = [1, 256], strides = [1, 1]} : vector<8x256xf32> to vector<1x256xf32>
    %209 = vector.broadcast %207 : vector<2x1xf32> to vector<2x256xf32>
    %210 = vector.broadcast %208 : vector<1x256xf32> to vector<2x256xf32>
    %211 = arith.mulf %209, %210 : vector<2x256xf32>
    %212 = arith.addf %206, %211 : vector<2x256xf32>
    %213 = vector.extract_strided_slice %194 {offsets = [0, 3], sizes = [2, 1], strides = [1, 1]} : vector<2x8xf32> to vector<2x1xf32>
    %214 = vector.extract_strided_slice %192 {offsets = [3, 0], sizes = [1, 256], strides = [1, 1]} : vector<8x256xf32> to vector<1x256xf32>
    %215 = vector.broadcast %213 : vector<2x1xf32> to vector<2x256xf32>
    %216 = vector.broadcast %214 : vector<1x256xf32> to vector<2x256xf32>
    %217 = arith.mulf %215, %216 : vector<2x256xf32>
    %218 = arith.addf %212, %217 : vector<2x256xf32>
    %219 = vector.extract_strided_slice %194 {offsets = [0, 4], sizes = [2, 1], strides = [1, 1]} : vector<2x8xf32> to vector<2x1xf32>
    %220 = vector.extract_strided_slice %192 {offsets = [4, 0], sizes = [1, 256], strides = [1, 1]} : vector<8x256xf32> to vector<1x256xf32>
    %221 = vector.broadcast %219 : vector<2x1xf32> to vector<2x256xf32>
    %222 = vector.broadcast %220 : vector<1x256xf32> to vector<2x256xf32>
    %223 = arith.mulf %221, %222 : vector<2x256xf32>
    %224 = arith.addf %218, %223 : vector<2x256xf32>
    %225 = vector.extract_strided_slice %194 {offsets = [0, 5], sizes = [2, 1], strides = [1, 1]} : vector<2x8xf32> to vector<2x1xf32>
    %226 = vector.extract_strided_slice %192 {offsets = [5, 0], sizes = [1, 256], strides = [1, 1]} : vector<8x256xf32> to vector<1x256xf32>
    %227 = vector.broadcast %225 : vector<2x1xf32> to vector<2x256xf32>
    %228 = vector.broadcast %226 : vector<1x256xf32> to vector<2x256xf32>
    %229 = arith.mulf %227, %228 : vector<2x256xf32>
    %230 = arith.addf %224, %229 : vector<2x256xf32>
    %231 = vector.extract_strided_slice %194 {offsets = [0, 6], sizes = [2, 1], strides = [1, 1]} : vector<2x8xf32> to vector<2x1xf32>
    %232 = vector.extract_strided_slice %192 {offsets = [6, 0], sizes = [1, 256], strides = [1, 1]} : vector<8x256xf32> to vector<1x256xf32>
    %233 = vector.broadcast %231 : vector<2x1xf32> to vector<2x256xf32>
    %234 = vector.broadcast %232 : vector<1x256xf32> to vector<2x256xf32>
    %235 = arith.mulf %233, %234 : vector<2x256xf32>
    %236 = arith.addf %230, %235 : vector<2x256xf32>
    %237 = vector.extract_strided_slice %194 {offsets = [0, 7], sizes = [2, 1], strides = [1, 1]} : vector<2x8xf32> to vector<2x1xf32>
    %238 = vector.extract_strided_slice %192 {offsets = [7, 0], sizes = [1, 256], strides = [1, 1]} : vector<8x256xf32> to vector<1x256xf32>
    %239 = vector.broadcast %237 : vector<2x1xf32> to vector<2x256xf32>
    %240 = vector.broadcast %238 : vector<1x256xf32> to vector<2x256xf32>
    %241 = arith.mulf %239, %240 : vector<2x256xf32>
    %242 = arith.addf %236, %241 : vector<2x256xf32>
    %243 = vector.extract_strided_slice %83 {offsets = [0, 127], sizes = [8, 256], strides = [1, 1]} : vector<8x512xf32> to vector<8x256xf32>
    %244 = vector.broadcast %2 : vector<1x256xf32> to vector<8x256xf32>
    %245 = arith.mulf %243, %244 : vector<8x256xf32>
    %246 = vector.extract_strided_slice %80 {offsets = [3, 0, 0], sizes = [1, 2, 8], strides = [1, 1, 1]} : vector<9x2x8xf32> to vector<1x2x8xf32>
    %247 = vector.shape_cast %246 : vector<1x2x8xf32> to vector<2x8xf32>
    %248 = vector.extract_strided_slice %247 {offsets = [0, 0], sizes = [2, 1], strides = [1, 1]} : vector<2x8xf32> to vector<2x1xf32>
    %249 = vector.extract_strided_slice %245 {offsets = [0, 0], sizes = [1, 256], strides = [1, 1]} : vector<8x256xf32> to vector<1x256xf32>
    %250 = vector.broadcast %248 : vector<2x1xf32> to vector<2x256xf32>
    %251 = vector.broadcast %249 : vector<1x256xf32> to vector<2x256xf32>
    %252 = arith.mulf %250, %251 : vector<2x256xf32>
    %253 = arith.addf %242, %252 : vector<2x256xf32>
    %254 = vector.extract_strided_slice %247 {offsets = [0, 1], sizes = [2, 1], strides = [1, 1]} : vector<2x8xf32> to vector<2x1xf32>
    %255 = vector.extract_strided_slice %245 {offsets = [1, 0], sizes = [1, 256], strides = [1, 1]} : vector<8x256xf32> to vector<1x256xf32>
    %256 = vector.broadcast %254 : vector<2x1xf32> to vector<2x256xf32>
    %257 = vector.broadcast %255 : vector<1x256xf32> to vector<2x256xf32>
    %258 = arith.mulf %256, %257 : vector<2x256xf32>
    %259 = arith.addf %253, %258 : vector<2x256xf32>
    %260 = vector.extract_strided_slice %247 {offsets = [0, 2], sizes = [2, 1], strides = [1, 1]} : vector<2x8xf32> to vector<2x1xf32>
    %261 = vector.extract_strided_slice %245 {offsets = [2, 0], sizes = [1, 256], strides = [1, 1]} : vector<8x256xf32> to vector<1x256xf32>
    %262 = vector.broadcast %260 : vector<2x1xf32> to vector<2x256xf32>
    %263 = vector.broadcast %261 : vector<1x256xf32> to vector<2x256xf32>
    %264 = arith.mulf %262, %263 : vector<2x256xf32>
    %265 = arith.addf %259, %264 : vector<2x256xf32>
    %266 = vector.extract_strided_slice %247 {offsets = [0, 3], sizes = [2, 1], strides = [1, 1]} : vector<2x8xf32> to vector<2x1xf32>
    %267 = vector.extract_strided_slice %245 {offsets = [3, 0], sizes = [1, 256], strides = [1, 1]} : vector<8x256xf32> to vector<1x256xf32>
    %268 = vector.broadcast %266 : vector<2x1xf32> to vector<2x256xf32>
    %269 = vector.broadcast %267 : vector<1x256xf32> to vector<2x256xf32>
    %270 = arith.mulf %268, %269 : vector<2x256xf32>
    %271 = arith.addf %265, %270 : vector<2x256xf32>
    %272 = vector.extract_strided_slice %247 {offsets = [0, 4], sizes = [2, 1], strides = [1, 1]} : vector<2x8xf32> to vector<2x1xf32>
    %273 = vector.extract_strided_slice %245 {offsets = [4, 0], sizes = [1, 256], strides = [1, 1]} : vector<8x256xf32> to vector<1x256xf32>
    %274 = vector.broadcast %272 : vector<2x1xf32> to vector<2x256xf32>
    %275 = vector.broadcast %273 : vector<1x256xf32> to vector<2x256xf32>
    %276 = arith.mulf %274, %275 : vector<2x256xf32>
    %277 = arith.addf %271, %276 : vector<2x256xf32>
    %278 = vector.extract_strided_slice %247 {offsets = [0, 5], sizes = [2, 1], strides = [1, 1]} : vector<2x8xf32> to vector<2x1xf32>
    %279 = vector.extract_strided_slice %245 {offsets = [5, 0], sizes = [1, 256], strides = [1, 1]} : vector<8x256xf32> to vector<1x256xf32>
    %280 = vector.broadcast %278 : vector<2x1xf32> to vector<2x256xf32>
    %281 = vector.broadcast %279 : vector<1x256xf32> to vector<2x256xf32>
    %282 = arith.mulf %280, %281 : vector<2x256xf32>
    %283 = arith.addf %277, %282 : vector<2x256xf32>
    %284 = vector.extract_strided_slice %247 {offsets = [0, 6], sizes = [2, 1], strides = [1, 1]} : vector<2x8xf32> to vector<2x1xf32>
    %285 = vector.extract_strided_slice %245 {offsets = [6, 0], sizes = [1, 256], strides = [1, 1]} : vector<8x256xf32> to vector<1x256xf32>
    %286 = vector.broadcast %284 : vector<2x1xf32> to vector<2x256xf32>
    %287 = vector.broadcast %285 : vector<1x256xf32> to vector<2x256xf32>
    %288 = arith.mulf %286, %287 : vector<2x256xf32>
    %289 = arith.addf %283, %288 : vector<2x256xf32>
    %290 = vector.extract_strided_slice %247 {offsets = [0, 7], sizes = [2, 1], strides = [1, 1]} : vector<2x8xf32> to vector<2x1xf32>
    %291 = vector.extract_strided_slice %245 {offsets = [7, 0], sizes = [1, 256], strides = [1, 1]} : vector<8x256xf32> to vector<1x256xf32>
    %292 = vector.broadcast %290 : vector<2x1xf32> to vector<2x256xf32>
    %293 = vector.broadcast %291 : vector<1x256xf32> to vector<2x256xf32>
    %294 = arith.mulf %292, %293 : vector<2x256xf32>
    %295 = arith.addf %289, %294 : vector<2x256xf32>
    %296 = vector.extract_strided_slice %83 {offsets = [0, 128], sizes = [8, 256], strides = [1, 1]} : vector<8x512xf32> to vector<8x256xf32>
    %297 = vector.extract_strided_slice %80 {offsets = [4, 0, 0], sizes = [1, 2, 8], strides = [1, 1, 1]} : vector<9x2x8xf32> to vector<1x2x8xf32>
    %298 = vector.shape_cast %297 : vector<1x2x8xf32> to vector<2x8xf32>
    %299 = vector.extract_strided_slice %298 {offsets = [0, 0], sizes = [2, 1], strides = [1, 1]} : vector<2x8xf32> to vector<2x1xf32>
    %300 = vector.extract_strided_slice %296 {offsets = [0, 0], sizes = [1, 256], strides = [1, 1]} : vector<8x256xf32> to vector<1x256xf32>
    %301 = vector.broadcast %299 : vector<2x1xf32> to vector<2x256xf32>
    %302 = vector.broadcast %300 : vector<1x256xf32> to vector<2x256xf32>
    %303 = arith.mulf %301, %302 : vector<2x256xf32>
    %304 = arith.addf %295, %303 : vector<2x256xf32>
    %305 = vector.extract_strided_slice %298 {offsets = [0, 1], sizes = [2, 1], strides = [1, 1]} : vector<2x8xf32> to vector<2x1xf32>
    %306 = vector.extract_strided_slice %296 {offsets = [1, 0], sizes = [1, 256], strides = [1, 1]} : vector<8x256xf32> to vector<1x256xf32>
    %307 = vector.broadcast %305 : vector<2x1xf32> to vector<2x256xf32>
    %308 = vector.broadcast %306 : vector<1x256xf32> to vector<2x256xf32>
    %309 = arith.mulf %307, %308 : vector<2x256xf32>
    %310 = arith.addf %304, %309 : vector<2x256xf32>
    %311 = vector.extract_strided_slice %298 {offsets = [0, 2], sizes = [2, 1], strides = [1, 1]} : vector<2x8xf32> to vector<2x1xf32>
    %312 = vector.extract_strided_slice %296 {offsets = [2, 0], sizes = [1, 256], strides = [1, 1]} : vector<8x256xf32> to vector<1x256xf32>
    %313 = vector.broadcast %311 : vector<2x1xf32> to vector<2x256xf32>
    %314 = vector.broadcast %312 : vector<1x256xf32> to vector<2x256xf32>
    %315 = arith.mulf %313, %314 : vector<2x256xf32>
    %316 = arith.addf %310, %315 : vector<2x256xf32>
    %317 = vector.extract_strided_slice %298 {offsets = [0, 3], sizes = [2, 1], strides = [1, 1]} : vector<2x8xf32> to vector<2x1xf32>
    %318 = vector.extract_strided_slice %296 {offsets = [3, 0], sizes = [1, 256], strides = [1, 1]} : vector<8x256xf32> to vector<1x256xf32>
    %319 = vector.broadcast %317 : vector<2x1xf32> to vector<2x256xf32>
    %320 = vector.broadcast %318 : vector<1x256xf32> to vector<2x256xf32>
    %321 = arith.mulf %319, %320 : vector<2x256xf32>
    %322 = arith.addf %316, %321 : vector<2x256xf32>
    %323 = vector.extract_strided_slice %298 {offsets = [0, 4], sizes = [2, 1], strides = [1, 1]} : vector<2x8xf32> to vector<2x1xf32>
    %324 = vector.extract_strided_slice %296 {offsets = [4, 0], sizes = [1, 256], strides = [1, 1]} : vector<8x256xf32> to vector<1x256xf32>
    %325 = vector.broadcast %323 : vector<2x1xf32> to vector<2x256xf32>
    %326 = vector.broadcast %324 : vector<1x256xf32> to vector<2x256xf32>
    %327 = arith.mulf %325, %326 : vector<2x256xf32>
    %328 = arith.addf %322, %327 : vector<2x256xf32>
    %329 = vector.extract_strided_slice %298 {offsets = [0, 5], sizes = [2, 1], strides = [1, 1]} : vector<2x8xf32> to vector<2x1xf32>
    %330 = vector.extract_strided_slice %296 {offsets = [5, 0], sizes = [1, 256], strides = [1, 1]} : vector<8x256xf32> to vector<1x256xf32>
    %331 = vector.broadcast %329 : vector<2x1xf32> to vector<2x256xf32>
    %332 = vector.broadcast %330 : vector<1x256xf32> to vector<2x256xf32>
    %333 = arith.mulf %331, %332 : vector<2x256xf32>
    %334 = arith.addf %328, %333 : vector<2x256xf32>
    %335 = vector.extract_strided_slice %298 {offsets = [0, 6], sizes = [2, 1], strides = [1, 1]} : vector<2x8xf32> to vector<2x1xf32>
    %336 = vector.extract_strided_slice %296 {offsets = [6, 0], sizes = [1, 256], strides = [1, 1]} : vector<8x256xf32> to vector<1x256xf32>
    %337 = vector.broadcast %335 : vector<2x1xf32> to vector<2x256xf32>
    %338 = vector.broadcast %336 : vector<1x256xf32> to vector<2x256xf32>
    %339 = arith.mulf %337, %338 : vector<2x256xf32>
    %340 = arith.addf %334, %339 : vector<2x256xf32>
    %341 = vector.extract_strided_slice %298 {offsets = [0, 7], sizes = [2, 1], strides = [1, 1]} : vector<2x8xf32> to vector<2x1xf32>
    %342 = vector.extract_strided_slice %296 {offsets = [7, 0], sizes = [1, 256], strides = [1, 1]} : vector<8x256xf32> to vector<1x256xf32>
    %343 = vector.broadcast %341 : vector<2x1xf32> to vector<2x256xf32>
    %344 = vector.broadcast %342 : vector<1x256xf32> to vector<2x256xf32>
    %345 = arith.mulf %343, %344 : vector<2x256xf32>
    %346 = arith.addf %340, %345 : vector<2x256xf32>
    %347 = vector.extract_strided_slice %83 {offsets = [0, 129], sizes = [8, 256], strides = [1, 1]} : vector<8x512xf32> to vector<8x256xf32>
    %348 = vector.broadcast %3 : vector<1x256xf32> to vector<8x256xf32>
    %349 = arith.mulf %347, %348 : vector<8x256xf32>
    %350 = vector.extract_strided_slice %80 {offsets = [5, 0, 0], sizes = [1, 2, 8], strides = [1, 1, 1]} : vector<9x2x8xf32> to vector<1x2x8xf32>
    %351 = vector.shape_cast %350 : vector<1x2x8xf32> to vector<2x8xf32>
    %352 = vector.extract_strided_slice %351 {offsets = [0, 0], sizes = [2, 1], strides = [1, 1]} : vector<2x8xf32> to vector<2x1xf32>
    %353 = vector.extract_strided_slice %349 {offsets = [0, 0], sizes = [1, 256], strides = [1, 1]} : vector<8x256xf32> to vector<1x256xf32>
    %354 = vector.broadcast %352 : vector<2x1xf32> to vector<2x256xf32>
    %355 = vector.broadcast %353 : vector<1x256xf32> to vector<2x256xf32>
    %356 = arith.mulf %354, %355 : vector<2x256xf32>
    %357 = arith.addf %346, %356 : vector<2x256xf32>
    %358 = vector.extract_strided_slice %351 {offsets = [0, 1], sizes = [2, 1], strides = [1, 1]} : vector<2x8xf32> to vector<2x1xf32>
    %359 = vector.extract_strided_slice %349 {offsets = [1, 0], sizes = [1, 256], strides = [1, 1]} : vector<8x256xf32> to vector<1x256xf32>
    %360 = vector.broadcast %358 : vector<2x1xf32> to vector<2x256xf32>
    %361 = vector.broadcast %359 : vector<1x256xf32> to vector<2x256xf32>
    %362 = arith.mulf %360, %361 : vector<2x256xf32>
    %363 = arith.addf %357, %362 : vector<2x256xf32>
    %364 = vector.extract_strided_slice %351 {offsets = [0, 2], sizes = [2, 1], strides = [1, 1]} : vector<2x8xf32> to vector<2x1xf32>
    %365 = vector.extract_strided_slice %349 {offsets = [2, 0], sizes = [1, 256], strides = [1, 1]} : vector<8x256xf32> to vector<1x256xf32>
    %366 = vector.broadcast %364 : vector<2x1xf32> to vector<2x256xf32>
    %367 = vector.broadcast %365 : vector<1x256xf32> to vector<2x256xf32>
    %368 = arith.mulf %366, %367 : vector<2x256xf32>
    %369 = arith.addf %363, %368 : vector<2x256xf32>
    %370 = vector.extract_strided_slice %351 {offsets = [0, 3], sizes = [2, 1], strides = [1, 1]} : vector<2x8xf32> to vector<2x1xf32>
    %371 = vector.extract_strided_slice %349 {offsets = [3, 0], sizes = [1, 256], strides = [1, 1]} : vector<8x256xf32> to vector<1x256xf32>
    %372 = vector.broadcast %370 : vector<2x1xf32> to vector<2x256xf32>
    %373 = vector.broadcast %371 : vector<1x256xf32> to vector<2x256xf32>
    %374 = arith.mulf %372, %373 : vector<2x256xf32>
    %375 = arith.addf %369, %374 : vector<2x256xf32>
    %376 = vector.extract_strided_slice %351 {offsets = [0, 4], sizes = [2, 1], strides = [1, 1]} : vector<2x8xf32> to vector<2x1xf32>
    %377 = vector.extract_strided_slice %349 {offsets = [4, 0], sizes = [1, 256], strides = [1, 1]} : vector<8x256xf32> to vector<1x256xf32>
    %378 = vector.broadcast %376 : vector<2x1xf32> to vector<2x256xf32>
    %379 = vector.broadcast %377 : vector<1x256xf32> to vector<2x256xf32>
    %380 = arith.mulf %378, %379 : vector<2x256xf32>
    %381 = arith.addf %375, %380 : vector<2x256xf32>
    %382 = vector.extract_strided_slice %351 {offsets = [0, 5], sizes = [2, 1], strides = [1, 1]} : vector<2x8xf32> to vector<2x1xf32>
    %383 = vector.extract_strided_slice %349 {offsets = [5, 0], sizes = [1, 256], strides = [1, 1]} : vector<8x256xf32> to vector<1x256xf32>
    %384 = vector.broadcast %382 : vector<2x1xf32> to vector<2x256xf32>
    %385 = vector.broadcast %383 : vector<1x256xf32> to vector<2x256xf32>
    %386 = arith.mulf %384, %385 : vector<2x256xf32>
    %387 = arith.addf %381, %386 : vector<2x256xf32>
    %388 = vector.extract_strided_slice %351 {offsets = [0, 6], sizes = [2, 1], strides = [1, 1]} : vector<2x8xf32> to vector<2x1xf32>
    %389 = vector.extract_strided_slice %349 {offsets = [6, 0], sizes = [1, 256], strides = [1, 1]} : vector<8x256xf32> to vector<1x256xf32>
    %390 = vector.broadcast %388 : vector<2x1xf32> to vector<2x256xf32>
    %391 = vector.broadcast %389 : vector<1x256xf32> to vector<2x256xf32>
    %392 = arith.mulf %390, %391 : vector<2x256xf32>
    %393 = arith.addf %387, %392 : vector<2x256xf32>
    %394 = vector.extract_strided_slice %351 {offsets = [0, 7], sizes = [2, 1], strides = [1, 1]} : vector<2x8xf32> to vector<2x1xf32>
    %395 = vector.extract_strided_slice %349 {offsets = [7, 0], sizes = [1, 256], strides = [1, 1]} : vector<8x256xf32> to vector<1x256xf32>
    %396 = vector.broadcast %394 : vector<2x1xf32> to vector<2x256xf32>
    %397 = vector.broadcast %395 : vector<1x256xf32> to vector<2x256xf32>
    %398 = arith.mulf %396, %397 : vector<2x256xf32>
    %399 = arith.addf %393, %398 : vector<2x256xf32>
    %400 = vector.extract_strided_slice %83 {offsets = [0, 143], sizes = [8, 256], strides = [1, 1]} : vector<8x512xf32> to vector<8x256xf32>
    %401 = vector.broadcast %2 : vector<1x256xf32> to vector<8x256xf32>
    %402 = arith.mulf %400, %401 : vector<8x256xf32>
    %403 = vector.extract_strided_slice %80 {offsets = [6, 0, 0], sizes = [1, 2, 8], strides = [1, 1, 1]} : vector<9x2x8xf32> to vector<1x2x8xf32>
    %404 = vector.shape_cast %403 : vector<1x2x8xf32> to vector<2x8xf32>
    %405 = vector.extract_strided_slice %404 {offsets = [0, 0], sizes = [2, 1], strides = [1, 1]} : vector<2x8xf32> to vector<2x1xf32>
    %406 = vector.extract_strided_slice %402 {offsets = [0, 0], sizes = [1, 256], strides = [1, 1]} : vector<8x256xf32> to vector<1x256xf32>
    %407 = vector.broadcast %405 : vector<2x1xf32> to vector<2x256xf32>
    %408 = vector.broadcast %406 : vector<1x256xf32> to vector<2x256xf32>
    %409 = arith.mulf %407, %408 : vector<2x256xf32>
    %410 = arith.addf %399, %409 : vector<2x256xf32>
    %411 = vector.extract_strided_slice %404 {offsets = [0, 1], sizes = [2, 1], strides = [1, 1]} : vector<2x8xf32> to vector<2x1xf32>
    %412 = vector.extract_strided_slice %402 {offsets = [1, 0], sizes = [1, 256], strides = [1, 1]} : vector<8x256xf32> to vector<1x256xf32>
    %413 = vector.broadcast %411 : vector<2x1xf32> to vector<2x256xf32>
    %414 = vector.broadcast %412 : vector<1x256xf32> to vector<2x256xf32>
    %415 = arith.mulf %413, %414 : vector<2x256xf32>
    %416 = arith.addf %410, %415 : vector<2x256xf32>
    %417 = vector.extract_strided_slice %404 {offsets = [0, 2], sizes = [2, 1], strides = [1, 1]} : vector<2x8xf32> to vector<2x1xf32>
    %418 = vector.extract_strided_slice %402 {offsets = [2, 0], sizes = [1, 256], strides = [1, 1]} : vector<8x256xf32> to vector<1x256xf32>
    %419 = vector.broadcast %417 : vector<2x1xf32> to vector<2x256xf32>
    %420 = vector.broadcast %418 : vector<1x256xf32> to vector<2x256xf32>
    %421 = arith.mulf %419, %420 : vector<2x256xf32>
    %422 = arith.addf %416, %421 : vector<2x256xf32>
    %423 = vector.extract_strided_slice %404 {offsets = [0, 3], sizes = [2, 1], strides = [1, 1]} : vector<2x8xf32> to vector<2x1xf32>
    %424 = vector.extract_strided_slice %402 {offsets = [3, 0], sizes = [1, 256], strides = [1, 1]} : vector<8x256xf32> to vector<1x256xf32>
    %425 = vector.broadcast %423 : vector<2x1xf32> to vector<2x256xf32>
    %426 = vector.broadcast %424 : vector<1x256xf32> to vector<2x256xf32>
    %427 = arith.mulf %425, %426 : vector<2x256xf32>
    %428 = arith.addf %422, %427 : vector<2x256xf32>
    %429 = vector.extract_strided_slice %404 {offsets = [0, 4], sizes = [2, 1], strides = [1, 1]} : vector<2x8xf32> to vector<2x1xf32>
    %430 = vector.extract_strided_slice %402 {offsets = [4, 0], sizes = [1, 256], strides = [1, 1]} : vector<8x256xf32> to vector<1x256xf32>
    %431 = vector.broadcast %429 : vector<2x1xf32> to vector<2x256xf32>
    %432 = vector.broadcast %430 : vector<1x256xf32> to vector<2x256xf32>
    %433 = arith.mulf %431, %432 : vector<2x256xf32>
    %434 = arith.addf %428, %433 : vector<2x256xf32>
    %435 = vector.extract_strided_slice %404 {offsets = [0, 5], sizes = [2, 1], strides = [1, 1]} : vector<2x8xf32> to vector<2x1xf32>
    %436 = vector.extract_strided_slice %402 {offsets = [5, 0], sizes = [1, 256], strides = [1, 1]} : vector<8x256xf32> to vector<1x256xf32>
    %437 = vector.broadcast %435 : vector<2x1xf32> to vector<2x256xf32>
    %438 = vector.broadcast %436 : vector<1x256xf32> to vector<2x256xf32>
    %439 = arith.mulf %437, %438 : vector<2x256xf32>
    %440 = arith.addf %434, %439 : vector<2x256xf32>
    %441 = vector.extract_strided_slice %404 {offsets = [0, 6], sizes = [2, 1], strides = [1, 1]} : vector<2x8xf32> to vector<2x1xf32>
    %442 = vector.extract_strided_slice %402 {offsets = [6, 0], sizes = [1, 256], strides = [1, 1]} : vector<8x256xf32> to vector<1x256xf32>
    %443 = vector.broadcast %441 : vector<2x1xf32> to vector<2x256xf32>
    %444 = vector.broadcast %442 : vector<1x256xf32> to vector<2x256xf32>
    %445 = arith.mulf %443, %444 : vector<2x256xf32>
    %446 = arith.addf %440, %445 : vector<2x256xf32>
    %447 = vector.extract_strided_slice %404 {offsets = [0, 7], sizes = [2, 1], strides = [1, 1]} : vector<2x8xf32> to vector<2x1xf32>
    %448 = vector.extract_strided_slice %402 {offsets = [7, 0], sizes = [1, 256], strides = [1, 1]} : vector<8x256xf32> to vector<1x256xf32>
    %449 = vector.broadcast %447 : vector<2x1xf32> to vector<2x256xf32>
    %450 = vector.broadcast %448 : vector<1x256xf32> to vector<2x256xf32>
    %451 = arith.mulf %449, %450 : vector<2x256xf32>
    %452 = arith.addf %446, %451 : vector<2x256xf32>
    %453 = vector.extract_strided_slice %83 {offsets = [0, 144], sizes = [8, 256], strides = [1, 1]} : vector<8x512xf32> to vector<8x256xf32>
    %454 = vector.extract_strided_slice %80 {offsets = [7, 0, 0], sizes = [1, 2, 8], strides = [1, 1, 1]} : vector<9x2x8xf32> to vector<1x2x8xf32>
    %455 = vector.shape_cast %454 : vector<1x2x8xf32> to vector<2x8xf32>
    %456 = vector.extract_strided_slice %455 {offsets = [0, 0], sizes = [2, 1], strides = [1, 1]} : vector<2x8xf32> to vector<2x1xf32>
    %457 = vector.extract_strided_slice %453 {offsets = [0, 0], sizes = [1, 256], strides = [1, 1]} : vector<8x256xf32> to vector<1x256xf32>
    %458 = vector.broadcast %456 : vector<2x1xf32> to vector<2x256xf32>
    %459 = vector.broadcast %457 : vector<1x256xf32> to vector<2x256xf32>
    %460 = arith.mulf %458, %459 : vector<2x256xf32>
    %461 = arith.addf %452, %460 : vector<2x256xf32>
    %462 = vector.extract_strided_slice %455 {offsets = [0, 1], sizes = [2, 1], strides = [1, 1]} : vector<2x8xf32> to vector<2x1xf32>
    %463 = vector.extract_strided_slice %453 {offsets = [1, 0], sizes = [1, 256], strides = [1, 1]} : vector<8x256xf32> to vector<1x256xf32>
    %464 = vector.broadcast %462 : vector<2x1xf32> to vector<2x256xf32>
    %465 = vector.broadcast %463 : vector<1x256xf32> to vector<2x256xf32>
    %466 = arith.mulf %464, %465 : vector<2x256xf32>
    %467 = arith.addf %461, %466 : vector<2x256xf32>
    %468 = vector.extract_strided_slice %455 {offsets = [0, 2], sizes = [2, 1], strides = [1, 1]} : vector<2x8xf32> to vector<2x1xf32>
    %469 = vector.extract_strided_slice %453 {offsets = [2, 0], sizes = [1, 256], strides = [1, 1]} : vector<8x256xf32> to vector<1x256xf32>
    %470 = vector.broadcast %468 : vector<2x1xf32> to vector<2x256xf32>
    %471 = vector.broadcast %469 : vector<1x256xf32> to vector<2x256xf32>
    %472 = arith.mulf %470, %471 : vector<2x256xf32>
    %473 = arith.addf %467, %472 : vector<2x256xf32>
    %474 = vector.extract_strided_slice %455 {offsets = [0, 3], sizes = [2, 1], strides = [1, 1]} : vector<2x8xf32> to vector<2x1xf32>
    %475 = vector.extract_strided_slice %453 {offsets = [3, 0], sizes = [1, 256], strides = [1, 1]} : vector<8x256xf32> to vector<1x256xf32>
    %476 = vector.broadcast %474 : vector<2x1xf32> to vector<2x256xf32>
    %477 = vector.broadcast %475 : vector<1x256xf32> to vector<2x256xf32>
    %478 = arith.mulf %476, %477 : vector<2x256xf32>
    %479 = arith.addf %473, %478 : vector<2x256xf32>
    %480 = vector.extract_strided_slice %455 {offsets = [0, 4], sizes = [2, 1], strides = [1, 1]} : vector<2x8xf32> to vector<2x1xf32>
    %481 = vector.extract_strided_slice %453 {offsets = [4, 0], sizes = [1, 256], strides = [1, 1]} : vector<8x256xf32> to vector<1x256xf32>
    %482 = vector.broadcast %480 : vector<2x1xf32> to vector<2x256xf32>
    %483 = vector.broadcast %481 : vector<1x256xf32> to vector<2x256xf32>
    %484 = arith.mulf %482, %483 : vector<2x256xf32>
    %485 = arith.addf %479, %484 : vector<2x256xf32>
    %486 = vector.extract_strided_slice %455 {offsets = [0, 5], sizes = [2, 1], strides = [1, 1]} : vector<2x8xf32> to vector<2x1xf32>
    %487 = vector.extract_strided_slice %453 {offsets = [5, 0], sizes = [1, 256], strides = [1, 1]} : vector<8x256xf32> to vector<1x256xf32>
    %488 = vector.broadcast %486 : vector<2x1xf32> to vector<2x256xf32>
    %489 = vector.broadcast %487 : vector<1x256xf32> to vector<2x256xf32>
    %490 = arith.mulf %488, %489 : vector<2x256xf32>
    %491 = arith.addf %485, %490 : vector<2x256xf32>
    %492 = vector.extract_strided_slice %455 {offsets = [0, 6], sizes = [2, 1], strides = [1, 1]} : vector<2x8xf32> to vector<2x1xf32>
    %493 = vector.extract_strided_slice %453 {offsets = [6, 0], sizes = [1, 256], strides = [1, 1]} : vector<8x256xf32> to vector<1x256xf32>
    %494 = vector.broadcast %492 : vector<2x1xf32> to vector<2x256xf32>
    %495 = vector.broadcast %493 : vector<1x256xf32> to vector<2x256xf32>
    %496 = arith.mulf %494, %495 : vector<2x256xf32>
    %497 = arith.addf %491, %496 : vector<2x256xf32>
    %498 = vector.extract_strided_slice %455 {offsets = [0, 7], sizes = [2, 1], strides = [1, 1]} : vector<2x8xf32> to vector<2x1xf32>
    %499 = vector.extract_strided_slice %453 {offsets = [7, 0], sizes = [1, 256], strides = [1, 1]} : vector<8x256xf32> to vector<1x256xf32>
    %500 = vector.broadcast %498 : vector<2x1xf32> to vector<2x256xf32>
    %501 = vector.broadcast %499 : vector<1x256xf32> to vector<2x256xf32>
    %502 = arith.mulf %500, %501 : vector<2x256xf32>
    %503 = arith.addf %497, %502 : vector<2x256xf32>
    %504 = vector.extract_strided_slice %83 {offsets = [0, 145], sizes = [8, 256], strides = [1, 1]} : vector<8x512xf32> to vector<8x256xf32>
    %505 = vector.broadcast %3 : vector<1x256xf32> to vector<8x256xf32>
    %506 = arith.mulf %504, %505 : vector<8x256xf32>
    %507 = vector.extract_strided_slice %80 {offsets = [8, 0, 0], sizes = [1, 2, 8], strides = [1, 1, 1]} : vector<9x2x8xf32> to vector<1x2x8xf32>
    %508 = vector.shape_cast %507 : vector<1x2x8xf32> to vector<2x8xf32>
    %509 = vector.extract_strided_slice %508 {offsets = [0, 0], sizes = [2, 1], strides = [1, 1]} : vector<2x8xf32> to vector<2x1xf32>
    %510 = vector.extract_strided_slice %506 {offsets = [0, 0], sizes = [1, 256], strides = [1, 1]} : vector<8x256xf32> to vector<1x256xf32>
    %511 = vector.broadcast %509 : vector<2x1xf32> to vector<2x256xf32>
    %512 = vector.broadcast %510 : vector<1x256xf32> to vector<2x256xf32>
    %513 = arith.mulf %511, %512 : vector<2x256xf32>
    %514 = arith.addf %503, %513 : vector<2x256xf32>
    %515 = vector.extract_strided_slice %508 {offsets = [0, 1], sizes = [2, 1], strides = [1, 1]} : vector<2x8xf32> to vector<2x1xf32>
    %516 = vector.extract_strided_slice %506 {offsets = [1, 0], sizes = [1, 256], strides = [1, 1]} : vector<8x256xf32> to vector<1x256xf32>
    %517 = vector.broadcast %515 : vector<2x1xf32> to vector<2x256xf32>
    %518 = vector.broadcast %516 : vector<1x256xf32> to vector<2x256xf32>
    %519 = arith.mulf %517, %518 : vector<2x256xf32>
    %520 = arith.addf %514, %519 : vector<2x256xf32>
    %521 = vector.extract_strided_slice %508 {offsets = [0, 2], sizes = [2, 1], strides = [1, 1]} : vector<2x8xf32> to vector<2x1xf32>
    %522 = vector.extract_strided_slice %506 {offsets = [2, 0], sizes = [1, 256], strides = [1, 1]} : vector<8x256xf32> to vector<1x256xf32>
    %523 = vector.broadcast %521 : vector<2x1xf32> to vector<2x256xf32>
    %524 = vector.broadcast %522 : vector<1x256xf32> to vector<2x256xf32>
    %525 = arith.mulf %523, %524 : vector<2x256xf32>
    %526 = arith.addf %520, %525 : vector<2x256xf32>
    %527 = vector.extract_strided_slice %508 {offsets = [0, 3], sizes = [2, 1], strides = [1, 1]} : vector<2x8xf32> to vector<2x1xf32>
    %528 = vector.extract_strided_slice %506 {offsets = [3, 0], sizes = [1, 256], strides = [1, 1]} : vector<8x256xf32> to vector<1x256xf32>
    %529 = vector.broadcast %527 : vector<2x1xf32> to vector<2x256xf32>
    %530 = vector.broadcast %528 : vector<1x256xf32> to vector<2x256xf32>
    %531 = arith.mulf %529, %530 : vector<2x256xf32>
    %532 = arith.addf %526, %531 : vector<2x256xf32>
    %533 = vector.extract_strided_slice %508 {offsets = [0, 4], sizes = [2, 1], strides = [1, 1]} : vector<2x8xf32> to vector<2x1xf32>
    %534 = vector.extract_strided_slice %506 {offsets = [4, 0], sizes = [1, 256], strides = [1, 1]} : vector<8x256xf32> to vector<1x256xf32>
    %535 = vector.broadcast %533 : vector<2x1xf32> to vector<2x256xf32>
    %536 = vector.broadcast %534 : vector<1x256xf32> to vector<2x256xf32>
    %537 = arith.mulf %535, %536 : vector<2x256xf32>
    %538 = arith.addf %532, %537 : vector<2x256xf32>
    %539 = vector.extract_strided_slice %508 {offsets = [0, 5], sizes = [2, 1], strides = [1, 1]} : vector<2x8xf32> to vector<2x1xf32>
    %540 = vector.extract_strided_slice %506 {offsets = [5, 0], sizes = [1, 256], strides = [1, 1]} : vector<8x256xf32> to vector<1x256xf32>
    %541 = vector.broadcast %539 : vector<2x1xf32> to vector<2x256xf32>
    %542 = vector.broadcast %540 : vector<1x256xf32> to vector<2x256xf32>
    %543 = arith.mulf %541, %542 : vector<2x256xf32>
    %544 = arith.addf %538, %543 : vector<2x256xf32>
    %545 = vector.extract_strided_slice %508 {offsets = [0, 6], sizes = [2, 1], strides = [1, 1]} : vector<2x8xf32> to vector<2x1xf32>
    %546 = vector.extract_strided_slice %506 {offsets = [6, 0], sizes = [1, 256], strides = [1, 1]} : vector<8x256xf32> to vector<1x256xf32>
    %547 = vector.broadcast %545 : vector<2x1xf32> to vector<2x256xf32>
    %548 = vector.broadcast %546 : vector<1x256xf32> to vector<2x256xf32>
    %549 = arith.mulf %547, %548 : vector<2x256xf32>
    %550 = arith.addf %544, %549 : vector<2x256xf32>
    %551 = vector.extract_strided_slice %508 {offsets = [0, 7], sizes = [2, 1], strides = [1, 1]} : vector<2x8xf32> to vector<2x1xf32>
    %552 = vector.extract_strided_slice %506 {offsets = [7, 0], sizes = [1, 256], strides = [1, 1]} : vector<8x256xf32> to vector<1x256xf32>
    %553 = vector.broadcast %551 : vector<2x1xf32> to vector<2x256xf32>
    %554 = vector.broadcast %552 : vector<1x256xf32> to vector<2x256xf32>
    %555 = arith.mulf %553, %554 : vector<2x256xf32>
    %556 = arith.addf %550, %555 : vector<2x256xf32>
    %cst_21 = arith.constant 0.000000e+00 : f32
    %557 = vector.broadcast %cst_21 : f32 to vector<2x256xf32>
    %558 = arith.maximumf %556, %557 : vector<2x256xf32>
    %c0_22 = arith.constant 0 : index
    %c0_23 = arith.constant 0 : index
    %c0_24 = arith.constant 0 : index
    %559 = vector.load %arg10[%c0_22, %c0_23, %c0_24] : memref<9x8x2xf32, #tpu.memory_space<vmem>>, vector<9x8x2xf32>
    %c0_25 = arith.constant 0 : index
    %c0_26 = arith.constant 0 : index
    %560 = vector.load %arg11[%c0_25, %c0_26] : memref<8x1xf32, #tpu.memory_space<vmem>>, vector<8x1xf32>
    %cst_27 = arith.constant 0.000000e+00 : f32
    %561 = vector.broadcast %cst_27 : f32 to vector<2x128xf32>
    %562 = tpu.concatenate %561, %558, %561 in 1 : vector<2x128xf32>, vector<2x256xf32>, vector<2x128xf32> -> vector<2x512xf32>
    %563 = vector.shape_cast %560 : vector<8x1xf32> to vector<8x1xf32>
    %564 = vector.broadcast %563 : vector<8x1xf32> to vector<8x256xf32>
    %565 = vector.extract_strided_slice %562 {offsets = [0, 111], sizes = [2, 256], strides = [1, 1]} : vector<2x512xf32> to vector<2x256xf32>
    %566 = vector.broadcast %2 : vector<1x256xf32> to vector<2x256xf32>
    %567 = arith.mulf %565, %566 : vector<2x256xf32>
    %568 = vector.extract_strided_slice %559 {offsets = [0, 0, 0], sizes = [1, 8, 2], strides = [1, 1, 1]} : vector<9x8x2xf32> to vector<1x8x2xf32>
    %569 = vector.shape_cast %568 : vector<1x8x2xf32> to vector<8x2xf32>
    %570 = vector.extract_strided_slice %569 {offsets = [0, 0], sizes = [8, 1], strides = [1, 1]} : vector<8x2xf32> to vector<8x1xf32>
    %571 = vector.extract_strided_slice %567 {offsets = [0, 0], sizes = [1, 256], strides = [1, 1]} : vector<2x256xf32> to vector<1x256xf32>
    %572 = vector.broadcast %570 : vector<8x1xf32> to vector<8x256xf32>
    %573 = vector.broadcast %571 : vector<1x256xf32> to vector<8x256xf32>
    %574 = arith.mulf %572, %573 : vector<8x256xf32>
    %575 = arith.addf %564, %574 : vector<8x256xf32>
    %576 = vector.extract_strided_slice %569 {offsets = [0, 1], sizes = [8, 1], strides = [1, 1]} : vector<8x2xf32> to vector<8x1xf32>
    %577 = vector.extract_strided_slice %567 {offsets = [1, 0], sizes = [1, 256], strides = [1, 1]} : vector<2x256xf32> to vector<1x256xf32>
    %578 = vector.broadcast %576 : vector<8x1xf32> to vector<8x256xf32>
    %579 = vector.broadcast %577 : vector<1x256xf32> to vector<8x256xf32>
    %580 = arith.mulf %578, %579 : vector<8x256xf32>
    %581 = arith.addf %575, %580 : vector<8x256xf32>
    %582 = vector.extract_strided_slice %562 {offsets = [0, 112], sizes = [2, 256], strides = [1, 1]} : vector<2x512xf32> to vector<2x256xf32>
    %583 = vector.extract_strided_slice %559 {offsets = [1, 0, 0], sizes = [1, 8, 2], strides = [1, 1, 1]} : vector<9x8x2xf32> to vector<1x8x2xf32>
    %584 = vector.shape_cast %583 : vector<1x8x2xf32> to vector<8x2xf32>
    %585 = vector.extract_strided_slice %584 {offsets = [0, 0], sizes = [8, 1], strides = [1, 1]} : vector<8x2xf32> to vector<8x1xf32>
    %586 = vector.extract_strided_slice %582 {offsets = [0, 0], sizes = [1, 256], strides = [1, 1]} : vector<2x256xf32> to vector<1x256xf32>
    %587 = vector.broadcast %585 : vector<8x1xf32> to vector<8x256xf32>
    %588 = vector.broadcast %586 : vector<1x256xf32> to vector<8x256xf32>
    %589 = arith.mulf %587, %588 : vector<8x256xf32>
    %590 = arith.addf %581, %589 : vector<8x256xf32>
    %591 = vector.extract_strided_slice %584 {offsets = [0, 1], sizes = [8, 1], strides = [1, 1]} : vector<8x2xf32> to vector<8x1xf32>
    %592 = vector.extract_strided_slice %582 {offsets = [1, 0], sizes = [1, 256], strides = [1, 1]} : vector<2x256xf32> to vector<1x256xf32>
    %593 = vector.broadcast %591 : vector<8x1xf32> to vector<8x256xf32>
    %594 = vector.broadcast %592 : vector<1x256xf32> to vector<8x256xf32>
    %595 = arith.mulf %593, %594 : vector<8x256xf32>
    %596 = arith.addf %590, %595 : vector<8x256xf32>
    %597 = vector.extract_strided_slice %562 {offsets = [0, 113], sizes = [2, 256], strides = [1, 1]} : vector<2x512xf32> to vector<2x256xf32>
    %598 = vector.broadcast %3 : vector<1x256xf32> to vector<2x256xf32>
    %599 = arith.mulf %597, %598 : vector<2x256xf32>
    %600 = vector.extract_strided_slice %559 {offsets = [2, 0, 0], sizes = [1, 8, 2], strides = [1, 1, 1]} : vector<9x8x2xf32> to vector<1x8x2xf32>
    %601 = vector.shape_cast %600 : vector<1x8x2xf32> to vector<8x2xf32>
    %602 = vector.extract_strided_slice %601 {offsets = [0, 0], sizes = [8, 1], strides = [1, 1]} : vector<8x2xf32> to vector<8x1xf32>
    %603 = vector.extract_strided_slice %599 {offsets = [0, 0], sizes = [1, 256], strides = [1, 1]} : vector<2x256xf32> to vector<1x256xf32>
    %604 = vector.broadcast %602 : vector<8x1xf32> to vector<8x256xf32>
    %605 = vector.broadcast %603 : vector<1x256xf32> to vector<8x256xf32>
    %606 = arith.mulf %604, %605 : vector<8x256xf32>
    %607 = arith.addf %596, %606 : vector<8x256xf32>
    %608 = vector.extract_strided_slice %601 {offsets = [0, 1], sizes = [8, 1], strides = [1, 1]} : vector<8x2xf32> to vector<8x1xf32>
    %609 = vector.extract_strided_slice %599 {offsets = [1, 0], sizes = [1, 256], strides = [1, 1]} : vector<2x256xf32> to vector<1x256xf32>
    %610 = vector.broadcast %608 : vector<8x1xf32> to vector<8x256xf32>
    %611 = vector.broadcast %609 : vector<1x256xf32> to vector<8x256xf32>
    %612 = arith.mulf %610, %611 : vector<8x256xf32>
    %613 = arith.addf %607, %612 : vector<8x256xf32>
    %614 = vector.extract_strided_slice %562 {offsets = [0, 127], sizes = [2, 256], strides = [1, 1]} : vector<2x512xf32> to vector<2x256xf32>
    %615 = vector.broadcast %2 : vector<1x256xf32> to vector<2x256xf32>
    %616 = arith.mulf %614, %615 : vector<2x256xf32>
    %617 = vector.extract_strided_slice %559 {offsets = [3, 0, 0], sizes = [1, 8, 2], strides = [1, 1, 1]} : vector<9x8x2xf32> to vector<1x8x2xf32>
    %618 = vector.shape_cast %617 : vector<1x8x2xf32> to vector<8x2xf32>
    %619 = vector.extract_strided_slice %618 {offsets = [0, 0], sizes = [8, 1], strides = [1, 1]} : vector<8x2xf32> to vector<8x1xf32>
    %620 = vector.extract_strided_slice %616 {offsets = [0, 0], sizes = [1, 256], strides = [1, 1]} : vector<2x256xf32> to vector<1x256xf32>
    %621 = vector.broadcast %619 : vector<8x1xf32> to vector<8x256xf32>
    %622 = vector.broadcast %620 : vector<1x256xf32> to vector<8x256xf32>
    %623 = arith.mulf %621, %622 : vector<8x256xf32>
    %624 = arith.addf %613, %623 : vector<8x256xf32>
    %625 = vector.extract_strided_slice %618 {offsets = [0, 1], sizes = [8, 1], strides = [1, 1]} : vector<8x2xf32> to vector<8x1xf32>
    %626 = vector.extract_strided_slice %616 {offsets = [1, 0], sizes = [1, 256], strides = [1, 1]} : vector<2x256xf32> to vector<1x256xf32>
    %627 = vector.broadcast %625 : vector<8x1xf32> to vector<8x256xf32>
    %628 = vector.broadcast %626 : vector<1x256xf32> to vector<8x256xf32>
    %629 = arith.mulf %627, %628 : vector<8x256xf32>
    %630 = arith.addf %624, %629 : vector<8x256xf32>
    %631 = vector.extract_strided_slice %562 {offsets = [0, 128], sizes = [2, 256], strides = [1, 1]} : vector<2x512xf32> to vector<2x256xf32>
    %632 = vector.extract_strided_slice %559 {offsets = [4, 0, 0], sizes = [1, 8, 2], strides = [1, 1, 1]} : vector<9x8x2xf32> to vector<1x8x2xf32>
    %633 = vector.shape_cast %632 : vector<1x8x2xf32> to vector<8x2xf32>
    %634 = vector.extract_strided_slice %633 {offsets = [0, 0], sizes = [8, 1], strides = [1, 1]} : vector<8x2xf32> to vector<8x1xf32>
    %635 = vector.extract_strided_slice %631 {offsets = [0, 0], sizes = [1, 256], strides = [1, 1]} : vector<2x256xf32> to vector<1x256xf32>
    %636 = vector.broadcast %634 : vector<8x1xf32> to vector<8x256xf32>
    %637 = vector.broadcast %635 : vector<1x256xf32> to vector<8x256xf32>
    %638 = arith.mulf %636, %637 : vector<8x256xf32>
    %639 = arith.addf %630, %638 : vector<8x256xf32>
    %640 = vector.extract_strided_slice %633 {offsets = [0, 1], sizes = [8, 1], strides = [1, 1]} : vector<8x2xf32> to vector<8x1xf32>
    %641 = vector.extract_strided_slice %631 {offsets = [1, 0], sizes = [1, 256], strides = [1, 1]} : vector<2x256xf32> to vector<1x256xf32>
    %642 = vector.broadcast %640 : vector<8x1xf32> to vector<8x256xf32>
    %643 = vector.broadcast %641 : vector<1x256xf32> to vector<8x256xf32>
    %644 = arith.mulf %642, %643 : vector<8x256xf32>
    %645 = arith.addf %639, %644 : vector<8x256xf32>
    %646 = vector.extract_strided_slice %562 {offsets = [0, 129], sizes = [2, 256], strides = [1, 1]} : vector<2x512xf32> to vector<2x256xf32>
    %647 = vector.broadcast %3 : vector<1x256xf32> to vector<2x256xf32>
    %648 = arith.mulf %646, %647 : vector<2x256xf32>
    %649 = vector.extract_strided_slice %559 {offsets = [5, 0, 0], sizes = [1, 8, 2], strides = [1, 1, 1]} : vector<9x8x2xf32> to vector<1x8x2xf32>
    %650 = vector.shape_cast %649 : vector<1x8x2xf32> to vector<8x2xf32>
    %651 = vector.extract_strided_slice %650 {offsets = [0, 0], sizes = [8, 1], strides = [1, 1]} : vector<8x2xf32> to vector<8x1xf32>
    %652 = vector.extract_strided_slice %648 {offsets = [0, 0], sizes = [1, 256], strides = [1, 1]} : vector<2x256xf32> to vector<1x256xf32>
    %653 = vector.broadcast %651 : vector<8x1xf32> to vector<8x256xf32>
    %654 = vector.broadcast %652 : vector<1x256xf32> to vector<8x256xf32>
    %655 = arith.mulf %653, %654 : vector<8x256xf32>
    %656 = arith.addf %645, %655 : vector<8x256xf32>
    %657 = vector.extract_strided_slice %650 {offsets = [0, 1], sizes = [8, 1], strides = [1, 1]} : vector<8x2xf32> to vector<8x1xf32>
    %658 = vector.extract_strided_slice %648 {offsets = [1, 0], sizes = [1, 256], strides = [1, 1]} : vector<2x256xf32> to vector<1x256xf32>
    %659 = vector.broadcast %657 : vector<8x1xf32> to vector<8x256xf32>
    %660 = vector.broadcast %658 : vector<1x256xf32> to vector<8x256xf32>
    %661 = arith.mulf %659, %660 : vector<8x256xf32>
    %662 = arith.addf %656, %661 : vector<8x256xf32>
    %663 = vector.extract_strided_slice %562 {offsets = [0, 143], sizes = [2, 256], strides = [1, 1]} : vector<2x512xf32> to vector<2x256xf32>
    %664 = vector.broadcast %2 : vector<1x256xf32> to vector<2x256xf32>
    %665 = arith.mulf %663, %664 : vector<2x256xf32>
    %666 = vector.extract_strided_slice %559 {offsets = [6, 0, 0], sizes = [1, 8, 2], strides = [1, 1, 1]} : vector<9x8x2xf32> to vector<1x8x2xf32>
    %667 = vector.shape_cast %666 : vector<1x8x2xf32> to vector<8x2xf32>
    %668 = vector.extract_strided_slice %667 {offsets = [0, 0], sizes = [8, 1], strides = [1, 1]} : vector<8x2xf32> to vector<8x1xf32>
    %669 = vector.extract_strided_slice %665 {offsets = [0, 0], sizes = [1, 256], strides = [1, 1]} : vector<2x256xf32> to vector<1x256xf32>
    %670 = vector.broadcast %668 : vector<8x1xf32> to vector<8x256xf32>
    %671 = vector.broadcast %669 : vector<1x256xf32> to vector<8x256xf32>
    %672 = arith.mulf %670, %671 : vector<8x256xf32>
    %673 = arith.addf %662, %672 : vector<8x256xf32>
    %674 = vector.extract_strided_slice %667 {offsets = [0, 1], sizes = [8, 1], strides = [1, 1]} : vector<8x2xf32> to vector<8x1xf32>
    %675 = vector.extract_strided_slice %665 {offsets = [1, 0], sizes = [1, 256], strides = [1, 1]} : vector<2x256xf32> to vector<1x256xf32>
    %676 = vector.broadcast %674 : vector<8x1xf32> to vector<8x256xf32>
    %677 = vector.broadcast %675 : vector<1x256xf32> to vector<8x256xf32>
    %678 = arith.mulf %676, %677 : vector<8x256xf32>
    %679 = arith.addf %673, %678 : vector<8x256xf32>
    %680 = vector.extract_strided_slice %562 {offsets = [0, 144], sizes = [2, 256], strides = [1, 1]} : vector<2x512xf32> to vector<2x256xf32>
    %681 = vector.extract_strided_slice %559 {offsets = [7, 0, 0], sizes = [1, 8, 2], strides = [1, 1, 1]} : vector<9x8x2xf32> to vector<1x8x2xf32>
    %682 = vector.shape_cast %681 : vector<1x8x2xf32> to vector<8x2xf32>
    %683 = vector.extract_strided_slice %682 {offsets = [0, 0], sizes = [8, 1], strides = [1, 1]} : vector<8x2xf32> to vector<8x1xf32>
    %684 = vector.extract_strided_slice %680 {offsets = [0, 0], sizes = [1, 256], strides = [1, 1]} : vector<2x256xf32> to vector<1x256xf32>
    %685 = vector.broadcast %683 : vector<8x1xf32> to vector<8x256xf32>
    %686 = vector.broadcast %684 : vector<1x256xf32> to vector<8x256xf32>
    %687 = arith.mulf %685, %686 : vector<8x256xf32>
    %688 = arith.addf %679, %687 : vector<8x256xf32>
    %689 = vector.extract_strided_slice %682 {offsets = [0, 1], sizes = [8, 1], strides = [1, 1]} : vector<8x2xf32> to vector<8x1xf32>
    %690 = vector.extract_strided_slice %680 {offsets = [1, 0], sizes = [1, 256], strides = [1, 1]} : vector<2x256xf32> to vector<1x256xf32>
    %691 = vector.broadcast %689 : vector<8x1xf32> to vector<8x256xf32>
    %692 = vector.broadcast %690 : vector<1x256xf32> to vector<8x256xf32>
    %693 = arith.mulf %691, %692 : vector<8x256xf32>
    %694 = arith.addf %688, %693 : vector<8x256xf32>
    %695 = vector.extract_strided_slice %562 {offsets = [0, 145], sizes = [2, 256], strides = [1, 1]} : vector<2x512xf32> to vector<2x256xf32>
    %696 = vector.broadcast %3 : vector<1x256xf32> to vector<2x256xf32>
    %697 = arith.mulf %695, %696 : vector<2x256xf32>
    %698 = vector.extract_strided_slice %559 {offsets = [8, 0, 0], sizes = [1, 8, 2], strides = [1, 1, 1]} : vector<9x8x2xf32> to vector<1x8x2xf32>
    %699 = vector.shape_cast %698 : vector<1x8x2xf32> to vector<8x2xf32>
    %700 = vector.extract_strided_slice %699 {offsets = [0, 0], sizes = [8, 1], strides = [1, 1]} : vector<8x2xf32> to vector<8x1xf32>
    %701 = vector.extract_strided_slice %697 {offsets = [0, 0], sizes = [1, 256], strides = [1, 1]} : vector<2x256xf32> to vector<1x256xf32>
    %702 = vector.broadcast %700 : vector<8x1xf32> to vector<8x256xf32>
    %703 = vector.broadcast %701 : vector<1x256xf32> to vector<8x256xf32>
    %704 = arith.mulf %702, %703 : vector<8x256xf32>
    %705 = arith.addf %694, %704 : vector<8x256xf32>
    %706 = vector.extract_strided_slice %699 {offsets = [0, 1], sizes = [8, 1], strides = [1, 1]} : vector<8x2xf32> to vector<8x1xf32>
    %707 = vector.extract_strided_slice %697 {offsets = [1, 0], sizes = [1, 256], strides = [1, 1]} : vector<2x256xf32> to vector<1x256xf32>
    %708 = vector.broadcast %706 : vector<8x1xf32> to vector<8x256xf32>
    %709 = vector.broadcast %707 : vector<1x256xf32> to vector<8x256xf32>
    %710 = arith.mulf %708, %709 : vector<8x256xf32>
    %711 = arith.addf %705, %710 : vector<8x256xf32>
    %712 = arith.negf %711 : vector<8x256xf32>
    %713 = math.exp %712 : vector<8x256xf32>
    %cst_28 = arith.constant 1.000000e+00 : f32
    %714 = vector.broadcast %cst_28 : f32 to vector<8x256xf32>
    %715 = arith.addf %714, %713 : vector<8x256xf32>
    %716 = arith.divf %714, %715 : vector<8x256xf32>
    %717 = arith.mulf %79, %716 : vector<8x256xf32>
    %c0_29 = arith.constant 0 : index
    %c0_30 = arith.constant 0 : index
    %718 = vector.load %arg12[%c0_29, %c0_30] : memref<16x8xf32, #tpu.memory_space<vmem>>, vector<16x8xf32>
    %c0_31 = arith.constant 0 : index
    %c0_32 = arith.constant 0 : index
    %719 = vector.load %arg13[%c0_31, %c0_32] : memref<16x1xf32, #tpu.memory_space<vmem>>, vector<16x1xf32>
    %720 = vector.shape_cast %719 : vector<16x1xf32> to vector<16x1xf32>
    %721 = vector.broadcast %720 : vector<16x1xf32> to vector<16x256xf32>
    %722 = vector.extract_strided_slice %718 {offsets = [0, 0], sizes = [16, 1], strides = [1, 1]} : vector<16x8xf32> to vector<16x1xf32>
    %723 = vector.extract_strided_slice %717 {offsets = [0, 0], sizes = [1, 256], strides = [1, 1]} : vector<8x256xf32> to vector<1x256xf32>
    %724 = vector.broadcast %722 : vector<16x1xf32> to vector<16x256xf32>
    %725 = vector.broadcast %723 : vector<1x256xf32> to vector<16x256xf32>
    %726 = arith.mulf %724, %725 : vector<16x256xf32>
    %727 = arith.addf %721, %726 : vector<16x256xf32>
    %728 = vector.extract_strided_slice %718 {offsets = [0, 1], sizes = [16, 1], strides = [1, 1]} : vector<16x8xf32> to vector<16x1xf32>
    %729 = vector.extract_strided_slice %717 {offsets = [1, 0], sizes = [1, 256], strides = [1, 1]} : vector<8x256xf32> to vector<1x256xf32>
    %730 = vector.broadcast %728 : vector<16x1xf32> to vector<16x256xf32>
    %731 = vector.broadcast %729 : vector<1x256xf32> to vector<16x256xf32>
    %732 = arith.mulf %730, %731 : vector<16x256xf32>
    %733 = arith.addf %727, %732 : vector<16x256xf32>
    %734 = vector.extract_strided_slice %718 {offsets = [0, 2], sizes = [16, 1], strides = [1, 1]} : vector<16x8xf32> to vector<16x1xf32>
    %735 = vector.extract_strided_slice %717 {offsets = [2, 0], sizes = [1, 256], strides = [1, 1]} : vector<8x256xf32> to vector<1x256xf32>
    %736 = vector.broadcast %734 : vector<16x1xf32> to vector<16x256xf32>
    %737 = vector.broadcast %735 : vector<1x256xf32> to vector<16x256xf32>
    %738 = arith.mulf %736, %737 : vector<16x256xf32>
    %739 = arith.addf %733, %738 : vector<16x256xf32>
    %740 = vector.extract_strided_slice %718 {offsets = [0, 3], sizes = [16, 1], strides = [1, 1]} : vector<16x8xf32> to vector<16x1xf32>
    %741 = vector.extract_strided_slice %717 {offsets = [3, 0], sizes = [1, 256], strides = [1, 1]} : vector<8x256xf32> to vector<1x256xf32>
    %742 = vector.broadcast %740 : vector<16x1xf32> to vector<16x256xf32>
    %743 = vector.broadcast %741 : vector<1x256xf32> to vector<16x256xf32>
    %744 = arith.mulf %742, %743 : vector<16x256xf32>
    %745 = arith.addf %739, %744 : vector<16x256xf32>
    %746 = vector.extract_strided_slice %718 {offsets = [0, 4], sizes = [16, 1], strides = [1, 1]} : vector<16x8xf32> to vector<16x1xf32>
    %747 = vector.extract_strided_slice %717 {offsets = [4, 0], sizes = [1, 256], strides = [1, 1]} : vector<8x256xf32> to vector<1x256xf32>
    %748 = vector.broadcast %746 : vector<16x1xf32> to vector<16x256xf32>
    %749 = vector.broadcast %747 : vector<1x256xf32> to vector<16x256xf32>
    %750 = arith.mulf %748, %749 : vector<16x256xf32>
    %751 = arith.addf %745, %750 : vector<16x256xf32>
    %752 = vector.extract_strided_slice %718 {offsets = [0, 5], sizes = [16, 1], strides = [1, 1]} : vector<16x8xf32> to vector<16x1xf32>
    %753 = vector.extract_strided_slice %717 {offsets = [5, 0], sizes = [1, 256], strides = [1, 1]} : vector<8x256xf32> to vector<1x256xf32>
    %754 = vector.broadcast %752 : vector<16x1xf32> to vector<16x256xf32>
    %755 = vector.broadcast %753 : vector<1x256xf32> to vector<16x256xf32>
    %756 = arith.mulf %754, %755 : vector<16x256xf32>
    %757 = arith.addf %751, %756 : vector<16x256xf32>
    %758 = vector.extract_strided_slice %718 {offsets = [0, 6], sizes = [16, 1], strides = [1, 1]} : vector<16x8xf32> to vector<16x1xf32>
    %759 = vector.extract_strided_slice %717 {offsets = [6, 0], sizes = [1, 256], strides = [1, 1]} : vector<8x256xf32> to vector<1x256xf32>
    %760 = vector.broadcast %758 : vector<16x1xf32> to vector<16x256xf32>
    %761 = vector.broadcast %759 : vector<1x256xf32> to vector<16x256xf32>
    %762 = arith.mulf %760, %761 : vector<16x256xf32>
    %763 = arith.addf %757, %762 : vector<16x256xf32>
    %764 = vector.extract_strided_slice %718 {offsets = [0, 7], sizes = [16, 1], strides = [1, 1]} : vector<16x8xf32> to vector<16x1xf32>
    %765 = vector.extract_strided_slice %717 {offsets = [7, 0], sizes = [1, 256], strides = [1, 1]} : vector<8x256xf32> to vector<1x256xf32>
    %766 = vector.broadcast %764 : vector<16x1xf32> to vector<16x256xf32>
    %767 = vector.broadcast %765 : vector<1x256xf32> to vector<16x256xf32>
    %768 = arith.mulf %766, %767 : vector<16x256xf32>
    %769 = arith.addf %763, %768 : vector<16x256xf32>
    %c0_33 = arith.constant 0 : index
    %c0_34 = arith.constant 0 : index
    %c0_35 = arith.constant 0 : index
    %770 = vector.load %arg14[%c0_33, %c0_34, %c0_35] : memref<1x16x256xf32, #tpu.memory_space<vmem>>, vector<1x16x256xf32>
    %771 = vector.shape_cast %770 : vector<1x16x256xf32> to vector<16x256xf32>
    %772 = vector.shape_cast %769 : vector<16x256xf32> to vector<1x16x256xf32>
    tpu.vector_store %arg14[%c0_33, %c0_34, %c0_35], %772 {strides = array<i32>} : memref<1x16x256xf32, #tpu.memory_space<vmem>>, vector<1x16x256xf32>,
    return
  }
  func.func @transform_0(%arg0: i32) -> (i32, i32, i32) {
    %c0_i32 = arith.constant 0 : i32
    %c0_i32_0 = arith.constant 0 : i32
    %c0_i32_1 = arith.constant 0 : i32
    return %arg0, %c0_i32, %c0_i32_0 : i32, i32, i32
  }
  func.func @transform_1(%arg0: i32) -> (i32, i32) {
    %c0_i32 = arith.constant 0 : i32
    %c0_i32_0 = arith.constant 0 : i32
    %c0_i32_1 = arith.constant 0 : i32
    return %c0_i32, %c0_i32_0 : i32, i32
  }
  func.func @transform_2(%arg0: i32) -> (i32, i32) {
    %c0_i32 = arith.constant 0 : i32
    %c0_i32_0 = arith.constant 0 : i32
    %c0_i32_1 = arith.constant 0 : i32
    return %c0_i32, %c0_i32_0 : i32, i32
  }
  func.func @transform_3(%arg0: i32) -> (i32, i32) {
    %c0_i32 = arith.constant 0 : i32
    %c0_i32_0 = arith.constant 0 : i32
    %c0_i32_1 = arith.constant 0 : i32
    return %c0_i32, %c0_i32_0 : i32, i32
  }
  func.func @transform_4(%arg0: i32) -> (i32, i32) {
    %c0_i32 = arith.constant 0 : i32
    %c0_i32_0 = arith.constant 0 : i32
    %c0_i32_1 = arith.constant 0 : i32
    return %c0_i32, %c0_i32_0 : i32, i32
  }
  func.func @transform_5(%arg0: i32) -> (i32, i32) {
    %c0_i32 = arith.constant 0 : i32
    %c0_i32_0 = arith.constant 0 : i32
    %c0_i32_1 = arith.constant 0 : i32
    return %c0_i32, %c0_i32_0 : i32, i32
  }
  func.func @transform_6(%arg0: i32) -> (i32, i32) {
    %c0_i32 = arith.constant 0 : i32
    %c0_i32_0 = arith.constant 0 : i32
    %c0_i32_1 = arith.constant 0 : i32
    return %c0_i32, %c0_i32_0 : i32, i32
  }
  func.func @transform_7(%arg0: i32) -> (i32, i32, i32) {
    %c0_i32 = arith.constant 0 : i32
    %c0_i32_0 = arith.constant 0 : i32
    %c0_i32_1 = arith.constant 0 : i32
    %c0_i32_2 = arith.constant 0 : i32
    return %c0_i32, %c0_i32_0, %c0_i32_1 : i32, i32, i32
  }
  func.func @transform_8(%arg0: i32) -> (i32, i32) {
    %c0_i32 = arith.constant 0 : i32
    %c0_i32_0 = arith.constant 0 : i32
    %c0_i32_1 = arith.constant 0 : i32
    return %c0_i32, %c0_i32_0 : i32, i32
  }
  func.func @transform_9(%arg0: i32) -> (i32, i32, i32) {
    %c0_i32 = arith.constant 0 : i32
    %c0_i32_0 = arith.constant 0 : i32
    %c0_i32_1 = arith.constant 0 : i32
    %c0_i32_2 = arith.constant 0 : i32
    return %c0_i32, %c0_i32_0, %c0_i32_1 : i32, i32, i32
  }
  func.func @transform_10(%arg0: i32) -> (i32, i32) {
    %c0_i32 = arith.constant 0 : i32
    %c0_i32_0 = arith.constant 0 : i32
    %c0_i32_1 = arith.constant 0 : i32
    return %c0_i32, %c0_i32_0 : i32, i32
  }
  func.func @transform_11(%arg0: i32) -> (i32, i32) {
    %c0_i32 = arith.constant 0 : i32
    %c0_i32_0 = arith.constant 0 : i32
    %c0_i32_1 = arith.constant 0 : i32
    return %c0_i32, %c0_i32_0 : i32, i32
  }
  func.func @transform_12(%arg0: i32) -> (i32, i32) {
    %c0_i32 = arith.constant 0 : i32
    %c0_i32_0 = arith.constant 0 : i32
    %c0_i32_1 = arith.constant 0 : i32
    return %c0_i32, %c0_i32_0 : i32, i32
  }
  func.func @transform_13(%arg0: i32) -> (i32, i32, i32) {
    %c0_i32 = arith.constant 0 : i32
    %c0_i32_0 = arith.constant 0 : i32
    %c0_i32_1 = arith.constant 0 : i32
    return %arg0, %c0_i32, %c0_i32_0 : i32, i32, i32
  }
}

</mosaic_0001>

<llo_original>
// kernel: wc_attention_forward.1
$region0: #{wc_attention_forward.1}
  #allocation0 [shape = 'u32[]', space=smem, size = 0x4, offset = 0x4, fixed_abs, tag = 'smem constant byte address 0x4 - core index']
  #allocation1 [shape = 'u32[144,128]{1,0:T(1,128)}', space=vmem, size = 0x12000, scoped, tag = 'internal scratch']
  %s0 = inlined_call_operand.vmem [shape: f32[2,8,256], index: 0, kind: input, shape index: {}]
  %s1 = inlined_call_operand.vmem [shape: f32[1,256], index: 1, kind: input, shape index: {}]
  %s2 = inlined_call_operand.vmem [shape: f32[1,256], index: 2, kind: input, shape index: {}]
  %s3 = inlined_call_operand.vmem [shape: f32[2,8], index: 3, kind: input, shape index: {}]
  %s4 = inlined_call_operand.vmem [shape: f32[2,1], index: 4, kind: input, shape index: {}]
  %s5 = inlined_call_operand.vmem [shape: f32[8,2], index: 5, kind: input, shape index: {}]
  %s6 = inlined_call_operand.vmem [shape: f32[8,1], index: 6, kind: input, shape index: {}]
  %s7 = inlined_call_operand.vmem [shape: f32[9,2,8], index: 7, kind: input, shape index: {}]
  %s8 = inlined_call_operand.vmem [shape: f32[2,1], index: 8, kind: input, shape index: {}]
  %s9 = inlined_call_operand.vmem [shape: f32[9,8,2], index: 9, kind: input, shape index: {}]
  %s10 = inlined_call_operand.vmem [shape: f32[8,1], index: 10, kind: input, shape index: {}]
  %s11 = inlined_call_operand.vmem [shape: f32[16,8], index: 11, kind: input, shape index: {}]
  %s12 = inlined_call_operand.vmem [shape: f32[16,1], index: 12, kind: input, shape index: {}]
  %s13 = inlined_call_operand.vmem [shape: f32[2,16,256], index: 13, kind: output, shape index: {}]
  %s14 = sld [smem:[#allocation0]]
  $region85: #{wc_attention_forward.1} parent=0
    _
  %s16 = ssub.s32 1, %s14
  %s17 = scalar_select 0, %s16, %s14
  loop: start=0, step=1, limit=4
  $region2: #{wc_attention_forward.1} parent=0 // loop_pre_header
    _
  $region3: #{wc_attention_forward.1} parent=0 // loop_header
    %s19 = sphi 0, %s23
    %p20 = scmp.ge.s32.totalorder %s19, 4
    %s29 = sphi 0, %s31
    %s32 = sphi 0, %s29
    %s33 = sphi 0, %s32
    %s49 = sphi 0, %s33
    %s53 = sphi 0, %s53
    %s55 = sphi 0, %s53
    %s56 = sphi 0, %s55
    %s70 = sphi 0, %s56
    %s74 = sphi 0, %s74
    %s76 = sphi 0, %s74
    %s77 = sphi 0, %s76
    %s91 = sphi 0, %s77
    %s95 = sphi 0, %s95
    %s97 = sphi 0, %s95
    %s98 = sphi 0, %s97
    %s112 = sphi 0, %s98
    %s116 = sphi 0, %s116
    %s118 = sphi 0, %s116
    %s119 = sphi 0, %s118
    %s133 = sphi 0, %s119
    %s137 = sphi 0, %s137
    %s139 = sphi 0, %s137
    %s140 = sphi 0, %s139
    %s154 = sphi 0, %s140
    %s158 = sphi 0, %s158
    %s160 = sphi 0, %s158
    %s161 = sphi 0, %s160
    %s175 = sphi 0, %s161
    %s179 = sphi 0, %s179
    %s181 = sphi 0, %s179
    %s182 = sphi 0, %s181
    %s196 = sphi 0, %s182
    %s200 = sphi 0, %s200
    %s202 = sphi 0, %s200
    %s203 = sphi 0, %s202
    %s217 = sphi 0, %s203
    %s221 = sphi 0, %s221
    %s223 = sphi 0, %s221
    %s224 = sphi 0, %s223
    %s238 = sphi 0, %s224
    %s242 = sphi 0, %s242
    %s244 = sphi 0, %s242
    %s245 = sphi 0, %s244
    %s259 = sphi 0, %s245
    %s263 = sphi 0, %s263
    %s265 = sphi 0, %s263
    %s266 = sphi 0, %s265
    %s280 = sphi 0, %s266
    %s284 = sphi 0, %s284
    %s286 = sphi 0, %s284
    %s287 = sphi 0, %s286
    %s301 = sphi 0, %s287
    %s307 = sphi 0, %s309
    %s310 = sphi 0, %s307
    %s311 = sphi 0, %s310
    %s327 = sphi 0, %s311
  $region4: #{wc_attention_forward.1} parent=0 // loop_header_branch
    %22 = sbr.rel (%p20) target = $region8
  $region5: #{wc_attention_forward.1} parent=0 // loop_body
    %s24 = ssub.s32 %s19, 1
    %s25 = ssub.s32 %s19, 2
    %s26 = sadd.s32 %s19, 1
    %s27 = ssub.s32 %s19, %s26
    %p28 = scmp.eq.s32.totalorder %s27, 0
    %s30 = sadd.s32 %s29, 1
    %s31 = scalar_select %p28, %s29, %s30
    %p34 = pneg %p28
    %p35 = scmp.eq.s32.totalorder %s19, 1
    %p36 = por %p34, %p35
    %p37 = scmp.ne.s32.totalorder %s29, %s32
    %p38 = scmp.eq.s32.totalorder %s19, 0
    %p39 = por %p37, %p38
    %p40 = scmp.ne.s32.totalorder %s29, %s32
    %p41 = scmp.eq.s32.totalorder %s24, 1
    %p42 = por %p40, %p41
    %p43 = scmp.ne.s32.totalorder %s32, %s33
    %p44 = scmp.eq.s32.totalorder %s24, 0
    %p45 = por %p43, %p44
    %p46 = scmp.ne.s32.totalorder %s32, %s33
    %p47 = scmp.eq.s32.totalorder %s25, 1
    %p48 = por %p46, %p47
    %p50 = scmp.ne.s32.totalorder %s33, %s49
    %p51 = scmp.eq.s32.totalorder %s25, 0
    %p52 = por %p50, %p51
    %s54 = sadd.s32 %s53, 1
    %p57 = scmp.eq.s32.totalorder %s19, 1
    %p58 = scmp.ne.s32.totalorder %s53, %s55
    %p59 = scmp.eq.s32.totalorder %s19, 0
    %p60 = por %p58, %p59
    %p61 = scmp.ne.s32.totalorder %s53, %s55
    %p62 = scmp.eq.s32.totalorder %s24, 1
    %p63 = por %p61, %p62
    %p64 = scmp.ne.s32.totalorder %s55, %s56
    %p65 = scmp.eq.s32.totalorder %s24, 0
    %p66 = por %p64, %p65
    %p67 = scmp.ne.s32.totalorder %s55, %s56
    %p68 = scmp.eq.s32.totalorder %s25, 1
    %p69 = por %p67, %p68
    %p71 = scmp.ne.s32.totalorder %s56, %s70
    %p72 = scmp.eq.s32.totalorder %s25, 0
    %p73 = por %p71, %p72
    %s75 = sadd.s32 %s74, 1
    %p78 = scmp.eq.s32.totalorder %s19, 1
    %p79 = scmp.ne.s32.totalorder %s74, %s76
    %p80 = scmp.eq.s32.totalorder %s19, 0
    %p81 = por %p79, %p80
    %p82 = scmp.ne.s32.totalorder %s74, %s76
    %p83 = scmp.eq.s32.totalorder %s24, 1
    %p84 = por %p82, %p83
    %p85 = scmp.ne.s32.totalorder %s76, %s77
    %p86 = scmp.eq.s32.totalorder %s24, 0
    %p87 = por %p85, %p86
    %p88 = scmp.ne.s32.totalorder %s76, %s77
    %p89 = scmp.eq.s32.totalorder %s25, 1
    %p90 = por %p88, %p89
    %p92 = scmp.ne.s32.totalorder %s77, %s91
    %p93 = scmp.eq.s32.totalorder %s25, 0
    %p94 = por %p92, %p93
    %s96 = sadd.s32 %s95, 1
    %p99 = scmp.eq.s32.totalorder %s19, 1
    %p100 = scmp.ne.s32.totalorder %s95, %s97
    %p101 = scmp.eq.s32.totalorder %s19, 0
    %p102 = por %p100, %p101
    %p103 = scmp.ne.s32.totalorder %s95, %s97
    %p104 = scmp.eq.s32.totalorder %s24, 1
    %p105 = por %p103, %p104
    %p106 = scmp.ne.s32.totalorder %s97, %s98
    %p107 = scmp.eq.s32.totalorder %s24, 0
    %p108 = por %p106, %p107
    %p109 = scmp.ne.s32.totalorder %s97, %s98
    %p110 = scmp.eq.s32.totalorder %s25, 1
    %p111 = por %p109, %p110
    %p113 = scmp.ne.s32.totalorder %s98, %s112
    %p114 = scmp.eq.s32.totalorder %s25, 0
    %p115 = por %p113, %p114
    %s117 = sadd.s32 %s116, 1
    %p120 = scmp.eq.s32.totalorder %s19, 1
    %p121 = scmp.ne.s32.totalorder %s116, %s118
    %p122 = scmp.eq.s32.totalorder %s19, 0
    %p123 = por %p121, %p122
    %p124 = scmp.ne.s32.totalorder %s116, %s118
    %p125 = scmp.eq.s32.totalorder %s24, 1
    %p126 = por %p124, %p125
    %p127 = scmp.ne.s32.totalorder %s118, %s119
    %p128 = scmp.eq.s32.totalorder %s24, 0
    %p129 = por %p127, %p128
    %p130 = scmp.ne.s32.totalorder %s118, %s119
    %p131 = scmp.eq.s32.totalorder %s25, 1
    %p132 = por %p130, %p131
    %p134 = scmp.ne.s32.totalorder %s119, %s133
    %p135 = scmp.eq.s32.totalorder %s25, 0
    %p136 = por %p134, %p135
    %s138 = sadd.s32 %s137, 1
    %p141 = scmp.eq.s32.totalorder %s19, 1
    %p142 = scmp.ne.s32.totalorder %s137, %s139
    %p143 = scmp.eq.s32.totalorder %s19, 0
    %p144 = por %p142, %p143
    %p145 = scmp.ne.s32.totalorder %s137, %s139
    %p146 = scmp.eq.s32.totalorder %s24, 1
    %p147 = por %p145, %p146
    %p148 = scmp.ne.s32.totalorder %s139, %s140
    %p149 = scmp.eq.s32.totalorder %s24, 0
    %p150 = por %p148, %p149
    %p151 = scmp.ne.s32.totalorder %s139, %s140
    %p152 = scmp.eq.s32.totalorder %s25, 1
    %p153 = por %p151, %p152
    %p155 = scmp.ne.s32.totalorder %s140, %s154
    %p156 = scmp.eq.s32.totalorder %s25, 0
    %p157 = por %p155, %p156
    %s159 = sadd.s32 %s158, 1
    %p162 = scmp.eq.s32.totalorder %s19, 1
    %p163 = scmp.ne.s32.totalorder %s158, %s160
    %p164 = scmp.eq.s32.totalorder %s19, 0
    %p165 = por %p163, %p164
    %p166 = scmp.ne.s32.totalorder %s158, %s160
    %p167 = scmp.eq.s32.totalorder %s24, 1
    %p168 = por %p166, %p167
    %p169 = scmp.ne.s32.totalorder %s160, %s161
    %p170 = scmp.eq.s32.totalorder %s24, 0
    %p171 = por %p169, %p170
    %p172 = scmp.ne.s32.totalorder %s160, %s161
    %p173 = scmp.eq.s32.totalorder %s25, 1
    %p174 = por %p172, %p173
    %p176 = scmp.ne.s32.totalorder %s161, %s175
    %p177 = scmp.eq.s32.totalorder %s25, 0
    %p178 = por %p176, %p177
    %s180 = sadd.s32 %s179, 1
    %p183 = scmp.eq.s32.totalorder %s19, 1
    %p184 = scmp.ne.s32.totalorder %s179, %s181
    %p185 = scmp.eq.s32.totalorder %s19, 0
    %p186 = por %p184, %p185
    %p187 = scmp.ne.s32.totalorder %s179, %s181
    %p188 = scmp.eq.s32.totalorder %s24, 1
    %p189 = por %p187, %p188
    %p190 = scmp.ne.s32.totalorder %s181, %s182
    %p191 = scmp.eq.s32.totalorder %s24, 0
    %p192 = por %p190, %p191
    %p193 = scmp.ne.s32.totalorder %s181, %s182
    %p194 = scmp.eq.s32.totalorder %s25, 1
    %p195 = por %p193, %p194
    %p197 = scmp.ne.s32.totalorder %s182, %s196
    %p198 = scmp.eq.s32.totalorder %s25, 0
    %p199 = por %p197, %p198
    %s201 = sadd.s32 %s200, 1
    %p204 = scmp.eq.s32.totalorder %s19, 1
    %p205 = scmp.ne.s32.totalorder %s200, %s202
    %p206 = scmp.eq.s32.totalorder %s19, 0
    %p207 = por %p205, %p206
    %p208 = scmp.ne.s32.totalorder %s200, %s202
    %p209 = scmp.eq.s32.totalorder %s24, 1
    %p210 = por %p208, %p209
    %p211 = scmp.ne.s32.totalorder %s202, %s203
    %p212 = scmp.eq.s32.totalorder %s24, 0
    %p213 = por %p211, %p212
    %p214 = scmp.ne.s32.totalorder %s202, %s203
    %p215 = scmp.eq.s32.totalorder %s25, 1
    %p216 = por %p214, %p215
    %p218 = scmp.ne.s32.totalorder %s203, %s217
    %p219 = scmp.eq.s32.totalorder %s25, 0
    %p220 = por %p218, %p219
    %s222 = sadd.s32 %s221, 1
    %p225 = scmp.eq.s32.totalorder %s19, 1
    %p226 = scmp.ne.s32.totalorder %s221, %s223
    %p227 = scmp.eq.s32.totalorder %s19, 0
    %p228 = por %p226, %p227
    %p229 = scmp.ne.s32.totalorder %s221, %s223
    %p230 = scmp.eq.s32.totalorder %s24, 1
    %p231 = por %p229, %p230
    %p232 = scmp.ne.s32.totalorder %s223, %s224
    %p233 = scmp.eq.s32.totalorder %s24, 0
    %p234 = por %p232, %p233
    %p235 = scmp.ne.s32.totalorder %s223, %s224
    %p236 = scmp.eq.s32.totalorder %s25, 1
    %p237 = por %p235, %p236
    %p239 = scmp.ne.s32.totalorder %s224, %s238
    %p240 = scmp.eq.s32.totalorder %s25, 0
    %p241 = por %p239, %p240
    %s243 = sadd.s32 %s242, 1
    %p246 = scmp.eq.s32.totalorder %s19, 1
    %p247 = scmp.ne.s32.totalorder %s242, %s244
    %p248 = scmp.eq.s32.totalorder %s19, 0
    %p249 = por %p247, %p248
    %p250 = scmp.ne.s32.totalorder %s242, %s244
    %p251 = scmp.eq.s32.totalorder %s24, 1
    %p252 = por %p250, %p251
    %p253 = scmp.ne.s32.totalorder %s244, %s245
    %p254 = scmp.eq.s32.totalorder %s24, 0
    %p255 = por %p253, %p254
    %p256 = scmp.ne.s32.totalorder %s244, %s245
    %p257 = scmp.eq.s32.totalorder %s25, 1
    %p258 = por %p256, %p257
    %p260 = scmp.ne.s32.totalorder %s245, %s259
    %p261 = scmp.eq.s32.totalorder %s25, 0
    %p262 = por %p260, %p261
    %s264 = sadd.s32 %s263, 1
    %p267 = scmp.eq.s32.totalorder %s19, 1
    %p268 = scmp.ne.s32.totalorder %s263, %s265
    %p269 = scmp.eq.s32.totalorder %s19, 0
    %p270 = por %p268, %p269
    %p271 = scmp.ne.s32.totalorder %s263, %s265
    %p272 = scmp.eq.s32.totalorder %s24, 1
    %p273 = por %p271, %p272
    %p274 = scmp.ne.s32.totalorder %s265, %s266
    %p275 = scmp.eq.s32.totalorder %s24, 0
    %p276 = por %p274, %p275
    %p277 = scmp.ne.s32.totalorder %s265, %s266
    %p278 = scmp.eq.s32.totalorder %s25, 1
    %p279 = por %p277, %p278
    %p281 = scmp.ne.s32.totalorder %s266, %s280
    %p282 = scmp.eq.s32.totalorder %s25, 0
    %p283 = por %p281, %p282
    %s285 = sadd.s32 %s284, 1
    %p288 = scmp.eq.s32.totalorder %s19, 1
    %p289 = scmp.ne.s32.totalorder %s284, %s286
    %p290 = scmp.eq.s32.totalorder %s19, 0
    %p291 = por %p289, %p290
    %p292 = scmp.ne.s32.totalorder %s284, %s286
    %p293 = scmp.eq.s32.totalorder %s24, 1
    %p294 = por %p292, %p293
    %p295 = scmp.ne.s32.totalorder %s286, %s287
    %p296 = scmp.eq.s32.totalorder %s24, 0
    %p297 = por %p295, %p296
    %p298 = scmp.ne.s32.totalorder %s286, %s287
    %p299 = scmp.eq.s32.totalorder %s25, 1
    %p300 = por %p298, %p299
    %p302 = scmp.ne.s32.totalorder %s287, %s301
    %p303 = scmp.eq.s32.totalorder %s25, 0
    %p304 = por %p302, %p303
    %s305 = ssub.s32 %s19, %s26
    %p306 = scmp.eq.s32.totalorder %s305, 0
    %s308 = sadd.s32 %s307, 1
    %s309 = scalar_select %p306, %s307, %s308
    %p312 = pneg %p306
    %p313 = scmp.eq.s32.totalorder %s19, 1
    %p314 = por %p312, %p313
    %p315 = scmp.ne.s32.totalorder %s307, %s310
    %p316 = scmp.eq.s32.totalorder %s19, 0
    %p317 = por %p315, %p316
    %p318 = scmp.ne.s32.totalorder %s307, %s310
    %p319 = scmp.eq.s32.totalorder %s24, 1
    %p320 = por %p318, %p319
    %p321 = scmp.ne.s32.totalorder %s310, %s311
    %p322 = scmp.eq.s32.totalorder %s24, 0
    %p323 = por %p321, %p322
    %p324 = scmp.ne.s32.totalorder %s310, %s311
    %p325 = scmp.eq.s32.totalorder %s25, 1
    %p326 = por %p324, %p325
    %p328 = scmp.ne.s32.totalorder %s311, %s327
    %p329 = scmp.eq.s32.totalorder %s25, 0
    %p330 = por %p328, %p329
    %p331 = scmp.le.s32.totalorder 1, %s19
    %p332 = scmp.lt.s32.totalorder %s19, 3
    %p333 = pnand %p331, %p332
    %p334 = pneg %p333
    // Predicated region
    $region9: #{wc_attention_forward.1} parent=5 // pred_check
      _
    $region10: #{wc_attention_forward.1} parent=5 // pred_check_branch
      %336 = sbr.rel (%p333) target = $region12
    $region11: #{wc_attention_forward.1} parent=5 // pred_region
      %s337 = ssub.s32 %s19, 1
      // Predicated region
      $region13: #{wc_attention_forward.1} parent=11 // pred_check
        %p338 = pneg %p66
      $region14: #{wc_attention_forward.1} parent=11 // pred_check_branch
        %340 = sbr.rel (%p338) target = $region16
      $region15: #{wc_attention_forward.1} parent=11 // pred_region
        _
      $region16: #{wc_attention_forward.1} parent=11 // pred_fallthru
        _
      // Predicated region
      $region17: #{wc_attention_forward.1} parent=11 // pred_check
        %p341 = pneg %p87
      $region18: #{wc_attention_forward.1} parent=11 // pred_check_branch
        %343 = sbr.rel (%p341) target = $region20
      $region19: #{wc_attention_forward.1} parent=11 // pred_region
        _
      $region20: #{wc_attention_forward.1} parent=11 // pred_fallthru
        _
      // Predicated region
      $region21: #{wc_attention_forward.1} parent=11 // pred_check
        %p344 = pneg %p108
      $region22: #{wc_attention_forward.1} parent=11 // pred_check_branch
        %346 = sbr.rel (%p344) target = $region24
      $region23: #{wc_attention_forward.1} parent=11 // pred_region
        _
      $region24: #{wc_attention_forward.1} parent=11 // pred_fallthru
        _
      // Predicated region
      $region25: #{wc_attention_forward.1} parent=11 // pred_check
        %p347 = pneg %p129
      $region26: #{wc_attention_forward.1} parent=11 // pred_check_branch
        %349 = sbr.rel (%p347) target = $region28
      $region27: #{wc_attention_forward.1} parent=11 // pred_region
        _
      $region28: #{wc_attention_forward.1} parent=11 // pred_fallthru
        _
      // Predicated region
      $region29: #{wc_attention_forward.1} parent=11 // pred_check
        %p350 = pneg %p150
      $region30: #{wc_attention_forward.1} parent=11 // pred_check_branch
        %352 = sbr.rel (%p350) target = $region32
      $region31: #{wc_attention_forward.1} parent=11 // pred_region
        _
      $region32: #{wc_attention_forward.1} parent=11 // pred_fallthru
        _
      // Predicated region
      $region33: #{wc_attention_forward.1} parent=11 // pred_check
        %p353 = pneg %p171
      $region34: #{wc_attention_forward.1} parent=11 // pred_check_branch
        %355 = sbr.rel (%p353) target = $region36
      $region35: #{wc_attention_forward.1} parent=11 // pred_region
        _
      $region36: #{wc_attention_forward.1} parent=11 // pred_fallthru
        _
      // Predicated region
      $region37: #{wc_attention_forward.1} parent=11 // pred_check
        %p356 = pneg %p192
      $region38: #{wc_attention_forward.1} parent=11 // pred_check_branch
        %358 = sbr.rel (%p356) target = $region40
      $region39: #{wc_attention_forward.1} parent=11 // pred_region
        _
      $region40: #{wc_attention_forward.1} parent=11 // pred_fallthru
        _
      // Predicated region
      $region41: #{wc_attention_forward.1} parent=11 // pred_check
        %p359 = pneg %p213
      $region42: #{wc_attention_forward.1} parent=11 // pred_check_branch
        %361 = sbr.rel (%p359) target = $region44
      $region43: #{wc_attention_forward.1} parent=11 // pred_region
        _
      $region44: #{wc_attention_forward.1} parent=11 // pred_fallthru
        _
      // Predicated region
      $region45: #{wc_attention_forward.1} parent=11 // pred_check
        %p362 = pneg %p234
      $region46: #{wc_attention_forward.1} parent=11 // pred_check_branch
        %364 = sbr.rel (%p362) target = $region48
      $region47: #{wc_attention_forward.1} parent=11 // pred_region
        _
      $region48: #{wc_attention_forward.1} parent=11 // pred_fallthru
        _
      // Predicated region
      $region49: #{wc_attention_forward.1} parent=11 // pred_check
        %p365 = pneg %p255
      $region50: #{wc_attention_forward.1} parent=11 // pred_check_branch
        %367 = sbr.rel (%p365) target = $region52
      $region51: #{wc_attention_forward.1} parent=11 // pred_region
        _
      $region52: #{wc_attention_forward.1} parent=11 // pred_fallthru
        _
      // Predicated region
      $region53: #{wc_attention_forward.1} parent=11 // pred_check
        %p368 = pneg %p276
      $region54: #{wc_attention_forward.1} parent=11 // pred_check_branch
        %370 = sbr.rel (%p368) target = $region56
      $region55: #{wc_attention_forward.1} parent=11 // pred_region
        _
      $region56: #{wc_attention_forward.1} parent=11 // pred_fallthru
        _
      // Predicated region
      $region57: #{wc_attention_forward.1} parent=11 // pred_check
        %p371 = pneg %p297
      $region58: #{wc_attention_forward.1} parent=11 // pred_check_branch
        %373 = sbr.rel (%p371) target = $region60
      $region59: #{wc_attention_forward.1} parent=11 // pred_region
        _
      $region60: #{wc_attention_forward.1} parent=11 // pred_fallthru
        _
    $region12: #{wc_attention_forward.1} parent=5 // pred_fallthru
      _
    %p374 = scmp.lt.s32.totalorder %s19, 2
    // Predicated region
    $region61: #{wc_attention_forward.1} parent=5 // pred_check
      %p375 = pneg %p374
    $region62: #{wc_attention_forward.1} parent=5 // pred_check_branch
      %377 = sbr.rel (%p375) target = $region64
    $region63: #{wc_attention_forward.1} parent=5 // pred_region
      // Predicated region
      $region65: #{wc_attention_forward.1} parent=63 // pred_check
        %p378 = pneg %p39
      $region66: #{wc_attention_forward.1} parent=63 // pred_check_branch
        %380 = sbr.rel (%p378) target = $region68
      $region67: #{wc_attention_forward.1} parent=63 // pred_region
        %p381 = scmp.lt.s32.totalorder %s19, 1
        %s382 = scalar_select %p381, %s19, 1
        %s383 = smul.addr %s382, 2
        %s384 = smul.addr %s383, 8
        %s385 = scalar_lea.vmem %s0, %s384
      $region68: #{wc_attention_forward.1} parent=63 // pred_fallthru
        _
    $region64: #{wc_attention_forward.1} parent=5 // pred_fallthru
      _
    %p386 = scmp.le.s32.totalorder 1, %s19
    %p387 = scmp.lt.s32.totalorder %s19, 3
    %p388 = pnand %p386, %p387
    %p389 = pneg %p388
    // Predicated region
    $region69: #{wc_attention_forward.1} parent=5 // pred_check
      _
    $region70: #{wc_attention_forward.1} parent=5 // pred_check_branch
      %391 = sbr.rel (%p388) target = $region72
    $region71: #{wc_attention_forward.1} parent=5 // pred_region
      %s392 = ssub.s32 %s19, 1
      %p393 = scmp.lt.s32.totalorder %s24, 1
      %s394 = scalar_select %p393, %s24, 1
      %s395 = smul.addr %s394, 2
      %s396 = smul.addr %s395, 8
      %s397 = scalar_lea.vmem %s0, %s396
      %p398 = pneg %p45
      %p399 = pneg %p42
      %p400 = pneg %p66
      %p401 = pneg %p63
      %p402 = pneg %p87
      %p403 = pneg %p84
      %p404 = pneg %p108
      %p405 = pneg %p105
      %p406 = pneg %p129
      %p407 = pneg %p126
      %p408 = pneg %p150
      %p409 = pneg %p147
      %p410 = pneg %p171
      %p411 = pneg %p168
      %p412 = pneg %p192
      %p413 = pneg %p189
      %p414 = pneg %p213
      %p415 = pneg %p210
      %p416 = pneg %p234
      %p417 = pneg %p231
      %p418 = pneg %p255
      %p419 = pneg %p252
      %p420 = pneg %p276
      %p421 = pneg %p273
      %p422 = pneg %p297
      %p423 = pneg %p294
      %p424 = pneg %p323
      %p425 = pneg %p320
      %p426 = scmp.lt.s32.totalorder %s24, 1
      %s427 = scalar_select %p426, %s24, 1
      %s428 = smul.addr %s427, 4
      %s429 = smul.addr %s428, 8
      %s430 = scalar_lea.vmem %s13, %s429
      %p431 = scmp.lt.s32.totalorder %s24, 1
      %s432 = scalar_select %p431, %s24, 1
      %s433 = smul.addr %s432, 2
      %s434 = smul.addr %s433, 8
      %s435 = scalar_lea.vmem %s0, %s434
      %p436 = scmp.lt.s32.totalorder %s24, 1
      %s437 = scalar_select %p436, %s24, 1
      %s438 = smul.addr %s437, 4
      %s439 = smul.addr %s438, 8
      %s440 = scalar_lea.vmem %s13, %s439
      %v441 = vld [vmem:[%s435] sm:$0xff]
      %v442 = vld [vmem:[%s435 + $0x8] sm:$0xff]
      %v443 = vld [vmem:[%s1] sm:$0x3]
      %v444 = vld [vmem:[%s2] sm:$0x3]
      %v445 = vld [vmem:[%s3] sm:$0x3]
      %v446 = vld [vmem:[%s4] sm:$0x3]
      %448 = vset.pattern.permute.xlu0 0
      %449 = vperm.xlu0 %448, %v446
      %v450 = vpop.permute.xlu0 %449
      %453 = vset.pattern.permute.xlu0 0
      %454 = vperm.xlu0 %453, %v445
      %v455 = vpop.permute.xlu0 %454
      %v457 = vlaneseq
      %v458 = vshrl.u32 %v457, 7
      %v459 = vsub.s32 0, %v458
      %v460 = vrot.slane %v441, %v459
      %v461 = vlaneseq
      %v462 = vshrl.u32 %v461, 7
      %v463 = vsub.s32 0, %v462
      %v464 = vrot.slane %v442, %v463
      %v465 = vmul.f32 %v455, %v460
      %v466 = vmul.f32 %v455, %v464
      %v467 = vadd.f32 %v450, %v465
      %v468 = vadd.f32 %v450, %v466
      %469 = vset.pattern.permute.xlu0 1
      %470 = vperm.xlu0 %469, %v445
      %v471 = vpop.permute.xlu0 %470
      %v473 = vlaneseq
      %v474 = vshrl.u32 %v473, 7
      %v475 = vsub.s32 1, %v474
      %v476 = vrot.slane %v441, %v475
      %v477 = vlaneseq
      %v478 = vshrl.u32 %v477, 7
      %v479 = vsub.s32 1, %v478
      %v480 = vrot.slane %v442, %v479
      %v481 = vmul.f32 %v471, %v476
      %v482 = vmul.f32 %v471, %v480
      %v483 = vadd.f32 %v467, %v481
      %v484 = vadd.f32 %v468, %v482
      %485 = vset.pattern.permute.xlu0 2
      %486 = vperm.xlu0 %485, %v445
      %v487 = vpop.permute.xlu0 %486
      %v489 = vlaneseq
      %v490 = vshrl.u32 %v489, 7
      %v491 = vsub.s32 2, %v490
      %v492 = vrot.slane %v441, %v491
      %v493 = vlaneseq
      %v494 = vshrl.u32 %v493, 7
      %v495 = vsub.s32 2, %v494
      %v496 = vrot.slane %v442, %v495
      %v497 = vmul.f32 %v487, %v492
      %v498 = vmul.f32 %v487, %v496
      %v499 = vadd.f32 %v483, %v497
      %v500 = vadd.f32 %v484, %v498
      %501 = vset.pattern.permute.xlu0 3
      %502 = vperm.xlu0 %501, %v445
      %v503 = vpop.permute.xlu0 %502
      %v505 = vlaneseq
      %v506 = vshrl.u32 %v505, 7
      %v507 = vsub.s32 3, %v506
      %v508 = vrot.slane %v441, %v507
      %v509 = vlaneseq
      %v510 = vshrl.u32 %v509, 7
      %v511 = vsub.s32 3, %v510
      %v512 = vrot.slane %v442, %v511
      %v513 = vmul.f32 %v503, %v508
      %v514 = vmul.f32 %v503, %v512
      %v515 = vadd.f32 %v499, %v513
      %v516 = vadd.f32 %v500, %v514
      %517 = vset.pattern.permute.xlu0 4
      %518 = vperm.xlu0 %517, %v445
      %v519 = vpop.permute.xlu0 %518
      %v521 = vlaneseq
      %v522 = vshrl.u32 %v521, 7
      %v523 = vsub.s32 4, %v522
      %v524 = vrot.slane %v441, %v523
      %v525 = vlaneseq
      %v526 = vshrl.u32 %v525, 7
      %v527 = vsub.s32 4, %v526
      %v528 = vrot.slane %v442, %v527
      %v529 = vmul.f32 %v519, %v524
      %v530 = vmul.f32 %v519, %v528
      %v531 = vadd.f32 %v515, %v529
      %v532 = vadd.f32 %v516, %v530
      %533 = vset.pattern.permute.xlu0 5
      %534 = vperm.xlu0 %533, %v445
      %v535 = vpop.permute.xlu0 %534
      %v537 = vlaneseq
      %v538 = vshrl.u32 %v537, 7
      %v539 = vsub.s32 5, %v538
      %v540 = vrot.slane %v441, %v539
      %v541 = vlaneseq
      %v542 = vshrl.u32 %v541, 7
      %v543 = vsub.s32 5, %v542
      %v544 = vrot.slane %v442, %v543
      %v545 = vmul.f32 %v535, %v540
      %v546 = vmul.f32 %v535, %v544
      %v547 = vadd.f32 %v531, %v545
      %v548 = vadd.f32 %v532, %v546
      %549 = vset.pattern.permute.xlu0 6
      %550 = vperm.xlu0 %549, %v445
      %v551 = vpop.permute.xlu0 %550
      %v553 = vlaneseq
      %v554 = vshrl.u32 %v553, 7
      %v555 = vsub.s32 6, %v554
      %v556 = vrot.slane %v441, %v555
      %v557 = vlaneseq
      %v558 = vshrl.u32 %v557, 7
      %v559 = vsub.s32 6, %v558
      %v560 = vrot.slane %v442, %v559
      %v561 = vmul.f32 %v551, %v556
      %v562 = vmul.f32 %v551, %v560
      %v563 = vadd.f32 %v547, %v561
      %v564 = vadd.f32 %v548, %v562
      %565 = vset.pattern.permute.xlu0 7
      %566 = vperm.xlu0 %565, %v445
      %v567 = vpop.permute.xlu0 %566
      %v569 = vlaneseq
      %v570 = vshrl.u32 %v569, 7
      %v571 = vsub.s32 7, %v570
      %v572 = vrot.slane %v441, %v571
      %v573 = vlaneseq
      %v574 = vshrl.u32 %v573, 7
      %v575 = vsub.s32 7, %v574
      %v576 = vrot.slane %v442, %v575
      %v577 = vmul.f32 %v567, %v572
      %v578 = vmul.f32 %v567, %v576
      %v579 = vadd.f32 %v563, %v577
      %v580 = vadd.f32 %v564, %v578
      %v581 = vmax.f32 %v579, 0.0
      %v582 = vmax.f32 %v580, 0.0
      %v583 = vld [vmem:[%s5] sm:$0xff]
      %v584 = vld [vmem:[%s6] sm:$0xff]
      %586 = vset.pattern.permute.xlu0 0
      %587 = vperm.xlu0 %586, %v584
      %v588 = vpop.permute.xlu0 %587
      %591 = vset.pattern.permute.xlu0 0
      %592 = vperm.xlu0 %591, %v583
      %v593 = vpop.permute.xlu0 %592
      %v595 = vlaneseq
      %v596 = vshrl.u32 %v595, 7
      %v597 = vsub.s32 0, %v596
      %v598 = vrot.slane %v581, %v597
      %v599 = vlaneseq
      %v600 = vshrl.u32 %v599, 7
      %v601 = vsub.s32 0, %v600
      %v602 = vrot.slane %v582, %v601
      %v603 = vmul.f32 %v593, %v598
      %v604 = vmul.f32 %v593, %v602
      %v605 = vadd.f32 %v588, %v603
      %v606 = vadd.f32 %v588, %v604
      %607 = vset.pattern.permute.xlu0 1
      %608 = vperm.xlu0 %607, %v583
      %v609 = vpop.permute.xlu0 %608
      %v611 = vlaneseq
      %v612 = vshrl.u32 %v611, 7
      %v613 = vsub.s32 1, %v612
      %v614 = vrot.slane %v581, %v613
      %v615 = vlaneseq
      %v616 = vshrl.u32 %v615, 7
      %v617 = vsub.s32 1, %v616
      %v618 = vrot.slane %v582, %v617
      %v619 = vmul.f32 %v609, %v614
      %v620 = vmul.f32 %v609, %v618
      %v621 = vadd.f32 %v605, %v619
      %v622 = vadd.f32 %v606, %v620
      %v623 = vxor.u32 %v621, 2147483648
      %v624 = vxor.u32 %v622, 2147483648
      %v625 = vmul.f32 %v623, 1.442695
      %v626 = vpow.pop %v625
      %v627 = vmul.f32 %v624, 1.442695
      %v628 = vpow.pop %v627
      %v629 = vadd.f32 %v626, 1.0
      %v630 = vadd.f32 %v628, 1.0
      %v631 = vrcp.pop %v629
      %v632 = vmul.f32 1.0, %v631
      %v633 = vrcp.pop %v630
      %v634 = vmul.f32 1.0, %v633
      %v635 = vmul.f32 %v441, %v632
      %v636 = vmul.f32 %v442, %v634
      %v637 = vld [vmem:[%s7] sm:$0x3]
      %v638 = vld [vmem:[%s7 + $0x2] sm:$0x3]
      %v639 = vld [vmem:[%s7 + $0x4] sm:$0x3]
      %v640 = vld [vmem:[%s7 + $0x6] sm:$0x3]
      %v641 = vld [vmem:[%s7 + $0x8] sm:$0x3]
      %v642 = vld [vmem:[%s7 + $0xa] sm:$0x3]
      %v643 = vld [vmem:[%s7 + $0xc] sm:$0x3]
      %v644 = vld [vmem:[%s7 + $0xe] sm:$0x3]
      %v645 = vld [vmem:[%s7 + $0x10] sm:$0x3]
      %v646 = vld [vmem:[%s8] sm:$0x3]
      %648 = vset.pattern.permute.xlu0 0
      %649 = vperm.xlu0 %648, %v646
      %v650 = vpop.permute.xlu0 %649
      %v653 = vlaneseq
      %v654 = vshrl.u32 %v653, 7
      %v655 = vsub.s32 0, %v654
      %v656 = vrot.slane %v443, %v655
      %v657 = vlaneseq
      %v658 = vshrl.u32 %v657, 7
      %v659 = vsub.s32 1, %v658
      %v660 = vrot.slane %v443, %v659
      %661 = vrot.lane.b32.xlu0 %v656, 111
      %v662 = vpop.permute.xlu0 %661
      %663 = vrot.lane.b32.xlu0 %v660, 111
      %v664 = vpop.permute.xlu0 %663
      %vm665 = vcmask 908288
      %v666 = vsel %vm665, %v662, %v664
      %v670 = vmul.f32 %v662, 0.0
      %v671 = vmul.f32 %v635, %v666
      %v672 = vmul.f32 %v636, %v664
      %674 = vset.pattern.permute.xlu0 0
      %675 = vperm.xlu0 %674, %v637
      %v676 = vpop.permute.xlu0 %675
      %v678 = vlaneseq
      %v679 = vshrl.u32 %v678, 7
      %v680 = vsub.s32 0, %v679
      %v681 = vrot.slane %v670, %v680
      %v682 = vlaneseq
      %v683 = vshrl.u32 %v682, 7
      %v684 = vsub.s32 0, %v683
      %v685 = vrot.slane %v671, %v684
      %v686 = vlaneseq
      %v687 = vshrl.u32 %v686, 7
      %v688 = vsub.s32 0, %v687
      %v689 = vrot.slane %v672, %v688
      %v690 = vmul.f32 %v676, %v681
      %v691 = vmul.f32 %v676, %v685
      %v692 = vmul.f32 %v676, %v689
      %v693 = vadd.f32 %v650, %v690
      %v694 = vadd.f32 %v650, %v691
      %v695 = vadd.f32 %v650, %v692
      %696 = vset.pattern.permute.xlu0 1
      %697 = vperm.xlu0 %696, %v637
      %v698 = vpop.permute.xlu0 %697
      %v700 = vlaneseq
      %v701 = vshrl.u32 %v700, 7
      %v702 = vsub.s32 1, %v701
      %v703 = vrot.slane %v670, %v702
      %v704 = vlaneseq
      %v705 = vshrl.u32 %v704, 7
      %v706 = vsub.s32 1, %v705
      %v707 = vrot.slane %v671, %v706
      %v708 = vlaneseq
      %v709 = vshrl.u32 %v708, 7
      %v710 = vsub.s32 1, %v709
      %v711 = vrot.slane %v672, %v710
      %v712 = vmul.f32 %v698, %v703
      %v713 = vmul.f32 %v698, %v707
      %v714 = vmul.f32 %v698, %v711
      %v715 = vadd.f32 %v693, %v712
      %v716 = vadd.f32 %v694, %v713
      %v717 = vadd.f32 %v695, %v714
      %718 = vset.pattern.permute.xlu0 2
      %719 = vperm.xlu0 %718, %v637
      %v720 = vpop.permute.xlu0 %719
      %v722 = vlaneseq
      %v723 = vshrl.u32 %v722, 7
      %v724 = vsub.s32 2, %v723
      %v725 = vrot.slane %v670, %v724
      %v726 = vlaneseq
      %v727 = vshrl.u32 %v726, 7
      %v728 = vsub.s32 2, %v727
      %v729 = vrot.slane %v671, %v728
      %v730 = vlaneseq
      %v731 = vshrl.u32 %v730, 7
      %v732 = vsub.s32 2, %v731
      %v733 = vrot.slane %v672, %v732
      %v734 = vmul.f32 %v720, %v725
      %v735 = vmul.f32 %v720, %v729
      %v736 = vmul.f32 %v720, %v733
      %v737 = vadd.f32 %v715, %v734
      %v738 = vadd.f32 %v716, %v735
      %v739 = vadd.f32 %v717, %v736
      %740 = vset.pattern.permute.xlu0 3
      %741 = vperm.xlu0 %740, %v637
      %v742 = vpop.permute.xlu0 %741
      %v744 = vlaneseq
      %v745 = vshrl.u32 %v744, 7
      %v746 = vsub.s32 3, %v745
      %v747 = vrot.slane %v670, %v746
      %v748 = vlaneseq
      %v749 = vshrl.u32 %v748, 7
      %v750 = vsub.s32 3, %v749
      %v751 = vrot.slane %v671, %v750
      %v752 = vlaneseq
      %v753 = vshrl.u32 %v752, 7
      %v754 = vsub.s32 3, %v753
      %v755 = vrot.slane %v672, %v754
      %v756 = vmul.f32 %v742, %v747
      %v757 = vmul.f32 %v742, %v751
      %v758 = vmul.f32 %v742, %v755
      %v759 = vadd.f32 %v737, %v756
      %v760 = vadd.f32 %v738, %v757
      %v761 = vadd.f32 %v739, %v758
      %762 = vset.pattern.permute.xlu0 4
      %763 = vperm.xlu0 %762, %v637
      %v764 = vpop.permute.xlu0 %763
      %v766 = vlaneseq
      %v767 = vshrl.u32 %v766, 7
      %v768 = vsub.s32 4, %v767
      %v769 = vrot.slane %v670, %v768
      %v770 = vlaneseq
      %v771 = vshrl.u32 %v770, 7
      %v772 = vsub.s32 4, %v771
      %v773 = vrot.slane %v671, %v772
      %v774 = vlaneseq
      %v775 = vshrl.u32 %v774, 7
      %v776 = vsub.s32 4, %v775
      %v777 = vrot.slane %v672, %v776
      %v778 = vmul.f32 %v764, %v769
      %v779 = vmul.f32 %v764, %v773
      %v780 = vmul.f32 %v764, %v777
      %v781 = vadd.f32 %v759, %v778
      %v782 = vadd.f32 %v760, %v779
      %v783 = vadd.f32 %v761, %v780
      %784 = vset.pattern.permute.xlu0 5
      %785 = vperm.xlu0 %784, %v637
      %v786 = vpop.permute.xlu0 %785
      %v788 = vlaneseq
      %v789 = vshrl.u32 %v788, 7
      %v790 = vsub.s32 5, %v789
      %v791 = vrot.slane %v670, %v790
      %v792 = vlaneseq
      %v793 = vshrl.u32 %v792, 7
      %v794 = vsub.s32 5, %v793
      %v795 = vrot.slane %v671, %v794
      %v796 = vlaneseq
      %v797 = vshrl.u32 %v796, 7
      %v798 = vsub.s32 5, %v797
      %v799 = vrot.slane %v672, %v798
      %v800 = vmul.f32 %v786, %v791
      %v801 = vmul.f32 %v786, %v795
      %v802 = vmul.f32 %v786, %v799
      %v803 = vadd.f32 %v781, %v800
      %v804 = vadd.f32 %v782, %v801
      %v805 = vadd.f32 %v783, %v802
      %806 = vset.pattern.permute.xlu0 6
      %807 = vperm.xlu0 %806, %v637
      %v808 = vpop.permute.xlu0 %807
      %v810 = vlaneseq
      %v811 = vshrl.u32 %v810, 7
      %v812 = vsub.s32 6, %v811
      %v813 = vrot.slane %v670, %v812
      %v814 = vlaneseq
      %v815 = vshrl.u32 %v814, 7
      %v816 = vsub.s32 6, %v815
      %v817 = vrot.slane %v671, %v816
      %v818 = vlaneseq
      %v819 = vshrl.u32 %v818, 7
      %v820 = vsub.s32 6, %v819
      %v821 = vrot.slane %v672, %v820
      %v822 = vmul.f32 %v808, %v813
      %v823 = vmul.f32 %v808, %v817
      %v824 = vmul.f32 %v808, %v821
      %v825 = vadd.f32 %v803, %v822
      %v826 = vadd.f32 %v804, %v823
      %v827 = vadd.f32 %v805, %v824
      %828 = vset.pattern.permute.xlu0 7
      %829 = vperm.xlu0 %828, %v637
      %v830 = vpop.permute.xlu0 %829
      %v832 = vlaneseq
      %v833 = vshrl.u32 %v832, 7
      %v834 = vsub.s32 7, %v833
      %v835 = vrot.slane %v670, %v834
      %v836 = vlaneseq
      %v837 = vshrl.u32 %v836, 7
      %v838 = vsub.s32 7, %v837
      %v839 = vrot.slane %v671, %v838
      %v840 = vlaneseq
      %v841 = vshrl.u32 %v840, 7
      %v842 = vsub.s32 7, %v841
      %v843 = vrot.slane %v672, %v842
      %v844 = vmul.f32 %v830, %v835
      %v845 = vmul.f32 %v830, %v839
      %v846 = vmul.f32 %v830, %v843
      %v847 = vadd.f32 %v825, %v844
      %v848 = vadd.f32 %v826, %v845
      %v849 = vadd.f32 %v827, %v846
      %851 = vset.pattern.permute.xlu0 0
      %852 = vperm.xlu0 %851, %v638
      %v853 = vpop.permute.xlu0 %852
      %v855 = vlaneseq
      %v856 = vshrl.u32 %v855, 7
      %v857 = vsub.s32 0, %v856
      %v858 = vlaneseq
      %v859 = vshrl.u32 %v858, 7
      %v860 = vsub.s32 0, %v859
      %v861 = vrot.slane %v635, %v860
      %v862 = vlaneseq
      %v863 = vshrl.u32 %v862, 7
      %v864 = vsub.s32 0, %v863
      %v865 = vrot.slane %v636, %v864
      %v866 = vmul.f32 %v853, 0.0
      %v867 = vmul.f32 %v853, %v861
      %v868 = vmul.f32 %v853, %v865
      %872 = vrot.lane.b32.xlu0 %v866, 127
      %v873 = vpop.permute.xlu0 %872
      %874 = vrot.lane.b32.xlu0 %v867, 127
      %v875 = vpop.permute.xlu0 %874
      %876 = vrot.lane.b32.xlu0 %v868, 127
      %v877 = vpop.permute.xlu0 %876
      %vm878 = vcmask 1039360
      %v879 = vsel %vm878, %v873, %v875
      %v880 = vsel %vm878, %v875, %v877
      %v884 = vadd.f32 %v847, %v879
      %v885 = vadd.f32 %v848, %v880
      %v886 = vadd.f32 %v849, %v877
      %887 = vset.pattern.permute.xlu0 1
      %888 = vperm.xlu0 %887, %v638
      %v889 = vpop.permute.xlu0 %888
      %v891 = vlaneseq
      %v892 = vshrl.u32 %v891, 7
      %v893 = vsub.s32 1, %v892
      %v894 = vlaneseq
      %v895 = vshrl.u32 %v894, 7
      %v896 = vsub.s32 1, %v895
      %v897 = vrot.slane %v635, %v896
      %v898 = vlaneseq
      %v899 = vshrl.u32 %v898, 7
      %v900 = vsub.s32 1, %v899
      %v901 = vrot.slane %v636, %v900
      %v902 = vmul.f32 %v889, 0.0
      %v903 = vmul.f32 %v889, %v897
      %v904 = vmul.f32 %v889, %v901
      %908 = vrot.lane.b32.xlu0 %v902, 127
      %v909 = vpop.permute.xlu0 %908
      %910 = vrot.lane.b32.xlu0 %v903, 127
      %v911 = vpop.permute.xlu0 %910
      %912 = vrot.lane.b32.xlu0 %v904, 127
      %v913 = vpop.permute.xlu0 %912
      %v914 = vsel %vm878, %v909, %v911
      %v915 = vsel %vm878, %v911, %v913
      %v919 = vadd.f32 %v884, %v914
      %v920 = vadd.f32 %v885, %v915
      %v921 = vadd.f32 %v886, %v913
      %922 = vset.pattern.permute.xlu0 2
      %923 = vperm.xlu0 %922, %v638
      %v924 = vpop.permute.xlu0 %923
      %v926 = vlaneseq
      %v927 = vshrl.u32 %v926, 7
      %v928 = vsub.s32 2, %v927
      %v929 = vlaneseq
      %v930 = vshrl.u32 %v929, 7
      %v931 = vsub.s32 2, %v930
      %v932 = vrot.slane %v635, %v931
      %v933 = vlaneseq
      %v934 = vshrl.u32 %v933, 7
      %v935 = vsub.s32 2, %v934
      %v936 = vrot.slane %v636, %v935
      %v937 = vmul.f32 %v924, 0.0
      %v938 = vmul.f32 %v924, %v932
      %v939 = vmul.f32 %v924, %v936
      %943 = vrot.lane.b32.xlu0 %v937, 127
      %v944 = vpop.permute.xlu0 %943
      %945 = vrot.lane.b32.xlu0 %v938, 127
      %v946 = vpop.permute.xlu0 %945
      %947 = vrot.lane.b32.xlu0 %v939, 127
      %v948 = vpop.permute.xlu0 %947
      %v949 = vsel %vm878, %v944, %v946
      %v950 = vsel %vm878, %v946, %v948
      %v954 = vadd.f32 %v919, %v949
      %v955 = vadd.f32 %v920, %v950
      %v956 = vadd.f32 %v921, %v948
      %957 = vset.pattern.permute.xlu0 3
      %958 = vperm.xlu0 %957, %v638
      %v959 = vpop.permute.xlu0 %958
      %v961 = vlaneseq
      %v962 = vshrl.u32 %v961, 7
      %v963 = vsub.s32 3, %v962
      %v964 = vlaneseq
      %v965 = vshrl.u32 %v964, 7
      %v966 = vsub.s32 3, %v965
      %v967 = vrot.slane %v635, %v966
      %v968 = vlaneseq
      %v969 = vshrl.u32 %v968, 7
      %v970 = vsub.s32 3, %v969
      %v971 = vrot.slane %v636, %v970
      %v972 = vmul.f32 %v959, 0.0
      %v973 = vmul.f32 %v959, %v967
      %v974 = vmul.f32 %v959, %v971
      %978 = vrot.lane.b32.xlu0 %v972, 127
      %v979 = vpop.permute.xlu0 %978
      %980 = vrot.lane.b32.xlu0 %v973, 127
      %v981 = vpop.permute.xlu0 %980
      %982 = vrot.lane.b32.xlu0 %v974, 127
      %v983 = vpop.permute.xlu0 %982
      %v984 = vsel %vm878, %v979, %v981
      %v985 = vsel %vm878, %v981, %v983
      %v989 = vadd.f32 %v954, %v984
      %v990 = vadd.f32 %v955, %v985
      %v991 = vadd.f32 %v956, %v983
      %992 = vset.pattern.permute.xlu0 4
      %993 = vperm.xlu0 %992, %v638
      %v994 = vpop.permute.xlu0 %993
      %v996 = vlaneseq
      %v997 = vshrl.u32 %v996, 7
      %v998 = vsub.s32 4, %v997
      %v999 = vlaneseq
      %v1000 = vshrl.u32 %v999, 7
      %v1001 = vsub.s32 4, %v1000
      %v1002 = vrot.slane %v635, %v1001
      %v1003 = vlaneseq
      %v1004 = vshrl.u32 %v1003, 7
      %v1005 = vsub.s32 4, %v1004
      %v1006 = vrot.slane %v636, %v1005
      %v1007 = vmul.f32 %v994, 0.0
      %v1008 = vmul.f32 %v994, %v1002
      %v1009 = vmul.f32 %v994, %v1006
      %1013 = vrot.lane.b32.xlu0 %v1007, 127
      %v1014 = vpop.permute.xlu0 %1013
      %1015 = vrot.lane.b32.xlu0 %v1008, 127
      %v1016 = vpop.permute.xlu0 %1015
      %1017 = vrot.lane.b32.xlu0 %v1009, 127
      %v1018 = vpop.permute.xlu0 %1017
      %v1019 = vsel %vm878, %v1014, %v1016
      %v1020 = vsel %vm878, %v1016, %v1018
      %v1024 = vadd.f32 %v989, %v1019
      %v1025 = vadd.f32 %v990, %v1020
      %v1026 = vadd.f32 %v991, %v1018
      %1027 = vset.pattern.permute.xlu0 5
      %1028 = vperm.xlu0 %1027, %v638
      %v1029 = vpop.permute.xlu0 %1028
      %v1031 = vlaneseq
      %v1032 = vshrl.u32 %v1031, 7
      %v1033 = vsub.s32 5, %v1032
      %v1034 = vlaneseq
      %v1035 = vshrl.u32 %v1034, 7
      %v1036 = vsub.s32 5, %v1035
      %v1037 = vrot.slane %v635, %v1036
      %v1038 = vlaneseq
      %v1039 = vshrl.u32 %v1038, 7
      %v1040 = vsub.s32 5, %v1039
      %v1041 = vrot.slane %v636, %v1040
      %v1042 = vmul.f32 %v1029, 0.0
      %v1043 = vmul.f32 %v1029, %v1037
      %v1044 = vmul.f32 %v1029, %v1041
      %1048 = vrot.lane.b32.xlu0 %v1042, 127
      %v1049 = vpop.permute.xlu0 %1048
      %1050 = vrot.lane.b32.xlu0 %v1043, 127
      %v1051 = vpop.permute.xlu0 %1050
      %1052 = vrot.lane.b32.xlu0 %v1044, 127
      %v1053 = vpop.permute.xlu0 %1052
      %v1054 = vsel %vm878, %v1049, %v1051
      %v1055 = vsel %vm878, %v1051, %v1053
      %v1059 = vadd.f32 %v1024, %v1054
      %v1060 = vadd.f32 %v1025, %v1055
      %v1061 = vadd.f32 %v1026, %v1053
      %1062 = vset.pattern.permute.xlu0 6
      %1063 = vperm.xlu0 %1062, %v638
      %v1064 = vpop.permute.xlu0 %1063
      %v1066 = vlaneseq
      %v1067 = vshrl.u32 %v1066, 7
      %v1068 = vsub.s32 6, %v1067
      %v1069 = vlaneseq
      %v1070 = vshrl.u32 %v1069, 7
      %v1071 = vsub.s32 6, %v1070
      %v1072 = vrot.slane %v635, %v1071
      %v1073 = vlaneseq
      %v1074 = vshrl.u32 %v1073, 7
      %v1075 = vsub.s32 6, %v1074
      %v1076 = vrot.slane %v636, %v1075
      %v1077 = vmul.f32 %v1064, 0.0
      %v1078 = vmul.f32 %v1064, %v1072
      %v1079 = vmul.f32 %v1064, %v1076
      %1083 = vrot.lane.b32.xlu0 %v1077, 127
      %v1084 = vpop.permute.xlu0 %1083
      %1085 = vrot.lane.b32.xlu0 %v1078, 127
      %v1086 = vpop.permute.xlu0 %1085
      %1087 = vrot.lane.b32.xlu0 %v1079, 127
      %v1088 = vpop.permute.xlu0 %1087
      %v1089 = vsel %vm878, %v1084, %v1086
      %v1090 = vsel %vm878, %v1086, %v1088
      %v1094 = vadd.f32 %v1059, %v1089
      %v1095 = vadd.f32 %v1060, %v1090
      %v1096 = vadd.f32 %v1061, %v1088
      %1097 = vset.pattern.permute.xlu0 7
      %1098 = vperm.xlu0 %1097, %v638
      %v1099 = vpop.permute.xlu0 %1098
      %v1101 = vlaneseq
      %v1102 = vshrl.u32 %v1101, 7
      %v1103 = vsub.s32 7, %v1102
      %v1104 = vlaneseq
      %v1105 = vshrl.u32 %v1104, 7
      %v1106 = vsub.s32 7, %v1105
      %v1107 = vrot.slane %v635, %v1106
      %v1108 = vlaneseq
      %v1109 = vshrl.u32 %v1108, 7
      %v1110 = vsub.s32 7, %v1109
      %v1111 = vrot.slane %v636, %v1110
      %v1112 = vmul.f32 %v1099, 0.0
      %v1113 = vmul.f32 %v1099, %v1107
      %v1114 = vmul.f32 %v1099, %v1111
      %1118 = vrot.lane.b32.xlu0 %v1112, 127
      %v1119 = vpop.permute.xlu0 %1118
      %1120 = vrot.lane.b32.xlu0 %v1113, 127
      %v1121 = vpop.permute.xlu0 %1120
      %1122 = vrot.lane.b32.xlu0 %v1114, 127
      %v1123 = vpop.permute.xlu0 %1122
      %v1124 = vsel %vm878, %v1119, %v1121
      %v1125 = vsel %vm878, %v1121, %v1123
      %v1129 = vadd.f32 %v1094, %v1124
      %v1130 = vadd.f32 %v1095, %v1125
      %v1131 = vadd.f32 %v1096, %v1123
      %v1133 = vlaneseq
      %v1134 = vshrl.u32 %v1133, 7
      %v1135 = vsub.s32 0, %v1134
      %v1136 = vrot.slane %v444, %v1135
      %v1137 = vlaneseq
      %v1138 = vshrl.u32 %v1137, 7
      %v1139 = vsub.s32 1, %v1138
      %v1140 = vrot.slane %v444, %v1139
      %1141 = vrot.lane.b32.xlu0 %v1136, 113
      %v1142 = vpop.permute.xlu0 %1141
      %1143 = vrot.lane.b32.xlu0 %v1140, 113
      %v1144 = vpop.permute.xlu0 %1143
      %vm1145 = vcmask 924672
      %v1146 = vsel %vm1145, %v1142, %v1144
      %v1150 = vmul.f32 %v1142, 0.0
      %v1151 = vmul.f32 %v635, %v1146
      %v1152 = vmul.f32 %v636, %v1144
      %1154 = vset.pattern.permute.xlu0 0
      %1155 = vperm.xlu0 %1154, %v639
      %v1156 = vpop.permute.xlu0 %1155
      %v1158 = vlaneseq
      %v1159 = vshrl.u32 %v1158, 7
      %v1160 = vsub.s32 0, %v1159
      %v1161 = vrot.slane %v1150, %v1160
      %v1162 = vlaneseq
      %v1163 = vshrl.u32 %v1162, 7
      %v1164 = vsub.s32 0, %v1163
      %v1165 = vrot.slane %v1151, %v1164
      %v1166 = vlaneseq
      %v1167 = vshrl.u32 %v1166, 7
      %v1168 = vsub.s32 0, %v1167
      %v1169 = vrot.slane %v1152, %v1168
      %v1170 = vmul.f32 %v1156, %v1161
      %v1171 = vmul.f32 %v1156, %v1165
      %v1172 = vmul.f32 %v1156, %v1169
      %1176 = vrot.lane.b32.xlu0 %v1170, 126
      %v1177 = vpop.permute.xlu0 %1176
      %1178 = vrot.lane.b32.xlu0 %v1171, 126
      %v1179 = vpop.permute.xlu0 %1178
      %1180 = vrot.lane.b32.xlu0 %v1172, 126
      %v1181 = vpop.permute.xlu0 %1180
      %vm1182 = vcmask 1031168
      %v1183 = vsel %vm1182, %v1177, %v1179
      %v1184 = vsel %vm1182, %v1179, %v1181
      %v1188 = vadd.f32 %v1129, %v1183
      %v1189 = vadd.f32 %v1130, %v1184
      %v1190 = vadd.f32 %v1131, %v1181
      %1191 = vset.pattern.permute.xlu0 1
      %1192 = vperm.xlu0 %1191, %v639
      %v1193 = vpop.permute.xlu0 %1192
      %v1195 = vlaneseq
      %v1196 = vshrl.u32 %v1195, 7
      %v1197 = vsub.s32 1, %v1196
      %v1198 = vrot.slane %v1150, %v1197
      %v1199 = vlaneseq
      %v1200 = vshrl.u32 %v1199, 7
      %v1201 = vsub.s32 1, %v1200
      %v1202 = vrot.slane %v1151, %v1201
      %v1203 = vlaneseq
      %v1204 = vshrl.u32 %v1203, 7
      %v1205 = vsub.s32 1, %v1204
      %v1206 = vrot.slane %v1152, %v1205
      %v1207 = vmul.f32 %v1193, %v1198
      %v1208 = vmul.f32 %v1193, %v1202
      %v1209 = vmul.f32 %v1193, %v1206
      %1213 = vrot.lane.b32.xlu0 %v1207, 126
      %v1214 = vpop.permute.xlu0 %1213
      %1215 = vrot.lane.b32.xlu0 %v1208, 126
      %v1216 = vpop.permute.xlu0 %1215
      %1217 = vrot.lane.b32.xlu0 %v1209, 126
      %v1218 = vpop.permute.xlu0 %1217
      %v1219 = vsel %vm1182, %v1214, %v1216
      %v1220 = vsel %vm1182, %v1216, %v1218
      %v1224 = vadd.f32 %v1188, %v1219
      %v1225 = vadd.f32 %v1189, %v1220
      %v1226 = vadd.f32 %v1190, %v1218
      %1227 = vset.pattern.permute.xlu0 2
      %1228 = vperm.xlu0 %1227, %v639
      %v1229 = vpop.permute.xlu0 %1228
      %v1231 = vlaneseq
      %v1232 = vshrl.u32 %v1231, 7
      %v1233 = vsub.s32 2, %v1232
      %v1234 = vrot.slane %v1150, %v1233
      %v1235 = vlaneseq
      %v1236 = vshrl.u32 %v1235, 7
      %v1237 = vsub.s32 2, %v1236
      %v1238 = vrot.slane %v1151, %v1237
      %v1239 = vlaneseq
      %v1240 = vshrl.u32 %v1239, 7
      %v1241 = vsub.s32 2, %v1240
      %v1242 = vrot.slane %v1152, %v1241
      %v1243 = vmul.f32 %v1229, %v1234
      %v1244 = vmul.f32 %v1229, %v1238
      %v1245 = vmul.f32 %v1229, %v1242
      %1249 = vrot.lane.b32.xlu0 %v1243, 126
      %v1250 = vpop.permute.xlu0 %1249
      %1251 = vrot.lane.b32.xlu0 %v1244, 126
      %v1252 = vpop.permute.xlu0 %1251
      %1253 = vrot.lane.b32.xlu0 %v1245, 126
      %v1254 = vpop.permute.xlu0 %1253
      %v1255 = vsel %vm1182, %v1250, %v1252
      %v1256 = vsel %vm1182, %v1252, %v1254
      %v1260 = vadd.f32 %v1224, %v1255
      %v1261 = vadd.f32 %v1225, %v1256
      %v1262 = vadd.f32 %v1226, %v1254
      %1263 = vset.pattern.permute.xlu0 3
      %1264 = vperm.xlu0 %1263, %v639
      %v1265 = vpop.permute.xlu0 %1264
      %v1267 = vlaneseq
      %v1268 = vshrl.u32 %v1267, 7
      %v1269 = vsub.s32 3, %v1268
      %v1270 = vrot.slane %v1150, %v1269
      %v1271 = vlaneseq
      %v1272 = vshrl.u32 %v1271, 7
      %v1273 = vsub.s32 3, %v1272
      %v1274 = vrot.slane %v1151, %v1273
      %v1275 = vlaneseq
      %v1276 = vshrl.u32 %v1275, 7
      %v1277 = vsub.s32 3, %v1276
      %v1278 = vrot.slane %v1152, %v1277
      %v1279 = vmul.f32 %v1265, %v1270
      %v1280 = vmul.f32 %v1265, %v1274
      %v1281 = vmul.f32 %v1265, %v1278
      %1285 = vrot.lane.b32.xlu0 %v1279, 126
      %v1286 = vpop.permute.xlu0 %1285
      %1287 = vrot.lane.b32.xlu0 %v1280, 126
      %v1288 = vpop.permute.xlu0 %1287
      %1289 = vrot.lane.b32.xlu0 %v1281, 126
      %v1290 = vpop.permute.xlu0 %1289
      %v1291 = vsel %vm1182, %v1286, %v1288
      %v1292 = vsel %vm1182, %v1288, %v1290
      %v1296 = vadd.f32 %v1260, %v1291
      %v1297 = vadd.f32 %v1261, %v1292
      %v1298 = vadd.f32 %v1262, %v1290
      %1299 = vset.pattern.permute.xlu0 4
      %1300 = vperm.xlu0 %1299, %v639
      %v1301 = vpop.permute.xlu0 %1300
      %v1303 = vlaneseq
      %v1304 = vshrl.u32 %v1303, 7
      %v1305 = vsub.s32 4, %v1304
      %v1306 = vrot.slane %v1150, %v1305
      %v1307 = vlaneseq
      %v1308 = vshrl.u32 %v1307, 7
      %v1309 = vsub.s32 4, %v1308
      %v1310 = vrot.slane %v1151, %v1309
      %v1311 = vlaneseq
      %v1312 = vshrl.u32 %v1311, 7
      %v1313 = vsub.s32 4, %v1312
      %v1314 = vrot.slane %v1152, %v1313
      %v1315 = vmul.f32 %v1301, %v1306
      %v1316 = vmul.f32 %v1301, %v1310
      %v1317 = vmul.f32 %v1301, %v1314
      %1321 = vrot.lane.b32.xlu0 %v1315, 126
      %v1322 = vpop.permute.xlu0 %1321
      %1323 = vrot.lane.b32.xlu0 %v1316, 126
      %v1324 = vpop.permute.xlu0 %1323
      %1325 = vrot.lane.b32.xlu0 %v1317, 126
      %v1326 = vpop.permute.xlu0 %1325
      %v1327 = vsel %vm1182, %v1322, %v1324
      %v1328 = vsel %vm1182, %v1324, %v1326
      %v1332 = vadd.f32 %v1296, %v1327
      %v1333 = vadd.f32 %v1297, %v1328
      %v1334 = vadd.f32 %v1298, %v1326
      %1335 = vset.pattern.permute.xlu0 5
      %1336 = vperm.xlu0 %1335, %v639
      %v1337 = vpop.permute.xlu0 %1336
      %v1339 = vlaneseq
      %v1340 = vshrl.u32 %v1339, 7
      %v1341 = vsub.s32 5, %v1340
      %v1342 = vrot.slane %v1150, %v1341
      %v1343 = vlaneseq
      %v1344 = vshrl.u32 %v1343, 7
      %v1345 = vsub.s32 5, %v1344
      %v1346 = vrot.slane %v1151, %v1345
      %v1347 = vlaneseq
      %v1348 = vshrl.u32 %v1347, 7
      %v1349 = vsub.s32 5, %v1348
      %v1350 = vrot.slane %v1152, %v1349
      %v1351 = vmul.f32 %v1337, %v1342
      %v1352 = vmul.f32 %v1337, %v1346
      %v1353 = vmul.f32 %v1337, %v1350
      %1357 = vrot.lane.b32.xlu0 %v1351, 126
      %v1358 = vpop.permute.xlu0 %1357
      %1359 = vrot.lane.b32.xlu0 %v1352, 126
      %v1360 = vpop.permute.xlu0 %1359
      %1361 = vrot.lane.b32.xlu0 %v1353, 126
      %v1362 = vpop.permute.xlu0 %1361
      %v1363 = vsel %vm1182, %v1358, %v1360
      %v1364 = vsel %vm1182, %v1360, %v1362
      %v1368 = vadd.f32 %v1332, %v1363
      %v1369 = vadd.f32 %v1333, %v1364
      %v1370 = vadd.f32 %v1334, %v1362
      %1371 = vset.pattern.permute.xlu0 6
      %1372 = vperm.xlu0 %1371, %v639
      %v1373 = vpop.permute.xlu0 %1372
      %v1375 = vlaneseq
      %v1376 = vshrl.u32 %v1375, 7
      %v1377 = vsub.s32 6, %v1376
      %v1378 = vrot.slane %v1150, %v1377
      %v1379 = vlaneseq
      %v1380 = vshrl.u32 %v1379, 7
      %v1381 = vsub.s32 6, %v1380
      %v1382 = vrot.slane %v1151, %v1381
      %v1383 = vlaneseq
      %v1384 = vshrl.u32 %v1383, 7
      %v1385 = vsub.s32 6, %v1384
      %v1386 = vrot.slane %v1152, %v1385
      %v1387 = vmul.f32 %v1373, %v1378
      %v1388 = vmul.f32 %v1373, %v1382
      %v1389 = vmul.f32 %v1373, %v1386
      %1393 = vrot.lane.b32.xlu0 %v1387, 126
      %v1394 = vpop.permute.xlu0 %1393
      %1395 = vrot.lane.b32.xlu0 %v1388, 126
      %v1396 = vpop.permute.xlu0 %1395
      %1397 = vrot.lane.b32.xlu0 %v1389, 126
      %v1398 = vpop.permute.xlu0 %1397
      %v1399 = vsel %vm1182, %v1394, %v1396
      %v1400 = vsel %vm1182, %v1396, %v1398
      %v1404 = vadd.f32 %v1368, %v1399
      %v1405 = vadd.f32 %v1369, %v1400
      %v1406 = vadd.f32 %v1370, %v1398
      %1407 = vset.pattern.permute.xlu0 7
      %1408 = vperm.xlu0 %1407, %v639
      %v1409 = vpop.permute.xlu0 %1408
      %v1411 = vlaneseq
      %v1412 = vshrl.u32 %v1411, 7
      %v1413 = vsub.s32 7, %v1412
      %v1414 = vrot.slane %v1150, %v1413
      %v1415 = vlaneseq
      %v1416 = vshrl.u32 %v1415, 7
      %v1417 = vsub.s32 7, %v1416
      %v1418 = vrot.slane %v1151, %v1417
      %v1419 = vlaneseq
      %v1420 = vshrl.u32 %v1419, 7
      %v1421 = vsub.s32 7, %v1420
      %v1422 = vrot.slane %v1152, %v1421
      %v1423 = vmul.f32 %v1409, %v1414
      %v1424 = vmul.f32 %v1409, %v1418
      %v1425 = vmul.f32 %v1409, %v1422
      %1429 = vrot.lane.b32.xlu0 %v1423, 126
      %v1430 = vpop.permute.xlu0 %1429
      %1431 = vrot.lane.b32.xlu0 %v1424, 126
      %v1432 = vpop.permute.xlu0 %1431
      %1433 = vrot.lane.b32.xlu0 %v1425, 126
      %v1434 = vpop.permute.xlu0 %1433
      %v1435 = vsel %vm1182, %v1430, %v1432
      %v1436 = vsel %vm1182, %v1432, %v1434
      %v1440 = vadd.f32 %v1404, %v1435
      %v1441 = vadd.f32 %v1405, %v1436
      %v1442 = vadd.f32 %v1406, %v1434
      %1443 = vrot.lane.b32.xlu0 %v656, 127
      %v1444 = vpop.permute.xlu0 %1443
      %1445 = vrot.lane.b32.xlu0 %v660, 127
      %v1446 = vpop.permute.xlu0 %1445
      %v1447 = vsel %vm878, %v1444, %v1446
      %v1451 = vmul.f32 %v1444, 0.0
      %v1452 = vmul.f32 %v635, %v1447
      %v1453 = vmul.f32 %v636, %v1446
      %1455 = vset.pattern.permute.xlu0 0
      %1456 = vperm.xlu0 %1455, %v640
      %v1457 = vpop.permute.xlu0 %1456
      %v1459 = vlaneseq
      %v1460 = vshrl.u32 %v1459, 7
      %v1461 = vsub.s32 0, %v1460
      %v1462 = vrot.slane %v1451, %v1461
      %v1463 = vlaneseq
      %v1464 = vshrl.u32 %v1463, 7
      %v1465 = vsub.s32 0, %v1464
      %v1466 = vrot.slane %v1452, %v1465
      %v1467 = vlaneseq
      %v1468 = vshrl.u32 %v1467, 7
      %v1469 = vsub.s32 0, %v1468
      %v1470 = vrot.slane %v1453, %v1469
      %v1471 = vmul.f32 %v1457, %v1462
      %v1472 = vmul.f32 %v1457, %v1466
      %v1473 = vmul.f32 %v1457, %v1470
      %1477 = vrot.lane.b32.xlu0 %v1471, 112
      %v1478 = vpop.permute.xlu0 %1477
      %1479 = vrot.lane.b32.xlu0 %v1472, 112
      %v1480 = vpop.permute.xlu0 %1479
      %1481 = vrot.lane.b32.xlu0 %v1473, 112
      %v1482 = vpop.permute.xlu0 %1481
      %vm1483 = vcmask 916480
      %v1484 = vsel %vm1483, %v1478, %v1480
      %v1485 = vsel %vm1483, %v1480, %v1482
      %v1489 = vadd.f32 %v1440, %v1484
      %v1490 = vadd.f32 %v1441, %v1485
      %v1491 = vadd.f32 %v1442, %v1482
      %1492 = vset.pattern.permute.xlu0 1
      %1493 = vperm.xlu0 %1492, %v640
      %v1494 = vpop.permute.xlu0 %1493
      %v1496 = vlaneseq
      %v1497 = vshrl.u32 %v1496, 7
      %v1498 = vsub.s32 1, %v1497
      %v1499 = vrot.slane %v1451, %v1498
      %v1500 = vlaneseq
      %v1501 = vshrl.u32 %v1500, 7
      %v1502 = vsub.s32 1, %v1501
      %v1503 = vrot.slane %v1452, %v1502
      %v1504 = vlaneseq
      %v1505 = vshrl.u32 %v1504, 7
      %v1506 = vsub.s32 1, %v1505
      %v1507 = vrot.slane %v1453, %v1506
      %v1508 = vmul.f32 %v1494, %v1499
      %v1509 = vmul.f32 %v1494, %v1503
      %v1510 = vmul.f32 %v1494, %v1507
      %1514 = vrot.lane.b32.xlu0 %v1508, 112
      %v1515 = vpop.permute.xlu0 %1514
      %1516 = vrot.lane.b32.xlu0 %v1509, 112
      %v1517 = vpop.permute.xlu0 %1516
      %1518 = vrot.lane.b32.xlu0 %v1510, 112
      %v1519 = vpop.permute.xlu0 %1518
      %v1520 = vsel %vm1483, %v1515, %v1517
      %v1521 = vsel %vm1483, %v1517, %v1519
      %v1525 = vadd.f32 %v1489, %v1520
      %v1526 = vadd.f32 %v1490, %v1521
      %v1527 = vadd.f32 %v1491, %v1519
      %1528 = vset.pattern.permute.xlu0 2
      %1529 = vperm.xlu0 %1528, %v640
      %v1530 = vpop.permute.xlu0 %1529
      %v1532 = vlaneseq
      %v1533 = vshrl.u32 %v1532, 7
      %v1534 = vsub.s32 2, %v1533
      %v1535 = vrot.slane %v1451, %v1534
      %v1536 = vlaneseq
      %v1537 = vshrl.u32 %v1536, 7
      %v1538 = vsub.s32 2, %v1537
      %v1539 = vrot.slane %v1452, %v1538
      %v1540 = vlaneseq
      %v1541 = vshrl.u32 %v1540, 7
      %v1542 = vsub.s32 2, %v1541
      %v1543 = vrot.slane %v1453, %v1542
      %v1544 = vmul.f32 %v1530, %v1535
      %v1545 = vmul.f32 %v1530, %v1539
      %v1546 = vmul.f32 %v1530, %v1543
      %1550 = vrot.lane.b32.xlu0 %v1544, 112
      %v1551 = vpop.permute.xlu0 %1550
      %1552 = vrot.lane.b32.xlu0 %v1545, 112
      %v1553 = vpop.permute.xlu0 %1552
      %1554 = vrot.lane.b32.xlu0 %v1546, 112
      %v1555 = vpop.permute.xlu0 %1554
      %v1556 = vsel %vm1483, %v1551, %v1553
      %v1557 = vsel %vm1483, %v1553, %v1555
      %v1561 = vadd.f32 %v1525, %v1556
      %v1562 = vadd.f32 %v1526, %v1557
      %v1563 = vadd.f32 %v1527, %v1555
      %1564 = vset.pattern.permute.xlu0 3
      %1565 = vperm.xlu0 %1564, %v640
      %v1566 = vpop.permute.xlu0 %1565
      %v1568 = vlaneseq
      %v1569 = vshrl.u32 %v1568, 7
      %v1570 = vsub.s32 3, %v1569
      %v1571 = vrot.slane %v1451, %v1570
      %v1572 = vlaneseq
      %v1573 = vshrl.u32 %v1572, 7
      %v1574 = vsub.s32 3, %v1573
      %v1575 = vrot.slane %v1452, %v1574
      %v1576 = vlaneseq
      %v1577 = vshrl.u32 %v1576, 7
      %v1578 = vsub.s32 3, %v1577
      %v1579 = vrot.slane %v1453, %v1578
      %v1580 = vmul.f32 %v1566, %v1571
      %v1581 = vmul.f32 %v1566, %v1575
      %v1582 = vmul.f32 %v1566, %v1579
      %1586 = vrot.lane.b32.xlu0 %v1580, 112
      %v1587 = vpop.permute.xlu0 %1586
      %1588 = vrot.lane.b32.xlu0 %v1581, 112
      %v1589 = vpop.permute.xlu0 %1588
      %1590 = vrot.lane.b32.xlu0 %v1582, 112
      %v1591 = vpop.permute.xlu0 %1590
      %v1592 = vsel %vm1483, %v1587, %v1589
      %v1593 = vsel %vm1483, %v1589, %v1591
      %v1597 = vadd.f32 %v1561, %v1592
      %v1598 = vadd.f32 %v1562, %v1593
      %v1599 = vadd.f32 %v1563, %v1591
      %1600 = vset.pattern.permute.xlu0 4
      %1601 = vperm.xlu0 %1600, %v640
      %v1602 = vpop.permute.xlu0 %1601
      %v1604 = vlaneseq
      %v1605 = vshrl.u32 %v1604, 7
      %v1606 = vsub.s32 4, %v1605
      %v1607 = vrot.slane %v1451, %v1606
      %v1608 = vlaneseq
      %v1609 = vshrl.u32 %v1608, 7
      %v1610 = vsub.s32 4, %v1609
      %v1611 = vrot.slane %v1452, %v1610
      %v1612 = vlaneseq
      %v1613 = vshrl.u32 %v1612, 7
      %v1614 = vsub.s32 4, %v1613
      %v1615 = vrot.slane %v1453, %v1614
      %v1616 = vmul.f32 %v1602, %v1607
      %v1617 = vmul.f32 %v1602, %v1611
      %v1618 = vmul.f32 %v1602, %v1615
      %1622 = vrot.lane.b32.xlu0 %v1616, 112
      %v1623 = vpop.permute.xlu0 %1622
      %1624 = vrot.lane.b32.xlu0 %v1617, 112
      %v1625 = vpop.permute.xlu0 %1624
      %1626 = vrot.lane.b32.xlu0 %v1618, 112
      %v1627 = vpop.permute.xlu0 %1626
      %v1628 = vsel %vm1483, %v1623, %v1625
      %v1629 = vsel %vm1483, %v1625, %v1627
      %v1633 = vadd.f32 %v1597, %v1628
      %v1634 = vadd.f32 %v1598, %v1629
      %v1635 = vadd.f32 %v1599, %v1627
      %1636 = vset.pattern.permute.xlu0 5
      %1637 = vperm.xlu0 %1636, %v640
      %v1638 = vpop.permute.xlu0 %1637
      %v1640 = vlaneseq
      %v1641 = vshrl.u32 %v1640, 7
      %v1642 = vsub.s32 5, %v1641
      %v1643 = vrot.slane %v1451, %v1642
      %v1644 = vlaneseq
      %v1645 = vshrl.u32 %v1644, 7
      %v1646 = vsub.s32 5, %v1645
      %v1647 = vrot.slane %v1452, %v1646
      %v1648 = vlaneseq
      %v1649 = vshrl.u32 %v1648, 7
      %v1650 = vsub.s32 5, %v1649
      %v1651 = vrot.slane %v1453, %v1650
      %v1652 = vmul.f32 %v1638, %v1643
      %v1653 = vmul.f32 %v1638, %v1647
      %v1654 = vmul.f32 %v1638, %v1651
      %1658 = vrot.lane.b32.xlu0 %v1652, 112
      %v1659 = vpop.permute.xlu0 %1658
      %1660 = vrot.lane.b32.xlu0 %v1653, 112
      %v1661 = vpop.permute.xlu0 %1660
      %1662 = vrot.lane.b32.xlu0 %v1654, 112
      %v1663 = vpop.permute.xlu0 %1662
      %v1664 = vsel %vm1483, %v1659, %v1661
      %v1665 = vsel %vm1483, %v1661, %v1663
      %v1669 = vadd.f32 %v1633, %v1664
      %v1670 = vadd.f32 %v1634, %v1665
      %v1671 = vadd.f32 %v1635, %v1663
      %1672 = vset.pattern.permute.xlu0 6
      %1673 = vperm.xlu0 %1672, %v640
      %v1674 = vpop.permute.xlu0 %1673
      %v1676 = vlaneseq
      %v1677 = vshrl.u32 %v1676, 7
      %v1678 = vsub.s32 6, %v1677
      %v1679 = vrot.slane %v1451, %v1678
      %v1680 = vlaneseq
      %v1681 = vshrl.u32 %v1680, 7
      %v1682 = vsub.s32 6, %v1681
      %v1683 = vrot.slane %v1452, %v1682
      %v1684 = vlaneseq
      %v1685 = vshrl.u32 %v1684, 7
      %v1686 = vsub.s32 6, %v1685
      %v1687 = vrot.slane %v1453, %v1686
      %v1688 = vmul.f32 %v1674, %v1679
      %v1689 = vmul.f32 %v1674, %v1683
      %v1690 = vmul.f32 %v1674, %v1687
      %1694 = vrot.lane.b32.xlu0 %v1688, 112
      %v1695 = vpop.permute.xlu0 %1694
      %1696 = vrot.lane.b32.xlu0 %v1689, 112
      %v1697 = vpop.permute.xlu0 %1696
      %1698 = vrot.lane.b32.xlu0 %v1690, 112
      %v1699 = vpop.permute.xlu0 %1698
      %v1700 = vsel %vm1483, %v1695, %v1697
      %v1701 = vsel %vm1483, %v1697, %v1699
      %v1705 = vadd.f32 %v1669, %v1700
      %v1706 = vadd.f32 %v1670, %v1701
      %v1707 = vadd.f32 %v1671, %v1699
      %1708 = vset.pattern.permute.xlu0 7
      %1709 = vperm.xlu0 %1708, %v640
      %v1710 = vpop.permute.xlu0 %1709
      %v1712 = vlaneseq
      %v1713 = vshrl.u32 %v1712, 7
      %v1714 = vsub.s32 7, %v1713
      %v1715 = vrot.slane %v1451, %v1714
      %v1716 = vlaneseq
      %v1717 = vshrl.u32 %v1716, 7
      %v1718 = vsub.s32 7, %v1717
      %v1719 = vrot.slane %v1452, %v1718
      %v1720 = vlaneseq
      %v1721 = vshrl.u32 %v1720, 7
      %v1722 = vsub.s32 7, %v1721
      %v1723 = vrot.slane %v1453, %v1722
      %v1724 = vmul.f32 %v1710, %v1715
      %v1725 = vmul.f32 %v1710, %v1719
      %v1726 = vmul.f32 %v1710, %v1723
      %1730 = vrot.lane.b32.xlu0 %v1724, 112
      %v1731 = vpop.permute.xlu0 %1730
      %1732 = vrot.lane.b32.xlu0 %v1725, 112
      %v1733 = vpop.permute.xlu0 %1732
      %1734 = vrot.lane.b32.xlu0 %v1726, 112
      %v1735 = vpop.permute.xlu0 %1734
      %v1736 = vsel %vm1483, %v1731, %v1733
      %v1737 = vsel %vm1483, %v1733, %v1735
      %v1741 = vadd.f32 %v1705, %v1736
      %v1742 = vadd.f32 %v1706, %v1737
      %v1743 = vadd.f32 %v1707, %v1735
      %1745 = vset.pattern.permute.xlu0 0
      %1746 = vperm.xlu0 %1745, %v641
      %v1747 = vpop.permute.xlu0 %1746
      %v1749 = vmul.f32 %v1747, %v861
      %v1750 = vmul.f32 %v1747, %v865
      %1753 = vrot.lane.b32.xlu0 %v1749, 111
      %v1754 = vpop.permute.xlu0 %1753
      %1755 = vrot.lane.b32.xlu0 %v1750, 111
      %v1756 = vpop.permute.xlu0 %1755
      %v1757 = vsel %vm665, %v1754, %v1756
      %v1761 = vadd.f32 %v1741, %v1754
      %v1762 = vadd.f32 %v1742, %v1757
      %v1763 = vadd.f32 %v1743, %v1756
      %1764 = vset.pattern.permute.xlu0 1
      %1765 = vperm.xlu0 %1764, %v641
      %v1766 = vpop.permute.xlu0 %1765
      %v1768 = vmul.f32 %v1766, %v897
      %v1769 = vmul.f32 %v1766, %v901
      %1772 = vrot.lane.b32.xlu0 %v1768, 111
      %v1773 = vpop.permute.xlu0 %1772
      %1774 = vrot.lane.b32.xlu0 %v1769, 111
      %v1775 = vpop.permute.xlu0 %1774
      %v1776 = vsel %vm665, %v1773, %v1775
      %v1780 = vadd.f32 %v1761, %v1773
      %v1781 = vadd.f32 %v1762, %v1776
      %v1782 = vadd.f32 %v1763, %v1775
      %1783 = vset.pattern.permute.xlu0 2
      %1784 = vperm.xlu0 %1783, %v641
      %v1785 = vpop.permute.xlu0 %1784
      %v1787 = vmul.f32 %v1785, %v932
      %v1788 = vmul.f32 %v1785, %v936
      %1791 = vrot.lane.b32.xlu0 %v1787, 111
      %v1792 = vpop.permute.xlu0 %1791
      %1793 = vrot.lane.b32.xlu0 %v1788, 111
      %v1794 = vpop.permute.xlu0 %1793
      %v1795 = vsel %vm665, %v1792, %v1794
      %v1799 = vadd.f32 %v1780, %v1792
      %v1800 = vadd.f32 %v1781, %v1795
      %v1801 = vadd.f32 %v1782, %v1794
      %1802 = vset.pattern.permute.xlu0 3
      %1803 = vperm.xlu0 %1802, %v641
      %v1804 = vpop.permute.xlu0 %1803
      %v1806 = vmul.f32 %v1804, %v967
      %v1807 = vmul.f32 %v1804, %v971
      %1810 = vrot.lane.b32.xlu0 %v1806, 111
      %v1811 = vpop.permute.xlu0 %1810
      %1812 = vrot.lane.b32.xlu0 %v1807, 111
      %v1813 = vpop.permute.xlu0 %1812
      %v1814 = vsel %vm665, %v1811, %v1813
      %v1818 = vadd.f32 %v1799, %v1811
      %v1819 = vadd.f32 %v1800, %v1814
      %v1820 = vadd.f32 %v1801, %v1813
      %1821 = vset.pattern.permute.xlu0 4
      %1822 = vperm.xlu0 %1821, %v641
      %v1823 = vpop.permute.xlu0 %1822
      %v1825 = vmul.f32 %v1823, %v1002
      %v1826 = vmul.f32 %v1823, %v1006
      %1829 = vrot.lane.b32.xlu0 %v1825, 111
      %v1830 = vpop.permute.xlu0 %1829
      %1831 = vrot.lane.b32.xlu0 %v1826, 111
      %v1832 = vpop.permute.xlu0 %1831
      %v1833 = vsel %vm665, %v1830, %v1832
      %v1837 = vadd.f32 %v1818, %v1830
      %v1838 = vadd.f32 %v1819, %v1833
      %v1839 = vadd.f32 %v1820, %v1832
      %1840 = vset.pattern.permute.xlu0 5
      %1841 = vperm.xlu0 %1840, %v641
      %v1842 = vpop.permute.xlu0 %1841
      %v1844 = vmul.f32 %v1842, %v1037
      %v1845 = vmul.f32 %v1842, %v1041
      %1848 = vrot.lane.b32.xlu0 %v1844, 111
      %v1849 = vpop.permute.xlu0 %1848
      %1850 = vrot.lane.b32.xlu0 %v1845, 111
      %v1851 = vpop.permute.xlu0 %1850
      %v1852 = vsel %vm665, %v1849, %v1851
      %v1856 = vadd.f32 %v1837, %v1849
      %v1857 = vadd.f32 %v1838, %v1852
      %v1858 = vadd.f32 %v1839, %v1851
      %1859 = vset.pattern.permute.xlu0 6
      %1860 = vperm.xlu0 %1859, %v641
      %v1861 = vpop.permute.xlu0 %1860
      %v1863 = vmul.f32 %v1861, %v1072
      %v1864 = vmul.f32 %v1861, %v1076
      %1867 = vrot.lane.b32.xlu0 %v1863, 111
      %v1868 = vpop.permute.xlu0 %1867
      %1869 = vrot.lane.b32.xlu0 %v1864, 111
      %v1870 = vpop.permute.xlu0 %1869
      %v1871 = vsel %vm665, %v1868, %v1870
      %v1875 = vadd.f32 %v1856, %v1868
      %v1876 = vadd.f32 %v1857, %v1871
      %v1877 = vadd.f32 %v1858, %v1870
      %1878 = vset.pattern.permute.xlu0 7
      %1879 = vperm.xlu0 %1878, %v641
      %v1880 = vpop.permute.xlu0 %1879
      %v1882 = vmul.f32 %v1880, %v1107
      %v1883 = vmul.f32 %v1880, %v1111
      %1886 = vrot.lane.b32.xlu0 %v1882, 111
      %v1887 = vpop.permute.xlu0 %1886
      %1888 = vrot.lane.b32.xlu0 %v1883, 111
      %v1889 = vpop.permute.xlu0 %1888
      %v1890 = vsel %vm665, %v1887, %v1889
      %v1894 = vadd.f32 %v1875, %v1887
      %v1895 = vadd.f32 %v1876, %v1890
      %v1896 = vadd.f32 %v1877, %v1889
      %1897 = vrot.lane.b32.xlu0 %v1136, 1
      %v1898 = vpop.permute.xlu0 %1897
      %1899 = vrot.lane.b32.xlu0 %v1140, 1
      %v1900 = vpop.permute.xlu0 %1899
      %vm1901 = vcmask 7168
      %v1902 = vsel %vm1901, %v1898, %v1900
      %v1906 = vmul.f32 %v635, %v1898
      %v1907 = vmul.f32 %v636, %v1902
      %v1908 = vmul.f32 %v1900, 0.0
      %1910 = vset.pattern.permute.xlu0 0
      %1911 = vperm.xlu0 %1910, %v642
      %v1912 = vpop.permute.xlu0 %1911
      %v1914 = vlaneseq
      %v1915 = vshrl.u32 %v1914, 7
      %v1916 = vsub.s32 0, %v1915
      %v1917 = vrot.slane %v1906, %v1916
      %v1918 = vlaneseq
      %v1919 = vshrl.u32 %v1918, 7
      %v1920 = vsub.s32 0, %v1919
      %v1921 = vrot.slane %v1907, %v1920
      %v1922 = vlaneseq
      %v1923 = vshrl.u32 %v1922, 7
      %v1924 = vsub.s32 0, %v1923
      %v1925 = vrot.slane %v1908, %v1924
      %v1926 = vmul.f32 %v1912, %v1917
      %v1927 = vmul.f32 %v1912, %v1921
      %v1928 = vmul.f32 %v1912, %v1925
      %1932 = vrot.lane.b32.xlu0 %v1926, 110
      %v1933 = vpop.permute.xlu0 %1932
      %1934 = vrot.lane.b32.xlu0 %v1927, 110
      %v1935 = vpop.permute.xlu0 %1934
      %1936 = vrot.lane.b32.xlu0 %v1928, 110
      %v1937 = vpop.permute.xlu0 %1936
      %vm1938 = vcmask 900096
      %v1939 = vsel %vm1938, %v1933, %v1935
      %v1940 = vsel %vm1938, %v1935, %v1937
      %v1944 = vadd.f32 %v1894, %v1933
      %v1945 = vadd.f32 %v1895, %v1939
      %v1946 = vadd.f32 %v1896, %v1940
      %1947 = vset.pattern.permute.xlu0 1
      %1948 = vperm.xlu0 %1947, %v642
      %v1949 = vpop.permute.xlu0 %1948
      %v1951 = vlaneseq
      %v1952 = vshrl.u32 %v1951, 7
      %v1953 = vsub.s32 1, %v1952
      %v1954 = vrot.slane %v1906, %v1953
      %v1955 = vlaneseq
      %v1956 = vshrl.u32 %v1955, 7
      %v1957 = vsub.s32 1, %v1956
      %v1958 = vrot.slane %v1907, %v1957
      %v1959 = vlaneseq
      %v1960 = vshrl.u32 %v1959, 7
      %v1961 = vsub.s32 1, %v1960
      %v1962 = vrot.slane %v1908, %v1961
      %v1963 = vmul.f32 %v1949, %v1954
      %v1964 = vmul.f32 %v1949, %v1958
      %v1965 = vmul.f32 %v1949, %v1962
      %1969 = vrot.lane.b32.xlu0 %v1963, 110
      %v1970 = vpop.permute.xlu0 %1969
      %1971 = vrot.lane.b32.xlu0 %v1964, 110
      %v1972 = vpop.permute.xlu0 %1971
      %1973 = vrot.lane.b32.xlu0 %v1965, 110
      %v1974 = vpop.permute.xlu0 %1973
      %v1975 = vsel %vm1938, %v1970, %v1972
      %v1976 = vsel %vm1938, %v1972, %v1974
      %v1980 = vadd.f32 %v1944, %v1970
      %v1981 = vadd.f32 %v1945, %v1975
      %v1982 = vadd.f32 %v1946, %v1976
      %1983 = vset.pattern.permute.xlu0 2
      %1984 = vperm.xlu0 %1983, %v642
      %v1985 = vpop.permute.xlu0 %1984
      %v1987 = vlaneseq
      %v1988 = vshrl.u32 %v1987, 7
      %v1989 = vsub.s32 2, %v1988
      %v1990 = vrot.slane %v1906, %v1989
      %v1991 = vlaneseq
      %v1992 = vshrl.u32 %v1991, 7
      %v1993 = vsub.s32 2, %v1992
      %v1994 = vrot.slane %v1907, %v1993
      %v1995 = vlaneseq
      %v1996 = vshrl.u32 %v1995, 7
      %v1997 = vsub.s32 2, %v1996
      %v1998 = vrot.slane %v1908, %v1997
      %v1999 = vmul.f32 %v1985, %v1990
      %v2000 = vmul.f32 %v1985, %v1994
      %v2001 = vmul.f32 %v1985, %v1998
      %2005 = vrot.lane.b32.xlu0 %v1999, 110
      %v2006 = vpop.permute.xlu0 %2005
      %2007 = vrot.lane.b32.xlu0 %v2000, 110
      %v2008 = vpop.permute.xlu0 %2007
      %2009 = vrot.lane.b32.xlu0 %v2001, 110
      %v2010 = vpop.permute.xlu0 %2009
      %v2011 = vsel %vm1938, %v2006, %v2008
      %v2012 = vsel %vm1938, %v2008, %v2010
      %v2016 = vadd.f32 %v1980, %v2006
      %v2017 = vadd.f32 %v1981, %v2011
      %v2018 = vadd.f32 %v1982, %v2012
      %2019 = vset.pattern.permute.xlu0 3
      %2020 = vperm.xlu0 %2019, %v642
      %v2021 = vpop.permute.xlu0 %2020
      %v2023 = vlaneseq
      %v2024 = vshrl.u32 %v2023, 7
      %v2025 = vsub.s32 3, %v2024
      %v2026 = vrot.slane %v1906, %v2025
      %v2027 = vlaneseq
      %v2028 = vshrl.u32 %v2027, 7
      %v2029 = vsub.s32 3, %v2028
      %v2030 = vrot.slane %v1907, %v2029
      %v2031 = vlaneseq
      %v2032 = vshrl.u32 %v2031, 7
      %v2033 = vsub.s32 3, %v2032
      %v2034 = vrot.slane %v1908, %v2033
      %v2035 = vmul.f32 %v2021, %v2026
      %v2036 = vmul.f32 %v2021, %v2030
      %v2037 = vmul.f32 %v2021, %v2034
      %2041 = vrot.lane.b32.xlu0 %v2035, 110
      %v2042 = vpop.permute.xlu0 %2041
      %2043 = vrot.lane.b32.xlu0 %v2036, 110
      %v2044 = vpop.permute.xlu0 %2043
      %2045 = vrot.lane.b32.xlu0 %v2037, 110
      %v2046 = vpop.permute.xlu0 %2045
      %v2047 = vsel %vm1938, %v2042, %v2044
      %v2048 = vsel %vm1938, %v2044, %v2046
      %v2052 = vadd.f32 %v2016, %v2042
      %v2053 = vadd.f32 %v2017, %v2047
      %v2054 = vadd.f32 %v2018, %v2048
      %2055 = vset.pattern.permute.xlu0 4
      %2056 = vperm.xlu0 %2055, %v642
      %v2057 = vpop.permute.xlu0 %2056
      %v2059 = vlaneseq
      %v2060 = vshrl.u32 %v2059, 7
      %v2061 = vsub.s32 4, %v2060
      %v2062 = vrot.slane %v1906, %v2061
      %v2063 = vlaneseq
      %v2064 = vshrl.u32 %v2063, 7
      %v2065 = vsub.s32 4, %v2064
      %v2066 = vrot.slane %v1907, %v2065
      %v2067 = vlaneseq
      %v2068 = vshrl.u32 %v2067, 7
      %v2069 = vsub.s32 4, %v2068
      %v2070 = vrot.slane %v1908, %v2069
      %v2071 = vmul.f32 %v2057, %v2062
      %v2072 = vmul.f32 %v2057, %v2066
      %v2073 = vmul.f32 %v2057, %v2070
      %2077 = vrot.lane.b32.xlu0 %v2071, 110
      %v2078 = vpop.permute.xlu0 %2077
      %2079 = vrot.lane.b32.xlu0 %v2072, 110
      %v2080 = vpop.permute.xlu0 %2079
      %2081 = vrot.lane.b32.xlu0 %v2073, 110
      %v2082 = vpop.permute.xlu0 %2081
      %v2083 = vsel %vm1938, %v2078, %v2080
      %v2084 = vsel %vm1938, %v2080, %v2082
      %v2088 = vadd.f32 %v2052, %v2078
      %v2089 = vadd.f32 %v2053, %v2083
      %v2090 = vadd.f32 %v2054, %v2084
      %2091 = vset.pattern.permute.xlu0 5
      %2092 = vperm.xlu0 %2091, %v642
      %v2093 = vpop.permute.xlu0 %2092
      %v2095 = vlaneseq
      %v2096 = vshrl.u32 %v2095, 7
      %v2097 = vsub.s32 5, %v2096
      %v2098 = vrot.slane %v1906, %v2097
      %v2099 = vlaneseq
      %v2100 = vshrl.u32 %v2099, 7
      %v2101 = vsub.s32 5, %v2100
      %v2102 = vrot.slane %v1907, %v2101
      %v2103 = vlaneseq
      %v2104 = vshrl.u32 %v2103, 7
      %v2105 = vsub.s32 5, %v2104
      %v2106 = vrot.slane %v1908, %v2105
      %v2107 = vmul.f32 %v2093, %v2098
      %v2108 = vmul.f32 %v2093, %v2102
      %v2109 = vmul.f32 %v2093, %v2106
      %2113 = vrot.lane.b32.xlu0 %v2107, 110
      %v2114 = vpop.permute.xlu0 %2113
      %2115 = vrot.lane.b32.xlu0 %v2108, 110
      %v2116 = vpop.permute.xlu0 %2115
      %2117 = vrot.lane.b32.xlu0 %v2109, 110
      %v2118 = vpop.permute.xlu0 %2117
      %v2119 = vsel %vm1938, %v2114, %v2116
      %v2120 = vsel %vm1938, %v2116, %v2118
      %v2124 = vadd.f32 %v2088, %v2114
      %v2125 = vadd.f32 %v2089, %v2119
      %v2126 = vadd.f32 %v2090, %v2120
      %2127 = vset.pattern.permute.xlu0 6
      %2128 = vperm.xlu0 %2127, %v642
      %v2129 = vpop.permute.xlu0 %2128
      %v2131 = vlaneseq
      %v2132 = vshrl.u32 %v2131, 7
      %v2133 = vsub.s32 6, %v2132
      %v2134 = vrot.slane %v1906, %v2133
      %v2135 = vlaneseq
      %v2136 = vshrl.u32 %v2135, 7
      %v2137 = vsub.s32 6, %v2136
      %v2138 = vrot.slane %v1907, %v2137
      %v2139 = vlaneseq
      %v2140 = vshrl.u32 %v2139, 7
      %v2141 = vsub.s32 6, %v2140
      %v2142 = vrot.slane %v1908, %v2141
      %v2143 = vmul.f32 %v2129, %v2134
      %v2144 = vmul.f32 %v2129, %v2138
      %v2145 = vmul.f32 %v2129, %v2142
      %2149 = vrot.lane.b32.xlu0 %v2143, 110
      %v2150 = vpop.permute.xlu0 %2149
      %2151 = vrot.lane.b32.xlu0 %v2144, 110
      %v2152 = vpop.permute.xlu0 %2151
      %2153 = vrot.lane.b32.xlu0 %v2145, 110
      %v2154 = vpop.permute.xlu0 %2153
      %v2155 = vsel %vm1938, %v2150, %v2152
      %v2156 = vsel %vm1938, %v2152, %v2154
      %v2160 = vadd.f32 %v2124, %v2150
      %v2161 = vadd.f32 %v2125, %v2155
      %v2162 = vadd.f32 %v2126, %v2156
      %2163 = vset.pattern.permute.xlu0 7
      %2164 = vperm.xlu0 %2163, %v642
      %v2165 = vpop.permute.xlu0 %2164
      %v2167 = vlaneseq
      %v2168 = vshrl.u32 %v2167, 7
      %v2169 = vsub.s32 7, %v2168
      %v2170 = vrot.slane %v1906, %v2169
      %v2171 = vlaneseq
      %v2172 = vshrl.u32 %v2171, 7
      %v2173 = vsub.s32 7, %v2172
      %v2174 = vrot.slane %v1907, %v2173
      %v2175 = vlaneseq
      %v2176 = vshrl.u32 %v2175, 7
      %v2177 = vsub.s32 7, %v2176
      %v2178 = vrot.slane %v1908, %v2177
      %v2179 = vmul.f32 %v2165, %v2170
      %v2180 = vmul.f32 %v2165, %v2174
      %v2181 = vmul.f32 %v2165, %v2178
      %2185 = vrot.lane.b32.xlu0 %v2179, 110
      %v2186 = vpop.permute.xlu0 %2185
      %2187 = vrot.lane.b32.xlu0 %v2180, 110
      %v2188 = vpop.permute.xlu0 %2187
      %2189 = vrot.lane.b32.xlu0 %v2181, 110
      %v2190 = vpop.permute.xlu0 %2189
      %v2191 = vsel %vm1938, %v2186, %v2188
      %v2192 = vsel %vm1938, %v2188, %v2190
      %v2196 = vadd.f32 %v2160, %v2186
      %v2197 = vadd.f32 %v2161, %v2191
      %v2198 = vadd.f32 %v2162, %v2192
      %2199 = vrot.lane.b32.xlu0 %v656, 15
      %v2200 = vpop.permute.xlu0 %2199
      %2201 = vrot.lane.b32.xlu0 %v660, 15
      %v2202 = vpop.permute.xlu0 %2201
      %vm2203 = vcmask 121856
      %v2204 = vsel %vm2203, %v2200, %v2202
      %v2208 = vmul.f32 %v635, %v2200
      %v2209 = vmul.f32 %v636, %v2204
      %v2210 = vmul.f32 %v2202, 0.0
      %2212 = vset.pattern.permute.xlu0 0
      %2213 = vperm.xlu0 %2212, %v643
      %v2214 = vpop.permute.xlu0 %2213
      %v2216 = vlaneseq
      %v2217 = vshrl.u32 %v2216, 7
      %v2218 = vsub.s32 0, %v2217
      %v2219 = vrot.slane %v2208, %v2218
      %v2220 = vlaneseq
      %v2221 = vshrl.u32 %v2220, 7
      %v2222 = vsub.s32 0, %v2221
      %v2223 = vrot.slane %v2209, %v2222
      %v2224 = vlaneseq
      %v2225 = vshrl.u32 %v2224, 7
      %v2226 = vsub.s32 0, %v2225
      %v2227 = vrot.slane %v2210, %v2226
      %v2228 = vmul.f32 %v2214, %v2219
      %v2229 = vmul.f32 %v2214, %v2223
      %v2230 = vmul.f32 %v2214, %v2227
      %2234 = vrot.lane.b32.xlu0 %v2228, 96
      %v2235 = vpop.permute.xlu0 %2234
      %2236 = vrot.lane.b32.xlu0 %v2229, 96
      %v2237 = vpop.permute.xlu0 %2236
      %2238 = vrot.lane.b32.xlu0 %v2230, 96
      %v2239 = vpop.permute.xlu0 %2238
      %vm2240 = vcmask 785408
      %v2241 = vsel %vm2240, %v2235, %v2237
      %v2242 = vsel %vm2240, %v2237, %v2239
      %v2246 = vadd.f32 %v2196, %v2235
      %v2247 = vadd.f32 %v2197, %v2241
      %v2248 = vadd.f32 %v2198, %v2242
      %2249 = vset.pattern.permute.xlu0 1
      %2250 = vperm.xlu0 %2249, %v643
      %v2251 = vpop.permute.xlu0 %2250
      %v2253 = vlaneseq
      %v2254 = vshrl.u32 %v2253, 7
      %v2255 = vsub.s32 1, %v2254
      %v2256 = vrot.slane %v2208, %v2255
      %v2257 = vlaneseq
      %v2258 = vshrl.u32 %v2257, 7
      %v2259 = vsub.s32 1, %v2258
      %v2260 = vrot.slane %v2209, %v2259
      %v2261 = vlaneseq
      %v2262 = vshrl.u32 %v2261, 7
      %v2263 = vsub.s32 1, %v2262
      %v2264 = vrot.slane %v2210, %v2263
      %v2265 = vmul.f32 %v2251, %v2256
      %v2266 = vmul.f32 %v2251, %v2260
      %v2267 = vmul.f32 %v2251, %v2264
      %2271 = vrot.lane.b32.xlu0 %v2265, 96
      %v2272 = vpop.permute.xlu0 %2271
      %2273 = vrot.lane.b32.xlu0 %v2266, 96
      %v2274 = vpop.permute.xlu0 %2273
      %2275 = vrot.lane.b32.xlu0 %v2267, 96
      %v2276 = vpop.permute.xlu0 %2275
      %v2277 = vsel %vm2240, %v2272, %v2274
      %v2278 = vsel %vm2240, %v2274, %v2276
      %v2282 = vadd.f32 %v2246, %v2272
      %v2283 = vadd.f32 %v2247, %v2277
      %v2284 = vadd.f32 %v2248, %v2278
      %2285 = vset.pattern.permute.xlu0 2
      %2286 = vperm.xlu0 %2285, %v643
      %v2287 = vpop.permute.xlu0 %2286
      %v2289 = vlaneseq
      %v2290 = vshrl.u32 %v2289, 7
      %v2291 = vsub.s32 2, %v2290
      %v2292 = vrot.slane %v2208, %v2291
      %v2293 = vlaneseq
      %v2294 = vshrl.u32 %v2293, 7
      %v2295 = vsub.s32 2, %v2294
      %v2296 = vrot.slane %v2209, %v2295
      %v2297 = vlaneseq
      %v2298 = vshrl.u32 %v2297, 7
      %v2299 = vsub.s32 2, %v2298
      %v2300 = vrot.slane %v2210, %v2299
      %v2301 = vmul.f32 %v2287, %v2292
      %v2302 = vmul.f32 %v2287, %v2296
      %v2303 = vmul.f32 %v2287, %v2300
      %2307 = vrot.lane.b32.xlu0 %v2301, 96
      %v2308 = vpop.permute.xlu0 %2307
      %2309 = vrot.lane.b32.xlu0 %v2302, 96
      %v2310 = vpop.permute.xlu0 %2309
      %2311 = vrot.lane.b32.xlu0 %v2303, 96
      %v2312 = vpop.permute.xlu0 %2311
      %v2313 = vsel %vm2240, %v2308, %v2310
      %v2314 = vsel %vm2240, %v2310, %v2312
      %v2318 = vadd.f32 %v2282, %v2308
      %v2319 = vadd.f32 %v2283, %v2313
      %v2320 = vadd.f32 %v2284, %v2314
      %2321 = vset.pattern.permute.xlu0 3
      %2322 = vperm.xlu0 %2321, %v643
      %v2323 = vpop.permute.xlu0 %2322
      %v2325 = vlaneseq
      %v2326 = vshrl.u32 %v2325, 7
      %v2327 = vsub.s32 3, %v2326
      %v2328 = vrot.slane %v2208, %v2327
      %v2329 = vlaneseq
      %v2330 = vshrl.u32 %v2329, 7
      %v2331 = vsub.s32 3, %v2330
      %v2332 = vrot.slane %v2209, %v2331
      %v2333 = vlaneseq
      %v2334 = vshrl.u32 %v2333, 7
      %v2335 = vsub.s32 3, %v2334
      %v2336 = vrot.slane %v2210, %v2335
      %v2337 = vmul.f32 %v2323, %v2328
      %v2338 = vmul.f32 %v2323, %v2332
      %v2339 = vmul.f32 %v2323, %v2336
      %2343 = vrot.lane.b32.xlu0 %v2337, 96
      %v2344 = vpop.permute.xlu0 %2343
      %2345 = vrot.lane.b32.xlu0 %v2338, 96
      %v2346 = vpop.permute.xlu0 %2345
      %2347 = vrot.lane.b32.xlu0 %v2339, 96
      %v2348 = vpop.permute.xlu0 %2347
      %v2349 = vsel %vm2240, %v2344, %v2346
      %v2350 = vsel %vm2240, %v2346, %v2348
      %v2354 = vadd.f32 %v2318, %v2344
      %v2355 = vadd.f32 %v2319, %v2349
      %v2356 = vadd.f32 %v2320, %v2350
      %2357 = vset.pattern.permute.xlu0 4
      %2358 = vperm.xlu0 %2357, %v643
      %v2359 = vpop.permute.xlu0 %2358
      %v2361 = vlaneseq
      %v2362 = vshrl.u32 %v2361, 7
      %v2363 = vsub.s32 4, %v2362
      %v2364 = vrot.slane %v2208, %v2363
      %v2365 = vlaneseq
      %v2366 = vshrl.u32 %v2365, 7
      %v2367 = vsub.s32 4, %v2366
      %v2368 = vrot.slane %v2209, %v2367
      %v2369 = vlaneseq
      %v2370 = vshrl.u32 %v2369, 7
      %v2371 = vsub.s32 4, %v2370
      %v2372 = vrot.slane %v2210, %v2371
      %v2373 = vmul.f32 %v2359, %v2364
      %v2374 = vmul.f32 %v2359, %v2368
      %v2375 = vmul.f32 %v2359, %v2372
      %2379 = vrot.lane.b32.xlu0 %v2373, 96
      %v2380 = vpop.permute.xlu0 %2379
      %2381 = vrot.lane.b32.xlu0 %v2374, 96
      %v2382 = vpop.permute.xlu0 %2381
      %2383 = vrot.lane.b32.xlu0 %v2375, 96
      %v2384 = vpop.permute.xlu0 %2383
      %v2385 = vsel %vm2240, %v2380, %v2382
      %v2386 = vsel %vm2240, %v2382, %v2384
      %v2390 = vadd.f32 %v2354, %v2380
      %v2391 = vadd.f32 %v2355, %v2385
      %v2392 = vadd.f32 %v2356, %v2386
      %2393 = vset.pattern.permute.xlu0 5
      %2394 = vperm.xlu0 %2393, %v643
      %v2395 = vpop.permute.xlu0 %2394
      %v2397 = vlaneseq
      %v2398 = vshrl.u32 %v2397, 7
      %v2399 = vsub.s32 5, %v2398
      %v2400 = vrot.slane %v2208, %v2399
      %v2401 = vlaneseq
      %v2402 = vshrl.u32 %v2401, 7
      %v2403 = vsub.s32 5, %v2402
      %v2404 = vrot.slane %v2209, %v2403
      %v2405 = vlaneseq
      %v2406 = vshrl.u32 %v2405, 7
      %v2407 = vsub.s32 5, %v2406
      %v2408 = vrot.slane %v2210, %v2407
      %v2409 = vmul.f32 %v2395, %v2400
      %v2410 = vmul.f32 %v2395, %v2404
      %v2411 = vmul.f32 %v2395, %v2408
      %2415 = vrot.lane.b32.xlu0 %v2409, 96
      %v2416 = vpop.permute.xlu0 %2415
      %2417 = vrot.lane.b32.xlu0 %v2410, 96
      %v2418 = vpop.permute.xlu0 %2417
      %2419 = vrot.lane.b32.xlu0 %v2411, 96
      %v2420 = vpop.permute.xlu0 %2419
      %v2421 = vsel %vm2240, %v2416, %v2418
      %v2422 = vsel %vm2240, %v2418, %v2420
      %v2426 = vadd.f32 %v2390, %v2416
      %v2427 = vadd.f32 %v2391, %v2421
      %v2428 = vadd.f32 %v2392, %v2422
      %2429 = vset.pattern.permute.xlu0 6
      %2430 = vperm.xlu0 %2429, %v643
      %v2431 = vpop.permute.xlu0 %2430
      %v2433 = vlaneseq
      %v2434 = vshrl.u32 %v2433, 7
      %v2435 = vsub.s32 6, %v2434
      %v2436 = vrot.slane %v2208, %v2435
      %v2437 = vlaneseq
      %v2438 = vshrl.u32 %v2437, 7
      %v2439 = vsub.s32 6, %v2438
      %v2440 = vrot.slane %v2209, %v2439
      %v2441 = vlaneseq
      %v2442 = vshrl.u32 %v2441, 7
      %v2443 = vsub.s32 6, %v2442
      %v2444 = vrot.slane %v2210, %v2443
      %v2445 = vmul.f32 %v2431, %v2436
      %v2446 = vmul.f32 %v2431, %v2440
      %v2447 = vmul.f32 %v2431, %v2444
      %2451 = vrot.lane.b32.xlu0 %v2445, 96
      %v2452 = vpop.permute.xlu0 %2451
      %2453 = vrot.lane.b32.xlu0 %v2446, 96
      %v2454 = vpop.permute.xlu0 %2453
      %2455 = vrot.lane.b32.xlu0 %v2447, 96
      %v2456 = vpop.permute.xlu0 %2455
      %v2457 = vsel %vm2240, %v2452, %v2454
      %v2458 = vsel %vm2240, %v2454, %v2456
      %v2462 = vadd.f32 %v2426, %v2452
      %v2463 = vadd.f32 %v2427, %v2457
      %v2464 = vadd.f32 %v2428, %v2458
      %2465 = vset.pattern.permute.xlu0 7
      %2466 = vperm.xlu0 %2465, %v643
      %v2467 = vpop.permute.xlu0 %2466
      %v2469 = vlaneseq
      %v2470 = vshrl.u32 %v2469, 7
      %v2471 = vsub.s32 7, %v2470
      %v2472 = vrot.slane %v2208, %v2471
      %v2473 = vlaneseq
      %v2474 = vshrl.u32 %v2473, 7
      %v2475 = vsub.s32 7, %v2474
      %v2476 = vrot.slane %v2209, %v2475
      %v2477 = vlaneseq
      %v2478 = vshrl.u32 %v2477, 7
      %v2479 = vsub.s32 7, %v2478
      %v2480 = vrot.slane %v2210, %v2479
      %v2481 = vmul.f32 %v2467, %v2472
      %v2482 = vmul.f32 %v2467, %v2476
      %v2483 = vmul.f32 %v2467, %v2480
      %2487 = vrot.lane.b32.xlu0 %v2481, 96
      %v2488 = vpop.permute.xlu0 %2487
      %2489 = vrot.lane.b32.xlu0 %v2482, 96
      %v2490 = vpop.permute.xlu0 %2489
      %2491 = vrot.lane.b32.xlu0 %v2483, 96
      %v2492 = vpop.permute.xlu0 %2491
      %v2493 = vsel %vm2240, %v2488, %v2490
      %v2494 = vsel %vm2240, %v2490, %v2492
      %v2498 = vadd.f32 %v2462, %v2488
      %v2499 = vadd.f32 %v2463, %v2493
      %v2500 = vadd.f32 %v2464, %v2494
      %2502 = vset.pattern.permute.xlu0 0
      %2503 = vperm.xlu0 %2502, %v644
      %v2504 = vpop.permute.xlu0 %2503
      %v2506 = vmul.f32 %v2504, %v861
      %v2507 = vmul.f32 %v2504, %v865
      %v2508 = vmul.f32 %v2504, 0.0
      %2512 = vrot.lane.b32.xlu0 %v2506, 95
      %v2513 = vpop.permute.xlu0 %2512
      %2514 = vrot.lane.b32.xlu0 %v2507, 95
      %v2515 = vpop.permute.xlu0 %2514
      %2516 = vrot.lane.b32.xlu0 %v2508, 95
      %v2517 = vpop.permute.xlu0 %2516
      %vm2518 = vcmask 777216
      %v2519 = vsel %vm2518, %v2513, %v2515
      %v2520 = vsel %vm2518, %v2515, %v2517
      %v2524 = vadd.f32 %v2498, %v2513
      %v2525 = vadd.f32 %v2499, %v2519
      %v2526 = vadd.f32 %v2500, %v2520
      %2527 = vset.pattern.permute.xlu0 1
      %2528 = vperm.xlu0 %2527, %v644
      %v2529 = vpop.permute.xlu0 %2528
      %v2531 = vmul.f32 %v2529, %v897
      %v2532 = vmul.f32 %v2529, %v901
      %v2533 = vmul.f32 %v2529, 0.0
      %2537 = vrot.lane.b32.xlu0 %v2531, 95
      %v2538 = vpop.permute.xlu0 %2537
      %2539 = vrot.lane.b32.xlu0 %v2532, 95
      %v2540 = vpop.permute.xlu0 %2539
      %2541 = vrot.lane.b32.xlu0 %v2533, 95
      %v2542 = vpop.permute.xlu0 %2541
      %v2543 = vsel %vm2518, %v2538, %v2540
      %v2544 = vsel %vm2518, %v2540, %v2542
      %v2548 = vadd.f32 %v2524, %v2538
      %v2549 = vadd.f32 %v2525, %v2543
      %v2550 = vadd.f32 %v2526, %v2544
      %2551 = vset.pattern.permute.xlu0 2
      %2552 = vperm.xlu0 %2551, %v644
      %v2553 = vpop.permute.xlu0 %2552
      %v2555 = vmul.f32 %v2553, %v932
      %v2556 = vmul.f32 %v2553, %v936
      %v2557 = vmul.f32 %v2553, 0.0
      %2561 = vrot.lane.b32.xlu0 %v2555, 95
      %v2562 = vpop.permute.xlu0 %2561
      %2563 = vrot.lane.b32.xlu0 %v2556, 95
      %v2564 = vpop.permute.xlu0 %2563
      %2565 = vrot.lane.b32.xlu0 %v2557, 95
      %v2566 = vpop.permute.xlu0 %2565
      %v2567 = vsel %vm2518, %v2562, %v2564
      %v2568 = vsel %vm2518, %v2564, %v2566
      %v2572 = vadd.f32 %v2548, %v2562
      %v2573 = vadd.f32 %v2549, %v2567
      %v2574 = vadd.f32 %v2550, %v2568
      %2575 = vset.pattern.permute.xlu0 3
      %2576 = vperm.xlu0 %2575, %v644
      %v2577 = vpop.permute.xlu0 %2576
      %v2579 = vmul.f32 %v2577, %v967
      %v2580 = vmul.f32 %v2577, %v971
      %v2581 = vmul.f32 %v2577, 0.0
      %2585 = vrot.lane.b32.xlu0 %v2579, 95
      %v2586 = vpop.permute.xlu0 %2585
      %2587 = vrot.lane.b32.xlu0 %v2580, 95
      %v2588 = vpop.permute.xlu0 %2587
      %2589 = vrot.lane.b32.xlu0 %v2581, 95
      %v2590 = vpop.permute.xlu0 %2589
      %v2591 = vsel %vm2518, %v2586, %v2588
      %v2592 = vsel %vm2518, %v2588, %v2590
      %v2596 = vadd.f32 %v2572, %v2586
      %v2597 = vadd.f32 %v2573, %v2591
      %v2598 = vadd.f32 %v2574, %v2592
      %2599 = vset.pattern.permute.xlu0 4
      %2600 = vperm.xlu0 %2599, %v644
      %v2601 = vpop.permute.xlu0 %2600
      %v2603 = vmul.f32 %v2601, %v1002
      %v2604 = vmul.f32 %v2601, %v1006
      %v2605 = vmul.f32 %v2601, 0.0
      %2609 = vrot.lane.b32.xlu0 %v2603, 95
      %v2610 = vpop.permute.xlu0 %2609
      %2611 = vrot.lane.b32.xlu0 %v2604, 95
      %v2612 = vpop.permute.xlu0 %2611
      %2613 = vrot.lane.b32.xlu0 %v2605, 95
      %v2614 = vpop.permute.xlu0 %2613
      %v2615 = vsel %vm2518, %v2610, %v2612
      %v2616 = vsel %vm2518, %v2612, %v2614
      %v2620 = vadd.f32 %v2596, %v2610
      %v2621 = vadd.f32 %v2597, %v2615
      %v2622 = vadd.f32 %v2598, %v2616
      %2623 = vset.pattern.permute.xlu0 5
      %2624 = vperm.xlu0 %2623, %v644
      %v2625 = vpop.permute.xlu0 %2624
      %v2627 = vmul.f32 %v2625, %v1037
      %v2628 = vmul.f32 %v2625, %v1041
      %v2629 = vmul.f32 %v2625, 0.0
      %2633 = vrot.lane.b32.xlu0 %v2627, 95
      %v2634 = vpop.permute.xlu0 %2633
      %2635 = vrot.lane.b32.xlu0 %v2628, 95
      %v2636 = vpop.permute.xlu0 %2635
      %2637 = vrot.lane.b32.xlu0 %v2629, 95
      %v2638 = vpop.permute.xlu0 %2637
      %v2639 = vsel %vm2518, %v2634, %v2636
      %v2640 = vsel %vm2518, %v2636, %v2638
      %v2644 = vadd.f32 %v2620, %v2634
      %v2645 = vadd.f32 %v2621, %v2639
      %v2646 = vadd.f32 %v2622, %v2640
      %2647 = vset.pattern.permute.xlu0 6
      %2648 = vperm.xlu0 %2647, %v644
      %v2649 = vpop.permute.xlu0 %2648
      %v2651 = vmul.f32 %v2649, %v1072
      %v2652 = vmul.f32 %v2649, %v1076
      %v2653 = vmul.f32 %v2649, 0.0
      %2657 = vrot.lane.b32.xlu0 %v2651, 95
      %v2658 = vpop.permute.xlu0 %2657
      %2659 = vrot.lane.b32.xlu0 %v2652, 95
      %v2660 = vpop.permute.xlu0 %2659
      %2661 = vrot.lane.b32.xlu0 %v2653, 95
      %v2662 = vpop.permute.xlu0 %2661
      %v2663 = vsel %vm2518, %v2658, %v2660
      %v2664 = vsel %vm2518, %v2660, %v2662
      %v2668 = vadd.f32 %v2644, %v2658
      %v2669 = vadd.f32 %v2645, %v2663
      %v2670 = vadd.f32 %v2646, %v2664
      %2671 = vset.pattern.permute.xlu0 7
      %2672 = vperm.xlu0 %2671, %v644
      %v2673 = vpop.permute.xlu0 %2672
      %v2675 = vmul.f32 %v2673, %v1107
      %v2676 = vmul.f32 %v2673, %v1111
      %v2677 = vmul.f32 %v2673, 0.0
      %2681 = vrot.lane.b32.xlu0 %v2675, 95
      %v2682 = vpop.permute.xlu0 %2681
      %2683 = vrot.lane.b32.xlu0 %v2676, 95
      %v2684 = vpop.permute.xlu0 %2683
      %2685 = vrot.lane.b32.xlu0 %v2677, 95
      %v2686 = vpop.permute.xlu0 %2685
      %v2687 = vsel %vm2518, %v2682, %v2684
      %v2688 = vsel %vm2518, %v2684, %v2686
      %v2692 = vadd.f32 %v2668, %v2682
      %v2693 = vadd.f32 %v2669, %v2687
      %v2694 = vadd.f32 %v2670, %v2688
      %2695 = vrot.lane.b32.xlu0 %v1136, 17
      %v2696 = vpop.permute.xlu0 %2695
      %2697 = vrot.lane.b32.xlu0 %v1140, 17
      %v2698 = vpop.permute.xlu0 %2697
      %vm2699 = vcmask 138240
      %v2700 = vsel %vm2699, %v2696, %v2698
      %v2704 = vmul.f32 %v635, %v2696
      %v2705 = vmul.f32 %v636, %v2700
      %v2706 = vmul.f32 %v2698, 0.0
      %2708 = vset.pattern.permute.xlu0 0
      %2709 = vperm.xlu0 %2708, %v645
      %v2710 = vpop.permute.xlu0 %2709
      %v2712 = vlaneseq
      %v2713 = vshrl.u32 %v2712, 7
      %v2714 = vsub.s32 0, %v2713
      %v2715 = vrot.slane %v2704, %v2714
      %v2716 = vlaneseq
      %v2717 = vshrl.u32 %v2716, 7
      %v2718 = vsub.s32 0, %v2717
      %v2719 = vrot.slane %v2705, %v2718
      %v2720 = vlaneseq
      %v2721 = vshrl.u32 %v2720, 7
      %v2722 = vsub.s32 0, %v2721
      %v2723 = vrot.slane %v2706, %v2722
      %v2724 = vmul.f32 %v2710, %v2715
      %v2725 = vmul.f32 %v2710, %v2719
      %v2726 = vmul.f32 %v2710, %v2723
      %2730 = vrot.lane.b32.xlu0 %v2724, 94
      %v2731 = vpop.permute.xlu0 %2730
      %2732 = vrot.lane.b32.xlu0 %v2725, 94
      %v2733 = vpop.permute.xlu0 %2732
      %2734 = vrot.lane.b32.xlu0 %v2726, 94
      %v2735 = vpop.permute.xlu0 %2734
      %vm2736 = vcmask 769024
      %v2737 = vsel %vm2736, %v2731, %v2733
      %v2738 = vsel %vm2736, %v2733, %v2735
      %v2742 = vadd.f32 %v2692, %v2731
      %v2743 = vadd.f32 %v2693, %v2737
      %v2744 = vadd.f32 %v2694, %v2738
      %2745 = vset.pattern.permute.xlu0 1
      %2746 = vperm.xlu0 %2745, %v645
      %v2747 = vpop.permute.xlu0 %2746
      %v2749 = vlaneseq
      %v2750 = vshrl.u32 %v2749, 7
      %v2751 = vsub.s32 1, %v2750
      %v2752 = vrot.slane %v2704, %v2751
      %v2753 = vlaneseq
      %v2754 = vshrl.u32 %v2753, 7
      %v2755 = vsub.s32 1, %v2754
      %v2756 = vrot.slane %v2705, %v2755
      %v2757 = vlaneseq
      %v2758 = vshrl.u32 %v2757, 7
      %v2759 = vsub.s32 1, %v2758
      %v2760 = vrot.slane %v2706, %v2759
      %v2761 = vmul.f32 %v2747, %v2752
      %v2762 = vmul.f32 %v2747, %v2756
      %v2763 = vmul.f32 %v2747, %v2760
      %2767 = vrot.lane.b32.xlu0 %v2761, 94
      %v2768 = vpop.permute.xlu0 %2767
      %2769 = vrot.lane.b32.xlu0 %v2762, 94
      %v2770 = vpop.permute.xlu0 %2769
      %2771 = vrot.lane.b32.xlu0 %v2763, 94
      %v2772 = vpop.permute.xlu0 %2771
      %v2773 = vsel %vm2736, %v2768, %v2770
      %v2774 = vsel %vm2736, %v2770, %v2772
      %v2778 = vadd.f32 %v2742, %v2768
      %v2779 = vadd.f32 %v2743, %v2773
      %v2780 = vadd.f32 %v2744, %v2774
      %2781 = vset.pattern.permute.xlu0 2
      %2782 = vperm.xlu0 %2781, %v645
      %v2783 = vpop.permute.xlu0 %2782
      %v2785 = vlaneseq
      %v2786 = vshrl.u32 %v2785, 7
      %v2787 = vsub.s32 2, %v2786
      %v2788 = vrot.slane %v2704, %v2787
      %v2789 = vlaneseq
      %v2790 = vshrl.u32 %v2789, 7
      %v2791 = vsub.s32 2, %v2790
      %v2792 = vrot.slane %v2705, %v2791
      %v2793 = vlaneseq
      %v2794 = vshrl.u32 %v2793, 7
      %v2795 = vsub.s32 2, %v2794
      %v2796 = vrot.slane %v2706, %v2795
      %v2797 = vmul.f32 %v2783, %v2788
      %v2798 = vmul.f32 %v2783, %v2792
      %v2799 = vmul.f32 %v2783, %v2796
      %2803 = vrot.lane.b32.xlu0 %v2797, 94
      %v2804 = vpop.permute.xlu0 %2803
      %2805 = vrot.lane.b32.xlu0 %v2798, 94
      %v2806 = vpop.permute.xlu0 %2805
      %2807 = vrot.lane.b32.xlu0 %v2799, 94
      %v2808 = vpop.permute.xlu0 %2807
      %v2809 = vsel %vm2736, %v2804, %v2806
      %v2810 = vsel %vm2736, %v2806, %v2808
      %v2814 = vadd.f32 %v2778, %v2804
      %v2815 = vadd.f32 %v2779, %v2809
      %v2816 = vadd.f32 %v2780, %v2810
      %2817 = vset.pattern.permute.xlu0 3
      %2818 = vperm.xlu0 %2817, %v645
      %v2819 = vpop.permute.xlu0 %2818
      %v2821 = vlaneseq
      %v2822 = vshrl.u32 %v2821, 7
      %v2823 = vsub.s32 3, %v2822
      %v2824 = vrot.slane %v2704, %v2823
      %v2825 = vlaneseq
      %v2826 = vshrl.u32 %v2825, 7
      %v2827 = vsub.s32 3, %v2826
      %v2828 = vrot.slane %v2705, %v2827
      %v2829 = vlaneseq
      %v2830 = vshrl.u32 %v2829, 7
      %v2831 = vsub.s32 3, %v2830
      %v2832 = vrot.slane %v2706, %v2831
      %v2833 = vmul.f32 %v2819, %v2824
      %v2834 = vmul.f32 %v2819, %v2828
      %v2835 = vmul.f32 %v2819, %v2832
      %2839 = vrot.lane.b32.xlu0 %v2833, 94
      %v2840 = vpop.permute.xlu0 %2839
      %2841 = vrot.lane.b32.xlu0 %v2834, 94
      %v2842 = vpop.permute.xlu0 %2841
      %2843 = vrot.lane.b32.xlu0 %v2835, 94
      %v2844 = vpop.permute.xlu0 %2843
      %v2845 = vsel %vm2736, %v2840, %v2842
      %v2846 = vsel %vm2736, %v2842, %v2844
      %v2850 = vadd.f32 %v2814, %v2840
      %v2851 = vadd.f32 %v2815, %v2845
      %v2852 = vadd.f32 %v2816, %v2846
      %2853 = vset.pattern.permute.xlu0 4
      %2854 = vperm.xlu0 %2853, %v645
      %v2855 = vpop.permute.xlu0 %2854
      %v2857 = vlaneseq
      %v2858 = vshrl.u32 %v2857, 7
      %v2859 = vsub.s32 4, %v2858
      %v2860 = vrot.slane %v2704, %v2859
      %v2861 = vlaneseq
      %v2862 = vshrl.u32 %v2861, 7
      %v2863 = vsub.s32 4, %v2862
      %v2864 = vrot.slane %v2705, %v2863
      %v2865 = vlaneseq
      %v2866 = vshrl.u32 %v2865, 7
      %v2867 = vsub.s32 4, %v2866
      %v2868 = vrot.slane %v2706, %v2867
      %v2869 = vmul.f32 %v2855, %v2860
      %v2870 = vmul.f32 %v2855, %v2864
      %v2871 = vmul.f32 %v2855, %v2868
      %2875 = vrot.lane.b32.xlu0 %v2869, 94
      %v2876 = vpop.permute.xlu0 %2875
      %2877 = vrot.lane.b32.xlu0 %v2870, 94
      %v2878 = vpop.permute.xlu0 %2877
      %2879 = vrot.lane.b32.xlu0 %v2871, 94
      %v2880 = vpop.permute.xlu0 %2879
      %v2881 = vsel %vm2736, %v2876, %v2878
      %v2882 = vsel %vm2736, %v2878, %v2880
      %v2886 = vadd.f32 %v2850, %v2876
      %v2887 = vadd.f32 %v2851, %v2881
      %v2888 = vadd.f32 %v2852, %v2882
      %2889 = vset.pattern.permute.xlu0 5
      %2890 = vperm.xlu0 %2889, %v645
      %v2891 = vpop.permute.xlu0 %2890
      %v2893 = vlaneseq
      %v2894 = vshrl.u32 %v2893, 7
      %v2895 = vsub.s32 5, %v2894
      %v2896 = vrot.slane %v2704, %v2895
      %v2897 = vlaneseq
      %v2898 = vshrl.u32 %v2897, 7
      %v2899 = vsub.s32 5, %v2898
      %v2900 = vrot.slane %v2705, %v2899
      %v2901 = vlaneseq
      %v2902 = vshrl.u32 %v2901, 7
      %v2903 = vsub.s32 5, %v2902
      %v2904 = vrot.slane %v2706, %v2903
      %v2905 = vmul.f32 %v2891, %v2896
      %v2906 = vmul.f32 %v2891, %v2900
      %v2907 = vmul.f32 %v2891, %v2904
      %2911 = vrot.lane.b32.xlu0 %v2905, 94
      %v2912 = vpop.permute.xlu0 %2911
      %2913 = vrot.lane.b32.xlu0 %v2906, 94
      %v2914 = vpop.permute.xlu0 %2913
      %2915 = vrot.lane.b32.xlu0 %v2907, 94
      %v2916 = vpop.permute.xlu0 %2915
      %v2917 = vsel %vm2736, %v2912, %v2914
      %v2918 = vsel %vm2736, %v2914, %v2916
      %v2922 = vadd.f32 %v2886, %v2912
      %v2923 = vadd.f32 %v2887, %v2917
      %v2924 = vadd.f32 %v2888, %v2918
      %2925 = vset.pattern.permute.xlu0 6
      %2926 = vperm.xlu0 %2925, %v645
      %v2927 = vpop.permute.xlu0 %2926
      %v2929 = vlaneseq
      %v2930 = vshrl.u32 %v2929, 7
      %v2931 = vsub.s32 6, %v2930
      %v2932 = vrot.slane %v2704, %v2931
      %v2933 = vlaneseq
      %v2934 = vshrl.u32 %v2933, 7
      %v2935 = vsub.s32 6, %v2934
      %v2936 = vrot.slane %v2705, %v2935
      %v2937 = vlaneseq
      %v2938 = vshrl.u32 %v2937, 7
      %v2939 = vsub.s32 6, %v2938
      %v2940 = vrot.slane %v2706, %v2939
      %v2941 = vmul.f32 %v2927, %v2932
      %v2942 = vmul.f32 %v2927, %v2936
      %v2943 = vmul.f32 %v2927, %v2940
      %2947 = vrot.lane.b32.xlu0 %v2941, 94
      %v2948 = vpop.permute.xlu0 %2947
      %2949 = vrot.lane.b32.xlu0 %v2942, 94
      %v2950 = vpop.permute.xlu0 %2949
      %2951 = vrot.lane.b32.xlu0 %v2943, 94
      %v2952 = vpop.permute.xlu0 %2951
      %v2953 = vsel %vm2736, %v2948, %v2950
      %v2954 = vsel %vm2736, %v2950, %v2952
      %v2958 = vadd.f32 %v2922, %v2948
      %v2959 = vadd.f32 %v2923, %v2953
      %v2960 = vadd.f32 %v2924, %v2954
      %2961 = vset.pattern.permute.xlu0 7
      %2962 = vperm.xlu0 %2961, %v645
      %v2963 = vpop.permute.xlu0 %2962
      %v2965 = vlaneseq
      %v2966 = vshrl.u32 %v2965, 7
      %v2967 = vsub.s32 7, %v2966
      %v2968 = vrot.slane %v2704, %v2967
      %v2969 = vlaneseq
      %v2970 = vshrl.u32 %v2969, 7
      %v2971 = vsub.s32 7, %v2970
      %v2972 = vrot.slane %v2705, %v2971
      %v2973 = vlaneseq
      %v2974 = vshrl.u32 %v2973, 7
      %v2975 = vsub.s32 7, %v2974
      %v2976 = vrot.slane %v2706, %v2975
      %v2977 = vmul.f32 %v2963, %v2968
      %v2978 = vmul.f32 %v2963, %v2972
      %v2979 = vmul.f32 %v2963, %v2976
      %2983 = vrot.lane.b32.xlu0 %v2977, 94
      %v2984 = vpop.permute.xlu0 %2983
      %2985 = vrot.lane.b32.xlu0 %v2978, 94
      %v2986 = vpop.permute.xlu0 %2985
      %2987 = vrot.lane.b32.xlu0 %v2979, 94
      %v2988 = vpop.permute.xlu0 %2987
      %v2989 = vsel %vm2736, %v2984, %v2986
      %v2990 = vsel %vm2736, %v2986, %v2988
      %v2994 = vadd.f32 %v2958, %v2984
      %v2995 = vadd.f32 %v2959, %v2989
      %v2996 = vadd.f32 %v2960, %v2990
      %v2997 = vmax.f32 %v2994, 0.0
      %v2998 = vmax.f32 %v2995, 0.0
      %v2999 = vmax.f32 %v2996, 0.0
      %v3000 = vld [vmem:[%s9] sm:$0xff]
      %v3001 = vld [vmem:[%s9 + $0x8] sm:$0xff]
      %v3002 = vld [vmem:[%s9 + $0x10] sm:$0xff]
      %v3003 = vld [vmem:[%s9 + $0x18] sm:$0xff]
      %v3004 = vld [vmem:[%s9 + $0x20] sm:$0xff]
      %v3005 = vld [vmem:[%s9 + $0x28] sm:$0xff]
      %v3006 = vld [vmem:[%s9 + $0x30] sm:$0xff]
      %v3007 = vld [vmem:[%s9 + $0x38] sm:$0xff]
      %v3008 = vld [vmem:[%s9 + $0x40] sm:$0xff]
      %v3009 = vld [vmem:[%s10] sm:$0xff]
      %3013 = vrot.lane.b32.xlu0 %v2997, 17
      %v3014 = vpop.permute.xlu0 %3013
      %3015 = vrot.lane.b32.xlu0 %v2998, 17
      %v3016 = vpop.permute.xlu0 %3015
      %3017 = vrot.lane.b32.xlu0 %v2999, 17
      %v3018 = vpop.permute.xlu0 %3017
      %v3019 = vsel %vm2699, %v3014, %v3016
      %v3020 = vsel %vm2699, %v3016, %v3018
      %3024 = vset.pattern.permute.xlu0 0
      %3025 = vperm.xlu0 %3024, %v3009
      %v3026 = vpop.permute.xlu0 %3025
      %v3028 = vmul.f32 %v3019, %v666
      %v3029 = vmul.f32 %v3020, %v664
      %3031 = vset.pattern.permute.xlu0 0
      %3032 = vperm.xlu0 %3031, %v3000
      %v3033 = vpop.permute.xlu0 %3032
      %v3035 = vlaneseq
      %v3036 = vshrl.u32 %v3035, 7
      %v3037 = vsub.s32 0, %v3036
      %v3038 = vrot.slane %v3028, %v3037
      %v3039 = vlaneseq
      %v3040 = vshrl.u32 %v3039, 7
      %v3041 = vsub.s32 0, %v3040
      %v3042 = vrot.slane %v3029, %v3041
      %v3043 = vmul.f32 %v3033, %v681
      %v3044 = vmul.f32 %v3033, %v3038
      %v3045 = vmul.f32 %v3033, %v3042
      %v3046 = vadd.f32 %v3026, %v3043
      %v3047 = vadd.f32 %v3026, %v3044
      %v3048 = vadd.f32 %v3026, %v3045
      %3049 = vset.pattern.permute.xlu0 1
      %3050 = vperm.xlu0 %3049, %v3000
      %v3051 = vpop.permute.xlu0 %3050
      %v3053 = vlaneseq
      %v3054 = vshrl.u32 %v3053, 7
      %v3055 = vsub.s32 1, %v3054
      %v3056 = vrot.slane %v3028, %v3055
      %v3057 = vlaneseq
      %v3058 = vshrl.u32 %v3057, 7
      %v3059 = vsub.s32 1, %v3058
      %v3060 = vrot.slane %v3029, %v3059
      %v3061 = vmul.f32 %v3051, %v703
      %v3062 = vmul.f32 %v3051, %v3056
      %v3063 = vmul.f32 %v3051, %v3060
      %v3064 = vadd.f32 %v3046, %v3061
      %v3065 = vadd.f32 %v3047, %v3062
      %v3066 = vadd.f32 %v3048, %v3063
      %3068 = vset.pattern.permute.xlu0 0
      %3069 = vperm.xlu0 %3068, %v3001
      %v3070 = vpop.permute.xlu0 %3069
      %v3072 = vlaneseq
      %v3073 = vshrl.u32 %v3072, 7
      %v3074 = vsub.s32 0, %v3073
      %v3075 = vrot.slane %v3019, %v3074
      %v3076 = vlaneseq
      %v3077 = vshrl.u32 %v3076, 7
      %v3078 = vsub.s32 0, %v3077
      %v3079 = vrot.slane %v3020, %v3078
      %v3080 = vmul.f32 %v3070, 0.0
      %v3081 = vmul.f32 %v3070, %v3075
      %v3082 = vmul.f32 %v3070, %v3079
      %3086 = vrot.lane.b32.xlu0 %v3080, 127
      %v3087 = vpop.permute.xlu0 %3086
      %3088 = vrot.lane.b32.xlu0 %v3081, 127
      %v3089 = vpop.permute.xlu0 %3088
      %3090 = vrot.lane.b32.xlu0 %v3082, 127
      %v3091 = vpop.permute.xlu0 %3090
      %v3092 = vsel %vm878, %v3087, %v3089
      %v3093 = vsel %vm878, %v3089, %v3091
      %v3097 = vadd.f32 %v3064, %v3092
      %v3098 = vadd.f32 %v3065, %v3093
      %v3099 = vadd.f32 %v3066, %v3091
      %3100 = vset.pattern.permute.xlu0 1
      %3101 = vperm.xlu0 %3100, %v3001
      %v3102 = vpop.permute.xlu0 %3101
      %v3104 = vlaneseq
      %v3105 = vshrl.u32 %v3104, 7
      %v3106 = vsub.s32 1, %v3105
      %v3107 = vrot.slane %v3019, %v3106
      %v3108 = vlaneseq
      %v3109 = vshrl.u32 %v3108, 7
      %v3110 = vsub.s32 1, %v3109
      %v3111 = vrot.slane %v3020, %v3110
      %v3112 = vmul.f32 %v3102, 0.0
      %v3113 = vmul.f32 %v3102, %v3107
      %v3114 = vmul.f32 %v3102, %v3111
      %3118 = vrot.lane.b32.xlu0 %v3112, 127
      %v3119 = vpop.permute.xlu0 %3118
      %3120 = vrot.lane.b32.xlu0 %v3113, 127
      %v3121 = vpop.permute.xlu0 %3120
      %3122 = vrot.lane.b32.xlu0 %v3114, 127
      %v3123 = vpop.permute.xlu0 %3122
      %v3124 = vsel %vm878, %v3119, %v3121
      %v3125 = vsel %vm878, %v3121, %v3123
      %v3129 = vadd.f32 %v3097, %v3124
      %v3130 = vadd.f32 %v3098, %v3125
      %v3131 = vadd.f32 %v3099, %v3123
      %v3132 = vmul.f32 %v3019, %v1146
      %v3133 = vmul.f32 %v3020, %v1144
      %3135 = vset.pattern.permute.xlu0 0
      %3136 = vperm.xlu0 %3135, %v3002
      %v3137 = vpop.permute.xlu0 %3136
      %v3139 = vlaneseq
      %v3140 = vshrl.u32 %v3139, 7
      %v3141 = vsub.s32 0, %v3140
      %v3142 = vrot.slane %v3132, %v3141
      %v3143 = vlaneseq
      %v3144 = vshrl.u32 %v3143, 7
      %v3145 = vsub.s32 0, %v3144
      %v3146 = vrot.slane %v3133, %v3145
      %v3147 = vmul.f32 %v3137, %v1161
      %v3148 = vmul.f32 %v3137, %v3142
      %v3149 = vmul.f32 %v3137, %v3146
      %3153 = vrot.lane.b32.xlu0 %v3147, 126
      %v3154 = vpop.permute.xlu0 %3153
      %3155 = vrot.lane.b32.xlu0 %v3148, 126
      %v3156 = vpop.permute.xlu0 %3155
      %3157 = vrot.lane.b32.xlu0 %v3149, 126
      %v3158 = vpop.permute.xlu0 %3157
      %v3159 = vsel %vm1182, %v3154, %v3156
      %v3160 = vsel %vm1182, %v3156, %v3158
      %v3164 = vadd.f32 %v3129, %v3159
      %v3165 = vadd.f32 %v3130, %v3160
      %v3166 = vadd.f32 %v3131, %v3158
      %3167 = vset.pattern.permute.xlu0 1
      %3168 = vperm.xlu0 %3167, %v3002
      %v3169 = vpop.permute.xlu0 %3168
      %v3171 = vlaneseq
      %v3172 = vshrl.u32 %v3171, 7
      %v3173 = vsub.s32 1, %v3172
      %v3174 = vrot.slane %v3132, %v3173
      %v3175 = vlaneseq
      %v3176 = vshrl.u32 %v3175, 7
      %v3177 = vsub.s32 1, %v3176
      %v3178 = vrot.slane %v3133, %v3177
      %v3179 = vmul.f32 %v3169, %v1198
      %v3180 = vmul.f32 %v3169, %v3174
      %v3181 = vmul.f32 %v3169, %v3178
      %3185 = vrot.lane.b32.xlu0 %v3179, 126
      %v3186 = vpop.permute.xlu0 %3185
      %3187 = vrot.lane.b32.xlu0 %v3180, 126
      %v3188 = vpop.permute.xlu0 %3187
      %3189 = vrot.lane.b32.xlu0 %v3181, 126
      %v3190 = vpop.permute.xlu0 %3189
      %v3191 = vsel %vm1182, %v3186, %v3188
      %v3192 = vsel %vm1182, %v3188, %v3190
      %v3196 = vadd.f32 %v3164, %v3191
      %v3197 = vadd.f32 %v3165, %v3192
      %v3198 = vadd.f32 %v3166, %v3190
      %v3199 = vmul.f32 %v3019, %v1447
      %v3200 = vmul.f32 %v3020, %v1446
      %3202 = vset.pattern.permute.xlu0 0
      %3203 = vperm.xlu0 %3202, %v3003
      %v3204 = vpop.permute.xlu0 %3203
      %v3206 = vlaneseq
      %v3207 = vshrl.u32 %v3206, 7
      %v3208 = vsub.s32 0, %v3207
      %v3209 = vrot.slane %v3199, %v3208
      %v3210 = vlaneseq
      %v3211 = vshrl.u32 %v3210, 7
      %v3212 = vsub.s32 0, %v3211
      %v3213 = vrot.slane %v3200, %v3212
      %v3214 = vmul.f32 %v3204, %v1462
      %v3215 = vmul.f32 %v3204, %v3209
      %v3216 = vmul.f32 %v3204, %v3213
      %3220 = vrot.lane.b32.xlu0 %v3214, 112
      %v3221 = vpop.permute.xlu0 %3220
      %3222 = vrot.lane.b32.xlu0 %v3215, 112
      %v3223 = vpop.permute.xlu0 %3222
      %3224 = vrot.lane.b32.xlu0 %v3216, 112
      %v3225 = vpop.permute.xlu0 %3224
      %v3226 = vsel %vm1483, %v3221, %v3223
      %v3227 = vsel %vm1483, %v3223, %v3225
      %v3231 = vadd.f32 %v3196, %v3226
      %v3232 = vadd.f32 %v3197, %v3227
      %v3233 = vadd.f32 %v3198, %v3225
      %3234 = vset.pattern.permute.xlu0 1
      %3235 = vperm.xlu0 %3234, %v3003
      %v3236 = vpop.permute.xlu0 %3235
      %v3238 = vlaneseq
      %v3239 = vshrl.u32 %v3238, 7
      %v3240 = vsub.s32 1, %v3239
      %v3241 = vrot.slane %v3199, %v3240
      %v3242 = vlaneseq
      %v3243 = vshrl.u32 %v3242, 7
      %v3244 = vsub.s32 1, %v3243
      %v3245 = vrot.slane %v3200, %v3244
      %v3246 = vmul.f32 %v3236, %v1499
      %v3247 = vmul.f32 %v3236, %v3241
      %v3248 = vmul.f32 %v3236, %v3245
      %3252 = vrot.lane.b32.xlu0 %v3246, 112
      %v3253 = vpop.permute.xlu0 %3252
      %3254 = vrot.lane.b32.xlu0 %v3247, 112
      %v3255 = vpop.permute.xlu0 %3254
      %3256 = vrot.lane.b32.xlu0 %v3248, 112
      %v3257 = vpop.permute.xlu0 %3256
      %v3258 = vsel %vm1483, %v3253, %v3255
      %v3259 = vsel %vm1483, %v3255, %v3257
      %v3263 = vadd.f32 %v3231, %v3258
      %v3264 = vadd.f32 %v3232, %v3259
      %v3265 = vadd.f32 %v3233, %v3257
      %3267 = vset.pattern.permute.xlu0 0
      %3268 = vperm.xlu0 %3267, %v3004
      %v3269 = vpop.permute.xlu0 %3268
      %v3271 = vmul.f32 %v3269, %v3075
      %v3272 = vmul.f32 %v3269, %v3079
      %3275 = vrot.lane.b32.xlu0 %v3271, 111
      %v3276 = vpop.permute.xlu0 %3275
      %3277 = vrot.lane.b32.xlu0 %v3272, 111
      %v3278 = vpop.permute.xlu0 %3277
      %v3279 = vsel %vm665, %v3276, %v3278
      %v3283 = vadd.f32 %v3263, %v3276
      %v3284 = vadd.f32 %v3264, %v3279
      %v3285 = vadd.f32 %v3265, %v3278
      %3286 = vset.pattern.permute.xlu0 1
      %3287 = vperm.xlu0 %3286, %v3004
      %v3288 = vpop.permute.xlu0 %3287
      %v3290 = vmul.f32 %v3288, %v3107
      %v3291 = vmul.f32 %v3288, %v3111
      %3294 = vrot.lane.b32.xlu0 %v3290, 111
      %v3295 = vpop.permute.xlu0 %3294
      %3296 = vrot.lane.b32.xlu0 %v3291, 111
      %v3297 = vpop.permute.xlu0 %3296
      %v3298 = vsel %vm665, %v3295, %v3297
      %v3302 = vadd.f32 %v3283, %v3295
      %v3303 = vadd.f32 %v3284, %v3298
      %v3304 = vadd.f32 %v3285, %v3297
      %v3305 = vmul.f32 %v3019, %v1898
      %v3306 = vmul.f32 %v3020, %v1902
      %3308 = vset.pattern.permute.xlu0 0
      %3309 = vperm.xlu0 %3308, %v3005
      %v3310 = vpop.permute.xlu0 %3309
      %v3312 = vlaneseq
      %v3313 = vshrl.u32 %v3312, 7
      %v3314 = vsub.s32 0, %v3313
      %v3315 = vrot.slane %v3305, %v3314
      %v3316 = vlaneseq
      %v3317 = vshrl.u32 %v3316, 7
      %v3318 = vsub.s32 0, %v3317
      %v3319 = vrot.slane %v3306, %v3318
      %v3320 = vmul.f32 %v3310, %v3315
      %v3321 = vmul.f32 %v3310, %v3319
      %v3322 = vmul.f32 %v3310, %v1925
      %3326 = vrot.lane.b32.xlu0 %v3320, 110
      %v3327 = vpop.permute.xlu0 %3326
      %3328 = vrot.lane.b32.xlu0 %v3321, 110
      %v3329 = vpop.permute.xlu0 %3328
      %3330 = vrot.lane.b32.xlu0 %v3322, 110
      %v3331 = vpop.permute.xlu0 %3330
      %v3332 = vsel %vm1938, %v3327, %v3329
      %v3333 = vsel %vm1938, %v3329, %v3331
      %v3337 = vadd.f32 %v3302, %v3327
      %v3338 = vadd.f32 %v3303, %v3332
      %v3339 = vadd.f32 %v3304, %v3333
      %3340 = vset.pattern.permute.xlu0 1
      %3341 = vperm.xlu0 %3340, %v3005
      %v3342 = vpop.permute.xlu0 %3341
      %v3344 = vlaneseq
      %v3345 = vshrl.u32 %v3344, 7
      %v3346 = vsub.s32 1, %v3345
      %v3347 = vrot.slane %v3305, %v3346
      %v3348 = vlaneseq
      %v3349 = vshrl.u32 %v3348, 7
      %v3350 = vsub.s32 1, %v3349
      %v3351 = vrot.slane %v3306, %v3350
      %v3352 = vmul.f32 %v3342, %v3347
      %v3353 = vmul.f32 %v3342, %v3351
      %v3354 = vmul.f32 %v3342, %v1962
      %3358 = vrot.lane.b32.xlu0 %v3352, 110
      %v3359 = vpop.permute.xlu0 %3358
      %3360 = vrot.lane.b32.xlu0 %v3353, 110
      %v3361 = vpop.permute.xlu0 %3360
      %3362 = vrot.lane.b32.xlu0 %v3354, 110
      %v3363 = vpop.permute.xlu0 %3362
      %v3364 = vsel %vm1938, %v3359, %v3361
      %v3365 = vsel %vm1938, %v3361, %v3363
      %v3369 = vadd.f32 %v3337, %v3359
      %v3370 = vadd.f32 %v3338, %v3364
      %v3371 = vadd.f32 %v3339, %v3365
      %v3372 = vmul.f32 %v3019, %v2200
      %v3373 = vmul.f32 %v3020, %v2204
      %3375 = vset.pattern.permute.xlu0 0
      %3376 = vperm.xlu0 %3375, %v3006
      %v3377 = vpop.permute.xlu0 %3376
      %v3379 = vlaneseq
      %v3380 = vshrl.u32 %v3379, 7
      %v3381 = vsub.s32 0, %v3380
      %v3382 = vrot.slane %v3372, %v3381
      %v3383 = vlaneseq
      %v3384 = vshrl.u32 %v3383, 7
      %v3385 = vsub.s32 0, %v3384
      %v3386 = vrot.slane %v3373, %v3385
      %v3387 = vmul.f32 %v3377, %v3382
      %v3388 = vmul.f32 %v3377, %v3386
      %v3389 = vmul.f32 %v3377, %v2227
      %3393 = vrot.lane.b32.xlu0 %v3387, 96
      %v3394 = vpop.permute.xlu0 %3393
      %3395 = vrot.lane.b32.xlu0 %v3388, 96
      %v3396 = vpop.permute.xlu0 %3395
      %3397 = vrot.lane.b32.xlu0 %v3389, 96
      %v3398 = vpop.permute.xlu0 %3397
      %v3399 = vsel %vm2240, %v3394, %v3396
      %v3400 = vsel %vm2240, %v3396, %v3398
      %v3404 = vadd.f32 %v3369, %v3394
      %v3405 = vadd.f32 %v3370, %v3399
      %v3406 = vadd.f32 %v3371, %v3400
      %3407 = vset.pattern.permute.xlu0 1
      %3408 = vperm.xlu0 %3407, %v3006
      %v3409 = vpop.permute.xlu0 %3408
      %v3411 = vlaneseq
      %v3412 = vshrl.u32 %v3411, 7
      %v3413 = vsub.s32 1, %v3412
      %v3414 = vrot.slane %v3372, %v3413
      %v3415 = vlaneseq
      %v3416 = vshrl.u32 %v3415, 7
      %v3417 = vsub.s32 1, %v3416
      %v3418 = vrot.slane %v3373, %v3417
      %v3419 = vmul.f32 %v3409, %v3414
      %v3420 = vmul.f32 %v3409, %v3418
      %v3421 = vmul.f32 %v3409, %v2264
      %3425 = vrot.lane.b32.xlu0 %v3419, 96
      %v3426 = vpop.permute.xlu0 %3425
      %3427 = vrot.lane.b32.xlu0 %v3420, 96
      %v3428 = vpop.permute.xlu0 %3427
      %3429 = vrot.lane.b32.xlu0 %v3421, 96
      %v3430 = vpop.permute.xlu0 %3429
      %v3431 = vsel %vm2240, %v3426, %v3428
      %v3432 = vsel %vm2240, %v3428, %v3430
      %v3436 = vadd.f32 %v3404, %v3426
      %v3437 = vadd.f32 %v3405, %v3431
      %v3438 = vadd.f32 %v3406, %v3432
      %3440 = vset.pattern.permute.xlu0 0
      %3441 = vperm.xlu0 %3440, %v3007
      %v3442 = vpop.permute.xlu0 %3441
      %v3444 = vmul.f32 %v3442, %v3075
      %v3445 = vmul.f32 %v3442, %v3079
      %v3446 = vmul.f32 %v3442, 0.0
      %3450 = vrot.lane.b32.xlu0 %v3444, 95
      %v3451 = vpop.permute.xlu0 %3450
      %3452 = vrot.lane.b32.xlu0 %v3445, 95
      %v3453 = vpop.permute.xlu0 %3452
      %3454 = vrot.lane.b32.xlu0 %v3446, 95
      %v3455 = vpop.permute.xlu0 %3454
      %v3456 = vsel %vm2518, %v3451, %v3453
      %v3457 = vsel %vm2518, %v3453, %v3455
      %v3461 = vadd.f32 %v3436, %v3451
      %v3462 = vadd.f32 %v3437, %v3456
      %v3463 = vadd.f32 %v3438, %v3457
      %3464 = vset.pattern.permute.xlu0 1
      %3465 = vperm.xlu0 %3464, %v3007
      %v3466 = vpop.permute.xlu0 %3465
      %v3468 = vmul.f32 %v3466, %v3107
      %v3469 = vmul.f32 %v3466, %v3111
      %v3470 = vmul.f32 %v3466, 0.0
      %3474 = vrot.lane.b32.xlu0 %v3468, 95
      %v3475 = vpop.permute.xlu0 %3474
      %3476 = vrot.lane.b32.xlu0 %v3469, 95
      %v3477 = vpop.permute.xlu0 %3476
      %3478 = vrot.lane.b32.xlu0 %v3470, 95
      %v3479 = vpop.permute.xlu0 %3478
      %v3480 = vsel %vm2518, %v3475, %v3477
      %v3481 = vsel %vm2518, %v3477, %v3479
      %v3485 = vadd.f32 %v3461, %v3475
      %v3486 = vadd.f32 %v3462, %v3480
      %v3487 = vadd.f32 %v3463, %v3481
      %v3488 = vmul.f32 %v3019, %v2696
      %v3489 = vmul.f32 %v3020, %v2700
      %3491 = vset.pattern.permute.xlu0 0
      %3492 = vperm.xlu0 %3491, %v3008
      %v3493 = vpop.permute.xlu0 %3492
      %v3495 = vlaneseq
      %v3496 = vshrl.u32 %v3495, 7
      %v3497 = vsub.s32 0, %v3496
      %v3498 = vrot.slane %v3488, %v3497
      %v3499 = vlaneseq
      %v3500 = vshrl.u32 %v3499, 7
      %v3501 = vsub.s32 0, %v3500
      %v3502 = vrot.slane %v3489, %v3501
      %v3503 = vmul.f32 %v3493, %v3498
      %v3504 = vmul.f32 %v3493, %v3502
      %v3505 = vmul.f32 %v3493, %v2723
      %3509 = vrot.lane.b32.xlu0 %v3503, 94
      %v3510 = vpop.permute.xlu0 %3509
      %3511 = vrot.lane.b32.xlu0 %v3504, 94
      %v3512 = vpop.permute.xlu0 %3511
      %3513 = vrot.lane.b32.xlu0 %v3505, 94
      %v3514 = vpop.permute.xlu0 %3513
      %v3515 = vsel %vm2736, %v3510, %v3512
      %v3516 = vsel %vm2736, %v3512, %v3514
      %v3520 = vadd.f32 %v3485, %v3510
      %v3521 = vadd.f32 %v3486, %v3515
      %v3522 = vadd.f32 %v3487, %v3516
      %3523 = vset.pattern.permute.xlu0 1
      %3524 = vperm.xlu0 %3523, %v3008
      %v3525 = vpop.permute.xlu0 %3524
      %v3527 = vlaneseq
      %v3528 = vshrl.u32 %v3527, 7
      %v3529 = vsub.s32 1, %v3528
      %v3530 = vrot.slane %v3488, %v3529
      %v3531 = vlaneseq
      %v3532 = vshrl.u32 %v3531, 7
      %v3533 = vsub.s32 1, %v3532
      %v3534 = vrot.slane %v3489, %v3533
      %v3535 = vmul.f32 %v3525, %v3530
      %v3536 = vmul.f32 %v3525, %v3534
      %v3537 = vmul.f32 %v3525, %v2760
      %3541 = vrot.lane.b32.xlu0 %v3535, 94
      %v3542 = vpop.permute.xlu0 %3541
      %3543 = vrot.lane.b32.xlu0 %v3536, 94
      %v3544 = vpop.permute.xlu0 %3543
      %3545 = vrot.lane.b32.xlu0 %v3537, 94
      %v3546 = vpop.permute.xlu0 %3545
      %v3547 = vsel %vm2736, %v3542, %v3544
      %v3548 = vsel %vm2736, %v3544, %v3546
      %v3552 = vadd.f32 %v3520, %v3542
      %v3553 = vadd.f32 %v3521, %v3547
      %v3554 = vadd.f32 %v3522, %v3548
      %v3555 = vxor.u32 %v3552, 2147483648
      %v3556 = vxor.u32 %v3553, 2147483648
      %v3557 = vxor.u32 %v3554, 2147483648
      %v3558 = vmul.f32 %v3555, 1.442695
      %v3559 = vpow.pop %v3558
      %v3560 = vmul.f32 %v3556, 1.442695
      %v3561 = vpow.pop %v3560
      %v3562 = vmul.f32 %v3557, 1.442695
      %v3563 = vpow.pop %v3562
      %v3564 = vadd.f32 %v3559, 1.0
      %v3565 = vadd.f32 %v3561, 1.0
      %v3566 = vadd.f32 %v3563, 1.0
      %v3567 = vrcp.pop %v3564
      %v3568 = vmul.f32 1.0, %v3567
      %v3569 = vrcp.pop %v3565
      %v3570 = vmul.f32 1.0, %v3569
      %v3571 = vrcp.pop %v3566
      %v3572 = vmul.f32 1.0, %v3571
      %3576 = vrot.lane.b32.xlu0 %v3568, 17
      %v3577 = vpop.permute.xlu0 %3576
      %3578 = vrot.lane.b32.xlu0 %v3570, 17
      %v3579 = vpop.permute.xlu0 %3578
      %3580 = vrot.lane.b32.xlu0 %v3572, 17
      %v3581 = vpop.permute.xlu0 %3580
      %v3582 = vsel %vm2699, %v3577, %v3579
      %v3583 = vsel %vm2699, %v3579, %v3581
      %v3586 = vmul.f32 %v635, %v3582
      %v3587 = vmul.f32 %v636, %v3583
      %v3588 = vld [vmem:[%s11] sm:$0xff]
      %v3589 = vld [vmem:[%s11 + $0x8] sm:$0xff]
      %v3590 = vld [vmem:[%s12] sm:$0xff]
      %v3591 = vld [vmem:[%s12 + $0x8] sm:$0xff]
      %3593 = vset.pattern.permute.xlu0 0
      %3594 = vperm.xlu0 %3593, %v3590
      %v3595 = vpop.permute.xlu0 %3594
      %3598 = vset.pattern.permute.xlu0 0
      %3599 = vperm.xlu0 %3598, %v3591
      %v3600 = vpop.permute.xlu0 %3599
      %3603 = vset.pattern.permute.xlu0 0
      %3604 = vperm.xlu0 %3603, %v3588
      %v3605 = vpop.permute.xlu0 %3604
      %3608 = vset.pattern.permute.xlu0 0
      %3609 = vperm.xlu0 %3608, %v3589
      %v3610 = vpop.permute.xlu0 %3609
      %v3612 = vlaneseq
      %v3613 = vshrl.u32 %v3612, 7
      %v3614 = vsub.s32 0, %v3613
      %v3615 = vrot.slane %v3586, %v3614
      %v3616 = vlaneseq
      %v3617 = vshrl.u32 %v3616, 7
      %v3618 = vsub.s32 0, %v3617
      %v3619 = vrot.slane %v3587, %v3618
      %v3620 = vmul.f32 %v3605, %v3615
      %v3621 = vmul.f32 %v3605, %v3619
      %v3622 = vmul.f32 %v3610, %v3615
      %v3623 = vmul.f32 %v3610, %v3619
      %v3624 = vadd.f32 %v3595, %v3620
      %v3625 = vadd.f32 %v3595, %v3621
      %v3626 = vadd.f32 %v3600, %v3622
      %v3627 = vadd.f32 %v3600, %v3623
      %3628 = vset.pattern.permute.xlu0 1
      %3629 = vperm.xlu0 %3628, %v3588
      %v3630 = vpop.permute.xlu0 %3629
      %3632 = vset.pattern.permute.xlu0 1
      %3633 = vperm.xlu0 %3632, %v3589
      %v3634 = vpop.permute.xlu0 %3633
      %v3636 = vlaneseq
      %v3637 = vshrl.u32 %v3636, 7
      %v3638 = vsub.s32 1, %v3637
      %v3639 = vrot.slane %v3586, %v3638
      %v3640 = vlaneseq
      %v3641 = vshrl.u32 %v3640, 7
      %v3642 = vsub.s32 1, %v3641
      %v3643 = vrot.slane %v3587, %v3642
      %v3644 = vmul.f32 %v3630, %v3639
      %v3645 = vmul.f32 %v3630, %v3643
      %v3646 = vmul.f32 %v3634, %v3639
      %v3647 = vmul.f32 %v3634, %v3643
      %v3648 = vadd.f32 %v3624, %v3644
      %v3649 = vadd.f32 %v3625, %v3645
      %v3650 = vadd.f32 %v3626, %v3646
      %v3651 = vadd.f32 %v3627, %v3647
      %3652 = vset.pattern.permute.xlu0 2
      %3653 = vperm.xlu0 %3652, %v3588
      %v3654 = vpop.permute.xlu0 %3653
      %3656 = vset.pattern.permute.xlu0 2
      %3657 = vperm.xlu0 %3656, %v3589
      %v3658 = vpop.permute.xlu0 %3657
      %v3660 = vlaneseq
      %v3661 = vshrl.u32 %v3660, 7
      %v3662 = vsub.s32 2, %v3661
      %v3663 = vrot.slane %v3586, %v3662
      %v3664 = vlaneseq
      %v3665 = vshrl.u32 %v3664, 7
      %v3666 = vsub.s32 2, %v3665
      %v3667 = vrot.slane %v3587, %v3666
      %v3668 = vmul.f32 %v3654, %v3663
      %v3669 = vmul.f32 %v3654, %v3667
      %v3670 = vmul.f32 %v3658, %v3663
      %v3671 = vmul.f32 %v3658, %v3667
      %v3672 = vadd.f32 %v3648, %v3668
      %v3673 = vadd.f32 %v3649, %v3669
      %v3674 = vadd.f32 %v3650, %v3670
      %v3675 = vadd.f32 %v3651, %v3671
      %3676 = vset.pattern.permute.xlu0 3
      %3677 = vperm.xlu0 %3676, %v3588
      %v3678 = vpop.permute.xlu0 %3677
      %3680 = vset.pattern.permute.xlu0 3
      %3681 = vperm.xlu0 %3680, %v3589
      %v3682 = vpop.permute.xlu0 %3681
      %v3684 = vlaneseq
      %v3685 = vshrl.u32 %v3684, 7
      %v3686 = vsub.s32 3, %v3685
      %v3687 = vrot.slane %v3586, %v3686
      %v3688 = vlaneseq
      %v3689 = vshrl.u32 %v3688, 7
      %v3690 = vsub.s32 3, %v3689
      %v3691 = vrot.slane %v3587, %v3690
      %v3692 = vmul.f32 %v3678, %v3687
      %v3693 = vmul.f32 %v3678, %v3691
      %v3694 = vmul.f32 %v3682, %v3687
      %v3695 = vmul.f32 %v3682, %v3691
      %v3696 = vadd.f32 %v3672, %v3692
      %v3697 = vadd.f32 %v3673, %v3693
      %v3698 = vadd.f32 %v3674, %v3694
      %v3699 = vadd.f32 %v3675, %v3695
      %3700 = vset.pattern.permute.xlu0 4
      %3701 = vperm.xlu0 %3700, %v3588
      %v3702 = vpop.permute.xlu0 %3701
      %3704 = vset.pattern.permute.xlu0 4
      %3705 = vperm.xlu0 %3704, %v3589
      %v3706 = vpop.permute.xlu0 %3705
      %v3708 = vlaneseq
      %v3709 = vshrl.u32 %v3708, 7
      %v3710 = vsub.s32 4, %v3709
      %v3711 = vrot.slane %v3586, %v3710
      %v3712 = vlaneseq
      %v3713 = vshrl.u32 %v3712, 7
      %v3714 = vsub.s32 4, %v3713
      %v3715 = vrot.slane %v3587, %v3714
      %v3716 = vmul.f32 %v3702, %v3711
      %v3717 = vmul.f32 %v3702, %v3715
      %v3718 = vmul.f32 %v3706, %v3711
      %v3719 = vmul.f32 %v3706, %v3715
      %v3720 = vadd.f32 %v3696, %v3716
      %v3721 = vadd.f32 %v3697, %v3717
      %v3722 = vadd.f32 %v3698, %v3718
      %v3723 = vadd.f32 %v3699, %v3719
      %3724 = vset.pattern.permute.xlu0 5
      %3725 = vperm.xlu0 %3724, %v3588
      %v3726 = vpop.permute.xlu0 %3725
      %3728 = vset.pattern.permute.xlu0 5
      %3729 = vperm.xlu0 %3728, %v3589
      %v3730 = vpop.permute.xlu0 %3729
      %v3732 = vlaneseq
      %v3733 = vshrl.u32 %v3732, 7
      %v3734 = vsub.s32 5, %v3733
      %v3735 = vrot.slane %v3586, %v3734
      %v3736 = vlaneseq
      %v3737 = vshrl.u32 %v3736, 7
      %v3738 = vsub.s32 5, %v3737
      %v3739 = vrot.slane %v3587, %v3738
      %v3740 = vmul.f32 %v3726, %v3735
      %v3741 = vmul.f32 %v3726, %v3739
      %v3742 = vmul.f32 %v3730, %v3735
      %v3743 = vmul.f32 %v3730, %v3739
      %v3744 = vadd.f32 %v3720, %v3740
      %v3745 = vadd.f32 %v3721, %v3741
      %v3746 = vadd.f32 %v3722, %v3742
      %v3747 = vadd.f32 %v3723, %v3743
      %3748 = vset.pattern.permute.xlu0 6
      %3749 = vperm.xlu0 %3748, %v3588
      %v3750 = vpop.permute.xlu0 %3749
      %3752 = vset.pattern.permute.xlu0 6
      %3753 = vperm.xlu0 %3752, %v3589
      %v3754 = vpop.permute.xlu0 %3753
      %v3756 = vlaneseq
      %v3757 = vshrl.u32 %v3756, 7
      %v3758 = vsub.s32 6, %v3757
      %v3759 = vrot.slane %v3586, %v3758
      %v3760 = vlaneseq
      %v3761 = vshrl.u32 %v3760, 7
      %v3762 = vsub.s32 6, %v3761
      %v3763 = vrot.slane %v3587, %v3762
      %v3764 = vmul.f32 %v3750, %v3759
      %v3765 = vmul.f32 %v3750, %v3763
      %v3766 = vmul.f32 %v3754, %v3759
      %v3767 = vmul.f32 %v3754, %v3763
      %v3768 = vadd.f32 %v3744, %v3764
      %v3769 = vadd.f32 %v3745, %v3765
      %v3770 = vadd.f32 %v3746, %v3766
      %v3771 = vadd.f32 %v3747, %v3767
      %3772 = vset.pattern.permute.xlu0 7
      %3773 = vperm.xlu0 %3772, %v3588
      %v3774 = vpop.permute.xlu0 %3773
      %3776 = vset.pattern.permute.xlu0 7
      %3777 = vperm.xlu0 %3776, %v3589
      %v3778 = vpop.permute.xlu0 %3777
      %v3780 = vlaneseq
      %v3781 = vshrl.u32 %v3780, 7
      %v3782 = vsub.s32 7, %v3781
      %v3783 = vrot.slane %v3586, %v3782
      %v3784 = vlaneseq
      %v3785 = vshrl.u32 %v3784, 7
      %v3786 = vsub.s32 7, %v3785
      %v3787 = vrot.slane %v3587, %v3786
      %v3788 = vmul.f32 %v3774, %v3783
      %v3789 = vmul.f32 %v3774, %v3787
      %v3790 = vmul.f32 %v3778, %v3783
      %v3791 = vmul.f32 %v3778, %v3787
      %v3792 = vadd.f32 %v3768, %v3788
      %v3793 = vadd.f32 %v3769, %v3789
      %v3794 = vadd.f32 %v3770, %v3790
      %v3795 = vadd.f32 %v3771, %v3791
      %3796 = vst [vmem:[%s440] sm:$0xff] %v3792
      %3797 = vst [vmem:[%s440 + $0x8] sm:$0xff] %v3793
      %3798 = vst [vmem:[%s440 + $0x10] sm:$0xff] %v3794
      %3799 = vst [vmem:[%s440 + $0x18] sm:$0xff] %v3795
      %p3800 = scmp.lt.s32.totalorder %s24, 1
      %s3801 = scalar_select %p3800, %s24, 1
      %s3802 = smul.addr %s3801, 4
      %s3803 = smul.addr %s3802, 8
      %s3804 = scalar_lea.vmem %s13, %s3803
      // Predicated region
      $region73: #{wc_attention_forward.1} parent=71 // pred_check
        %p3805 = pneg %p320
      $region74: #{wc_attention_forward.1} parent=71 // pred_check_branch
        %3807 = sbr.rel (%p3805) target = $region76
      $region75: #{wc_attention_forward.1} parent=71 // pred_region
        _
      $region76: #{wc_attention_forward.1} parent=71 // pred_fallthru
        _
    $region72: #{wc_attention_forward.1} parent=5 // pred_fallthru
      _
    %p3808 = scmp.le.s32.totalorder 2, %s19
    // Predicated region
    $region77: #{wc_attention_forward.1} parent=5 // pred_check
      %p3809 = pneg %p3808
    $region78: #{wc_attention_forward.1} parent=5 // pred_check_branch
      %3811 = sbr.rel (%p3809) target = $region80
    $region79: #{wc_attention_forward.1} parent=5 // pred_region
      %s3812 = ssub.s32 %s19, 2
      // Predicated region
      $region81: #{wc_attention_forward.1} parent=79 // pred_check
        %p3813 = pneg %p326
      $region82: #{wc_attention_forward.1} parent=79 // pred_check_branch
        %3815 = sbr.rel (%p3813) target = $region84
      $region83: #{wc_attention_forward.1} parent=79 // pred_region
        %p3816 = scmp.lt.s32.totalorder %s25, 1
        %s3817 = scalar_select %p3816, %s25, 1
        %s3818 = smul.addr %s3817, 4
        %s3819 = smul.addr %s3818, 8
        %s3820 = scalar_lea.vmem %s13, %s3819
      $region84: #{wc_attention_forward.1} parent=79 // pred_fallthru
        _
    $region80: #{wc_attention_forward.1} parent=5 // pred_fallthru
      _
  $region6: #{wc_attention_forward.1} parent=0 // loop_footer
    %s23 = sadd.s32 1, %s19
  $region7: #{wc_attention_forward.1} parent=0 // loop_footer_branch
    %18 = sbr.rel target = $region3
  $region8: #{wc_attention_forward.1} parent=0 // loop_exit
    _

</llo_original>
